<compile_context>
chip_gen: v7x
topology: tpu7x:2x2x1
jax: 0.10.0
libtpu: 0.0.40
codegen_flags: <defaults>
</compile_context>

<pallas_src>
import math
import functools

import jax
import jax.numpy as jnp
from jax.experimental import pallas as pl
from jax.experimental.pallas import tpu as pltpu


# ----------------------------- Pallas kernel --------------------------------

def _layer_norm(x, gamma, eps):
    # PyTorch nn.LayerNorm(bias=False): weight only, biased variance; rsqrt -> EUP.
    mu = jnp.mean(x, axis=-1, keepdims=True)
    var = jnp.mean(jnp.square(x - mu), axis=-1, keepdims=True)
    return (x - mu) * jax.lax.rsqrt(var + eps) * gamma


def _vit_fused_kernel(x_ref, wp_ref, pos_ref,
                      wq_ref, wk_ref, wv_ref, wo_ref,
                      w1_ref, w2_ref, g1_ref, g2_ref,
                      o_ref, y_ref, *, nheads, eps):
    """One grid step = (batch element b, encoder layer l).

    x_ref   : (1, N, C)   raw tokens for batch b (re-fetched only when b changes)
    wp_ref  : (C, D)      patch (1x1 conv) projection;  pos_ref: (N, D)
    wq/wk/wv: (1, H, D, dh) per-head projection weights for layer l
    wo_ref  : (1, H, dh, D) per-head rows of the output projection for layer l
    w1_ref  : (1, D, F)   w2_ref: (1, F, D)   g1/g2_ref: (1, 1, D)
    o_ref   : (1, N, D)   final activations for batch b (written only at l == L-1)
    y_ref   : (N, D) f32  VMEM scratch -- activation resident across the L axis.
    """
    l = pl.program_id(1)

    @pl.when(l == 0)
    def _():
        # Patch embedding: patch_size == 1 -> per-token linear, + positional embed.
        y_ref[...] = (
            jnp.dot(x_ref[0], wp_ref[...], preferred_element_type=jnp.float32)
            + pos_ref[...]
        )

    x = y_ref[...]                                   # (N, D), f32
    N, D = x.shape
    dh = D // nheads
    scale = 1.0 / math.sqrt(dh)

    # ---- multi-head self-attention (heads pre-split host-side; no lane slicing) --
    attn = jnp.zeros((N, D), jnp.float32)
    for h in range(nheads):                          # static unroll, H is small
        qh = jnp.dot(x, wq_ref[0, h], preferred_element_type=jnp.float32) * scale
        kh = jnp.dot(x, wk_ref[0, h], preferred_element_type=jnp.float32)
        vh = jnp.dot(x, wv_ref[0, h], preferred_element_type=jnp.float32)
        # scores: contract the dh axes directly (MXU consumes the transposed rhs).
        s = jax.lax.dot_general(qh, kh, (((1,), (1,)), ((), ())),
                                preferred_element_type=jnp.float32)   # (N, N)
        s = s - jnp.max(s, axis=-1, keepdims=True)
        p = jnp.exp(s)                                                # EUP
        p = p * pl.reciprocal(jnp.sum(p, axis=-1, keepdims=True), approx=True)
        oh = jnp.dot(p, vh, preferred_element_type=jnp.float32)       # (N, dh)
        attn = attn + jnp.dot(oh, wo_ref[0, h],
                              preferred_element_type=jnp.float32)     # (N, D)
    # TODO(synk): dropout is inference-mode identity; training-mode dropout not implemented.

    x1 = _layer_norm(x + attn, g1_ref[0], eps)       # post-norm LN1

    # ---- feed-forward (relu, bias=False) ----
    h1 = jnp.maximum(
        jnp.dot(x1, w1_ref[0], preferred_element_type=jnp.float32), 0.0)
    ff = jnp.dot(h1, w2_ref[0], preferred_element_type=jnp.float32)
    y_new = _layer_norm(x1 + ff, g2_ref[0], eps)     # post-norm LN2

    y_ref[...] = y_new                               # stays in VMEM for layer l+1

    @pl.when(l == pl.num_programs(1) - 1)
    def _():
        # Single store per batch element after the full layer stack.
        o_ref[0] = y_new


# ------------------------------ JAX wrapper ----------------------------------

def vit_fused_forward(x_nchw, packed, nheads, eps):
    B, C, H, W = x_nchw.shape
    N = H * W                                        # patch_size == 1
    x_tokens = jnp.transpose(x_nchw, (0, 2, 3, 1)).reshape(B, N, C)

    L = packed["wq"].shape[0]
    D = packed["wp"].shape[1]

    kern = functools.partial(_vit_fused_kernel, nheads=nheads, eps=eps)
    const = lambda shape: pl.BlockSpec(shape, lambda b, l: (0,) * len(shape))
    per_layer = lambda shape: pl.BlockSpec(
        (1,) + shape[1:], lambda b, l: (l,) + (0,) * (len(shape) - 1))

    y = pl.pallas_call(
        kern,
        out_shape=jax.ShapeDtypeStruct((B, N, D), jnp.float32),
        grid=(B, L),                                 # L innermost; scratch carries state over L
        in_specs=[
            pl.BlockSpec((1, N, C), lambda b, l: (b, 0, 0)),   # tokens (DMA'd once per b)
            const(packed["wp"].shape),                         # (C, D)
            const(packed["pos"].shape),                        # (N, D)
            per_layer(packed["wq"].shape),                     # (1, H, D, dh)
            per_layer(packed["wk"].shape),
            per_layer(packed["wv"].shape),
            per_layer(packed["wo"].shape),                     # (1, H, dh, D)
            per_layer(packed["w1"].shape),                     # (1, D, F)
            per_layer(packed["w2"].shape),                     # (1, F, D)
            per_layer(packed["g1"].shape),                     # (1, 1, D)
            per_layer(packed["g2"].shape),
        ],
        out_specs=pl.BlockSpec((1, N, D), lambda b, l: (b, 0, 0)),
        scratch_shapes=[pltpu.VMEM((N, D), jnp.float32)],
        compiler_params=pltpu.CompilerParams(
            dimension_semantics=("parallel", "arbitrary")),
    )(x_tokens, packed["wp"], packed["pos"],
      packed["wq"], packed["wk"], packed["wv"], packed["wo"],
      packed["w1"], packed["w2"], packed["g1"], packed["g2"])

    s = int(math.sqrt(N))
    # Mirrors PyTorch's x.view(B, D, s, s) on a contiguous (B, N, D) tensor.
    return y.reshape(B, D, s, s)


# --------------------------- pure-JAX reference -------------------------------

def _ref_layer(y, layer, nheads, eps):
    D = y.shape[2]
    dh = D // nheads
    q = y @ layer["wq"]
    k = y @ layer["wk"]
    v = y @ layer["wv"]
    heads = []
    for h in range(nheads):
        qh, kh, vh = (t[..., h * dh:(h + 1) * dh] for t in (q, k, v))
        s = jnp.einsum("bqd,bkd->bqk", qh, kh) / math.sqrt(dh)
        p = jax.nn.softmax(s, axis=-1)
        heads.append(jnp.einsum("bqk,bkd->bqd", p, vh))
    attn = jnp.concatenate(heads, axis=-1) @ layer["wo"]

    def ln(t, g):
        mu = jnp.mean(t, axis=-1, keepdims=True)
        var = jnp.mean((t - mu) ** 2, axis=-1, keepdims=True)
        return (t - mu) / jnp.sqrt(var + eps) * g

    x1 = ln(y + attn, layer["g1"])
    ff = jnp.maximum(x1 @ layer["w1"], 0.0) @ layer["w2"]
    return ln(x1 + ff, layer["g2"])


def ref_forward(x_nchw, params, nheads, eps):
    B, C, H, W = x_nchw.shape
    N = H * W
    y = jnp.transpose(x_nchw, (0, 2, 3, 1)).reshape(B, N, C)
    y = y @ params["wp"] + params["pos"]
    for layer in params["layers"]:
        y = _ref_layer(y, layer, nheads, eps)
    s = int(math.sqrt(N))
    return y.reshape(B, y.shape[-1], s, s)


# ------------------------------ parameters ------------------------------------

def init_params(key, in_channels, N, dim, ff, num_layers):
    def nrm(k, shape, scale=0.02):
        return scale * jax.random.normal(k, shape, dtype=jnp.float32)

    keys = jax.random.split(key, 2 + 6 * num_layers)
    params = {
        "wp": nrm(keys[0], (in_channels, dim)),   # 1x1-conv patch projection (C, D)
        "pos": nrm(keys[1], (N, dim)),            # learnable positional embedding
        "layers": [],
    }
    for l in range(num_layers):
        k = keys[2 + 6 * l: 2 + 6 * (l + 1)]
        params["layers"].append({
            "wq": nrm(k[0], (dim, dim)),
            "wk": nrm(k[1], (dim, dim)),
            "wv": nrm(k[2], (dim, dim)),
            "wo": nrm(k[3], (dim, dim)),
            "w1": nrm(k[4], (dim, ff)),
            "w2": nrm(k[5], (ff, dim)),
            "g1": jnp.ones((1, dim), jnp.float32),
            "g2": jnp.ones((1, dim), jnp.float32),
        })
    return params


def pack_params(params, nheads):
    """Stack per-layer weights along L and pre-split attention weights per head
    (host-side), so the kernel never does 8-lane slices or head concatenation."""
    D = params["wp"].shape[1]
    dh = D // nheads
    stack = lambda name: jnp.stack([lyr[name] for lyr in params["layers"]])
    wq, wk, wv, wo = stack("wq"), stack("wk"), stack("wv"), stack("wo")
    L = wq.shape[0]
    # (L, D, D) -> (L, H, D, dh): head h gets columns [h*dh, (h+1)*dh).
    split_cols = lambda w: w.reshape(L, D, nheads, dh).transpose(0, 2, 1, 3)
    return {
        "wp": params["wp"],
        "pos": params["pos"],
        "wq": split_cols(wq),
        "wk": split_cols(wk),
        "wv": split_cols(wv),
        # (L, D, D) -> (L, H, dh, D): head h gets rows [h*dh, (h+1)*dh).
        "wo": wo.reshape(L, nheads, dh, D),
        "w1": stack("w1"),
        "w2": stack("w2"),
        "g1": stack("g1"),
        "g2": stack("g2"),
    }


# ---------------------------------- main ---------------------------------------

if __name__ == "__main__":
    # Small-shape config consistent with the module: patch_size = image_size // image_size = 1
    B, C_in, IMG = 2, 3, 8          # image 8x8 -> N = 64 tokens
    DIM, NHEADS, LAYERS, FF = 32, 4, 2, 64
    EPS = 1e-5
    N = IMG * IMG

    key = jax.random.PRNGKey(0)
    kx, kp = jax.random.split(key)
    x = jax.random.normal(kx, (B, C_in, IMG, IMG), dtype=jnp.float32)  # NCHW like PyTorch
    params = init_params(kp, C_in, N, DIM, FF, LAYERS)
    packed = pack_params(params, NHEADS)

    out = jax.block_until_ready(vit_fused_forward(x, packed, NHEADS, EPS))
    ref = jax.block_until_ready(ref_forward(x, params, NHEADS, EPS))

    assert out.shape == (B, DIM, IMG, IMG), out.shape
    # Only non-exact step vs the f32 reference is the approx EUP reciprocal in the
    # softmax denominator; after residual + LayerNorm its effect is far below 2e-3.
    assert jnp.allclose(out, ref, rtol=2e-3, atol=2e-3), "mismatch vs pure-JAX reference"

    print("KERNEL_OK")
</pallas_src>

<mosaic_0001>
module attributes {stable_mosaic.version = 11 : i64} {
  func.func @_vit_fused_kernel(%arg0: i32, %arg1: i32, %arg2: memref<1x64x3xf32, #tpu.memory_space<vmem>>, %arg3: memref<3x32xf32, #tpu.memory_space<vmem>>, %arg4: memref<64x32xf32, #tpu.memory_space<vmem>>, %arg5: memref<1x4x32x8xf32, #tpu.memory_space<vmem>>, %arg6: memref<1x4x32x8xf32, #tpu.memory_space<vmem>>, %arg7: memref<1x4x32x8xf32, #tpu.memory_space<vmem>>, %arg8: memref<1x4x8x32xf32, #tpu.memory_space<vmem>>, %arg9: memref<1x32x64xf32, #tpu.memory_space<vmem>>, %arg10: memref<1x64x32xf32, #tpu.memory_space<vmem>>, %arg11: memref<1x1x32xf32, #tpu.memory_space<vmem>>, %arg12: memref<1x1x32xf32, #tpu.memory_space<vmem>>, %arg13: memref<1x64x32xf32, #tpu.memory_space<vmem>>, %arg14: memref<64x32xf32, #tpu.memory_space<vmem>>) attributes {dimension_semantics = [#tpu.dimension_semantics<parallel>, #tpu.dimension_semantics<arbitrary>], iteration_bounds = array<i64: 2, 2>, scalar_prefetch = 0 : i64, scratch_operands = 1 : i64, tpu.core_type = #tpu.core_type<tc>, window_params = [{transform_indices = @transform_0, window_bounds = array<i64: 1, 64, 3>}, {pipeline_mode = #tpu.pipeline_mode<synchronous>, transform_indices = @transform_1, window_bounds = array<i64: 3, 32>}, {pipeline_mode = #tpu.pipeline_mode<synchronous>, transform_indices = @transform_2, window_bounds = array<i64: 64, 32>}, {transform_indices = @transform_3, window_bounds = array<i64: 1, 4, 32, 8>}, {transform_indices = @transform_4, window_bounds = array<i64: 1, 4, 32, 8>}, {transform_indices = @transform_5, window_bounds = array<i64: 1, 4, 32, 8>}, {transform_indices = @transform_6, window_bounds = array<i64: 1, 4, 8, 32>}, {transform_indices = @transform_7, window_bounds = array<i64: 1, 32, 64>}, {transform_indices = @transform_8, window_bounds = array<i64: 1, 64, 32>}, {transform_indices = @transform_9, window_bounds = array<i64: 1, 1, 32>}, {transform_indices = @transform_10, window_bounds = array<i64: 1, 1, 32>}, {transform_indices = @transform_11, window_bounds = array<i64: 1, 64, 32>}]} {
    %c0_i32 = arith.constant 0 : i32
    %0 = arith.cmpi eq, %arg1, %c0_i32 : i32
    %1 = arith.extui %0 : i1 to i32
    %c0_i32_0 = arith.constant 0 : i32
    %2 = arith.cmpi ne, %1, %c0_i32_0 : i32
    scf.if %2 {
      %c0_127 = arith.constant 0 : index
      %c0_128 = arith.constant 0 : index
      %c0_129 = arith.constant 0 : index
      %171 = vector.load %arg2[%c0_127, %c0_128, %c0_129] : memref<1x64x3xf32, #tpu.memory_space<vmem>>, vector<1x64x3xf32>
      %172 = vector.shape_cast %171 : vector<1x64x3xf32> to vector<64x3xf32>
      %c0_130 = arith.constant 0 : index
      %c0_131 = arith.constant 0 : index
      %173 = vector.load %arg3[%c0_130, %c0_131] : memref<3x32xf32, #tpu.memory_space<vmem>>, vector<3x32xf32>
      %cst_132 = arith.constant dense<0.000000e+00> : vector<64x32xf32>
      %174 = tpu.matmul %172, %173, %cst_132 {dimension_numbers = #tpu.dot_dimension_numbers<[1], [0], [0], [1], [0, 0, 1, 1], [], []>} : vector<64x3xf32>, vector<3x32xf32>, vector<64x32xf32> -> vector<64x32xf32>
      %c0_133 = arith.constant 0 : index
      %c0_134 = arith.constant 0 : index
      %175 = vector.load %arg4[%c0_133, %c0_134] : memref<64x32xf32, #tpu.memory_space<vmem>>, vector<64x32xf32>
      %176 = arith.addf %174, %175 : vector<64x32xf32>
      %c0_135 = arith.constant 0 : index
      %c0_136 = arith.constant 0 : index
      %177 = vector.load %arg14[%c0_135, %c0_136] : memref<64x32xf32, #tpu.memory_space<vmem>>, vector<64x32xf32>
      tpu.vector_store %arg14[%c0_135, %c0_136], %176 {strides = array<i32>} : memref<64x32xf32, #tpu.memory_space<vmem>>, vector<64x32xf32>,
    } else {
    }
    %c0 = arith.constant 0 : index
    %c0_1 = arith.constant 0 : index
    %3 = vector.load %arg14[%c0, %c0_1] : memref<64x32xf32, #tpu.memory_space<vmem>>, vector<64x32xf32>
    %cst = arith.constant 0.000000e+00 : f32
    %4 = vector.broadcast %cst : f32 to vector<64x32xf32>
    %c0_2 = arith.constant 0 : index
    %c0_3 = arith.constant 0 : index
    %c0_4 = arith.constant 0 : index
    %c0_5 = arith.constant 0 : index
    %5 = vector.load %arg5[%c0_2, %c0_3, %c0_4, %c0_5] : memref<1x4x32x8xf32, #tpu.memory_space<vmem>>, vector<1x1x32x8xf32>
    %6 = vector.shape_cast %5 : vector<1x1x32x8xf32> to vector<32x8xf32>
    %cst_6 = arith.constant dense<0.000000e+00> : vector<64x8xf32>
    %7 = tpu.matmul %3, %6, %cst_6 {dimension_numbers = #tpu.dot_dimension_numbers<[1], [0], [0], [1], [0, 0, 1, 1], [], []>} : vector<64x32xf32>, vector<32x8xf32>, vector<64x8xf32> -> vector<64x8xf32>
    %cst_7 = arith.constant 0.353553385 : f32
    %8 = vector.broadcast %cst_7 : f32 to vector<64x8xf32>
    %9 = arith.mulf %7, %8 : vector<64x8xf32>
    %c0_8 = arith.constant 0 : index
    %c0_9 = arith.constant 0 : index
    %c0_10 = arith.constant 0 : index
    %c0_11 = arith.constant 0 : index
    %10 = vector.load %arg6[%c0_8, %c0_9, %c0_10, %c0_11] : memref<1x4x32x8xf32, #tpu.memory_space<vmem>>, vector<1x1x32x8xf32>
    %11 = vector.shape_cast %10 : vector<1x1x32x8xf32> to vector<32x8xf32>
    %cst_12 = arith.constant dense<0.000000e+00> : vector<64x8xf32>
    %12 = tpu.matmul %3, %11, %cst_12 {dimension_numbers = #tpu.dot_dimension_numbers<[1], [0], [0], [1], [0, 0, 1, 1], [], []>} : vector<64x32xf32>, vector<32x8xf32>, vector<64x8xf32> -> vector<64x8xf32>
    %c0_13 = arith.constant 0 : index
    %c0_14 = arith.constant 0 : index
    %c0_15 = arith.constant 0 : index
    %c0_16 = arith.constant 0 : index
    %13 = vector.load %arg7[%c0_13, %c0_14, %c0_15, %c0_16] : memref<1x4x32x8xf32, #tpu.memory_space<vmem>>, vector<1x1x32x8xf32>
    %14 = vector.shape_cast %13 : vector<1x1x32x8xf32> to vector<32x8xf32>
    %cst_17 = arith.constant dense<0.000000e+00> : vector<64x8xf32>
    %15 = tpu.matmul %3, %14, %cst_17 {dimension_numbers = #tpu.dot_dimension_numbers<[1], [0], [0], [1], [0, 0, 1, 1], [], []>} : vector<64x32xf32>, vector<32x8xf32>, vector<64x8xf32> -> vector<64x8xf32>
    %cst_18 = arith.constant dense<0.000000e+00> : vector<64x64xf32>
    %16 = tpu.matmul %9, %12, %cst_18 {dimension_numbers = #tpu.dot_dimension_numbers<[1], [1], [0], [0], [0, 0, 1, 0], [], []>} : vector<64x8xf32>, vector<64x8xf32>, vector<64x64xf32> -> vector<64x64xf32>
    %cst_19 = arith.constant dense<0xFF800000> : vector<64xf32>
    %17 = vector.multi_reduction <maximumf>, %16, %cst_19 [1] : vector<64x64xf32> to vector<64xf32>
    %18 = vector.shape_cast %17 : vector<64xf32> to vector<64x1xf32>
    %19 = vector.broadcast %18 : vector<64x1xf32> to vector<64x64xf32>
    %20 = arith.subf %16, %19 : vector<64x64xf32>
    %21 = math.exp %20 : vector<64x64xf32>
    %cst_20 = arith.constant dense<0.000000e+00> : vector<64xf32>
    %22 = vector.multi_reduction <add>, %21, %cst_20 [1] : vector<64x64xf32> to vector<64xf32>
    %23 = vector.shape_cast %22 : vector<64xf32> to vector<64x1xf32>
    %24 = tpu.reciprocal %23 {approx = true} : vector<64x1xf32> -> vector<64x1xf32>
    %25 = vector.broadcast %24 : vector<64x1xf32> to vector<64x64xf32>
    %26 = arith.mulf %21, %25 : vector<64x64xf32>
    %cst_21 = arith.constant dense<0.000000e+00> : vector<64x8xf32>
    %27 = tpu.matmul %26, %15, %cst_21 {dimension_numbers = #tpu.dot_dimension_numbers<[1], [0], [0], [1], [0, 0, 1, 1], [], []>} : vector<64x64xf32>, vector<64x8xf32>, vector<64x8xf32> -> vector<64x8xf32>
    %c0_22 = arith.constant 0 : index
    %c0_23 = arith.constant 0 : index
    %c0_24 = arith.constant 0 : index
    %c0_25 = arith.constant 0 : index
    %28 = vector.load %arg8[%c0_22, %c0_23, %c0_24, %c0_25] : memref<1x4x8x32xf32, #tpu.memory_space<vmem>>, vector<1x1x8x32xf32>
    %29 = vector.shape_cast %28 : vector<1x1x8x32xf32> to vector<8x32xf32>
    %cst_26 = arith.constant dense<0.000000e+00> : vector<64x32xf32>
    %30 = tpu.matmul %27, %29, %cst_26 {dimension_numbers = #tpu.dot_dimension_numbers<[1], [0], [0], [1], [0, 0, 1, 1], [], []>} : vector<64x8xf32>, vector<8x32xf32>, vector<64x32xf32> -> vector<64x32xf32>
    %31 = arith.addf %4, %30 : vector<64x32xf32>
    %c0_27 = arith.constant 0 : index
    %c1 = arith.constant 1 : index
    %c0_28 = arith.constant 0 : index
    %c0_29 = arith.constant 0 : index
    %32 = vector.load %arg5[%c0_27, %c1, %c0_28, %c0_29] : memref<1x4x32x8xf32, #tpu.memory_space<vmem>>, vector<1x1x32x8xf32>
    %33 = vector.shape_cast %32 : vector<1x1x32x8xf32> to vector<32x8xf32>
    %cst_30 = arith.constant dense<0.000000e+00> : vector<64x8xf32>
    %34 = tpu.matmul %3, %33, %cst_30 {dimension_numbers = #tpu.dot_dimension_numbers<[1], [0], [0], [1], [0, 0, 1, 1], [], []>} : vector<64x32xf32>, vector<32x8xf32>, vector<64x8xf32> -> vector<64x8xf32>
    %cst_31 = arith.constant 0.353553385 : f32
    %35 = vector.broadcast %cst_31 : f32 to vector<64x8xf32>
    %36 = arith.mulf %34, %35 : vector<64x8xf32>
    %c0_32 = arith.constant 0 : index
    %c1_33 = arith.constant 1 : index
    %c0_34 = arith.constant 0 : index
    %c0_35 = arith.constant 0 : index
    %37 = vector.load %arg6[%c0_32, %c1_33, %c0_34, %c0_35] : memref<1x4x32x8xf32, #tpu.memory_space<vmem>>, vector<1x1x32x8xf32>
    %38 = vector.shape_cast %37 : vector<1x1x32x8xf32> to vector<32x8xf32>
    %cst_36 = arith.constant dense<0.000000e+00> : vector<64x8xf32>
    %39 = tpu.matmul %3, %38, %cst_36 {dimension_numbers = #tpu.dot_dimension_numbers<[1], [0], [0], [1], [0, 0, 1, 1], [], []>} : vector<64x32xf32>, vector<32x8xf32>, vector<64x8xf32> -> vector<64x8xf32>
    %c0_37 = arith.constant 0 : index
    %c1_38 = arith.constant 1 : index
    %c0_39 = arith.constant 0 : index
    %c0_40 = arith.constant 0 : index
    %40 = vector.load %arg7[%c0_37, %c1_38, %c0_39, %c0_40] : memref<1x4x32x8xf32, #tpu.memory_space<vmem>>, vector<1x1x32x8xf32>
    %41 = vector.shape_cast %40 : vector<1x1x32x8xf32> to vector<32x8xf32>
    %cst_41 = arith.constant dense<0.000000e+00> : vector<64x8xf32>
    %42 = tpu.matmul %3, %41, %cst_41 {dimension_numbers = #tpu.dot_dimension_numbers<[1], [0], [0], [1], [0, 0, 1, 1], [], []>} : vector<64x32xf32>, vector<32x8xf32>, vector<64x8xf32> -> vector<64x8xf32>
    %cst_42 = arith.constant dense<0.000000e+00> : vector<64x64xf32>
    %43 = tpu.matmul %36, %39, %cst_42 {dimension_numbers = #tpu.dot_dimension_numbers<[1], [1], [0], [0], [0, 0, 1, 0], [], []>} : vector<64x8xf32>, vector<64x8xf32>, vector<64x64xf32> -> vector<64x64xf32>
    %cst_43 = arith.constant dense<0xFF800000> : vector<64xf32>
    %44 = vector.multi_reduction <maximumf>, %43, %cst_43 [1] : vector<64x64xf32> to vector<64xf32>
    %45 = vector.shape_cast %44 : vector<64xf32> to vector<64x1xf32>
    %46 = vector.broadcast %45 : vector<64x1xf32> to vector<64x64xf32>
    %47 = arith.subf %43, %46 : vector<64x64xf32>
    %48 = math.exp %47 : vector<64x64xf32>
    %cst_44 = arith.constant dense<0.000000e+00> : vector<64xf32>
    %49 = vector.multi_reduction <add>, %48, %cst_44 [1] : vector<64x64xf32> to vector<64xf32>
    %50 = vector.shape_cast %49 : vector<64xf32> to vector<64x1xf32>
    %51 = tpu.reciprocal %50 {approx = true} : vector<64x1xf32> -> vector<64x1xf32>
    %52 = vector.broadcast %51 : vector<64x1xf32> to vector<64x64xf32>
    %53 = arith.mulf %48, %52 : vector<64x64xf32>
    %cst_45 = arith.constant dense<0.000000e+00> : vector<64x8xf32>
    %54 = tpu.matmul %53, %42, %cst_45 {dimension_numbers = #tpu.dot_dimension_numbers<[1], [0], [0], [1], [0, 0, 1, 1], [], []>} : vector<64x64xf32>, vector<64x8xf32>, vector<64x8xf32> -> vector<64x8xf32>
    %c0_46 = arith.constant 0 : index
    %c1_47 = arith.constant 1 : index
    %c0_48 = arith.constant 0 : index
    %c0_49 = arith.constant 0 : index
    %55 = vector.load %arg8[%c0_46, %c1_47, %c0_48, %c0_49] : memref<1x4x8x32xf32, #tpu.memory_space<vmem>>, vector<1x1x8x32xf32>
    %56 = vector.shape_cast %55 : vector<1x1x8x32xf32> to vector<8x32xf32>
    %cst_50 = arith.constant dense<0.000000e+00> : vector<64x32xf32>
    %57 = tpu.matmul %54, %56, %cst_50 {dimension_numbers = #tpu.dot_dimension_numbers<[1], [0], [0], [1], [0, 0, 1, 1], [], []>} : vector<64x8xf32>, vector<8x32xf32>, vector<64x32xf32> -> vector<64x32xf32>
    %58 = arith.addf %31, %57 : vector<64x32xf32>
    %c0_51 = arith.constant 0 : index
    %c2 = arith.constant 2 : index
    %c0_52 = arith.constant 0 : index
    %c0_53 = arith.constant 0 : index
    %59 = vector.load %arg5[%c0_51, %c2, %c0_52, %c0_53] : memref<1x4x32x8xf32, #tpu.memory_space<vmem>>, vector<1x1x32x8xf32>
    %60 = vector.shape_cast %59 : vector<1x1x32x8xf32> to vector<32x8xf32>
    %cst_54 = arith.constant dense<0.000000e+00> : vector<64x8xf32>
    %61 = tpu.matmul %3, %60, %cst_54 {dimension_numbers = #tpu.dot_dimension_numbers<[1], [0], [0], [1], [0, 0, 1, 1], [], []>} : vector<64x32xf32>, vector<32x8xf32>, vector<64x8xf32> -> vector<64x8xf32>
    %cst_55 = arith.constant 0.353553385 : f32
    %62 = vector.broadcast %cst_55 : f32 to vector<64x8xf32>
    %63 = arith.mulf %61, %62 : vector<64x8xf32>
    %c0_56 = arith.constant 0 : index
    %c2_57 = arith.constant 2 : index
    %c0_58 = arith.constant 0 : index
    %c0_59 = arith.constant 0 : index
    %64 = vector.load %arg6[%c0_56, %c2_57, %c0_58, %c0_59] : memref<1x4x32x8xf32, #tpu.memory_space<vmem>>, vector<1x1x32x8xf32>
    %65 = vector.shape_cast %64 : vector<1x1x32x8xf32> to vector<32x8xf32>
    %cst_60 = arith.constant dense<0.000000e+00> : vector<64x8xf32>
    %66 = tpu.matmul %3, %65, %cst_60 {dimension_numbers = #tpu.dot_dimension_numbers<[1], [0], [0], [1], [0, 0, 1, 1], [], []>} : vector<64x32xf32>, vector<32x8xf32>, vector<64x8xf32> -> vector<64x8xf32>
    %c0_61 = arith.constant 0 : index
    %c2_62 = arith.constant 2 : index
    %c0_63 = arith.constant 0 : index
    %c0_64 = arith.constant 0 : index
    %67 = vector.load %arg7[%c0_61, %c2_62, %c0_63, %c0_64] : memref<1x4x32x8xf32, #tpu.memory_space<vmem>>, vector<1x1x32x8xf32>
    %68 = vector.shape_cast %67 : vector<1x1x32x8xf32> to vector<32x8xf32>
    %cst_65 = arith.constant dense<0.000000e+00> : vector<64x8xf32>
    %69 = tpu.matmul %3, %68, %cst_65 {dimension_numbers = #tpu.dot_dimension_numbers<[1], [0], [0], [1], [0, 0, 1, 1], [], []>} : vector<64x32xf32>, vector<32x8xf32>, vector<64x8xf32> -> vector<64x8xf32>
    %cst_66 = arith.constant dense<0.000000e+00> : vector<64x64xf32>
    %70 = tpu.matmul %63, %66, %cst_66 {dimension_numbers = #tpu.dot_dimension_numbers<[1], [1], [0], [0], [0, 0, 1, 0], [], []>} : vector<64x8xf32>, vector<64x8xf32>, vector<64x64xf32> -> vector<64x64xf32>
    %cst_67 = arith.constant dense<0xFF800000> : vector<64xf32>
    %71 = vector.multi_reduction <maximumf>, %70, %cst_67 [1] : vector<64x64xf32> to vector<64xf32>
    %72 = vector.shape_cast %71 : vector<64xf32> to vector<64x1xf32>
    %73 = vector.broadcast %72 : vector<64x1xf32> to vector<64x64xf32>
    %74 = arith.subf %70, %73 : vector<64x64xf32>
    %75 = math.exp %74 : vector<64x64xf32>
    %cst_68 = arith.constant dense<0.000000e+00> : vector<64xf32>
    %76 = vector.multi_reduction <add>, %75, %cst_68 [1] : vector<64x64xf32> to vector<64xf32>
    %77 = vector.shape_cast %76 : vector<64xf32> to vector<64x1xf32>
    %78 = tpu.reciprocal %77 {approx = true} : vector<64x1xf32> -> vector<64x1xf32>
    %79 = vector.broadcast %78 : vector<64x1xf32> to vector<64x64xf32>
    %80 = arith.mulf %75, %79 : vector<64x64xf32>
    %cst_69 = arith.constant dense<0.000000e+00> : vector<64x8xf32>
    %81 = tpu.matmul %80, %69, %cst_69 {dimension_numbers = #tpu.dot_dimension_numbers<[1], [0], [0], [1], [0, 0, 1, 1], [], []>} : vector<64x64xf32>, vector<64x8xf32>, vector<64x8xf32> -> vector<64x8xf32>
    %c0_70 = arith.constant 0 : index
    %c2_71 = arith.constant 2 : index
    %c0_72 = arith.constant 0 : index
    %c0_73 = arith.constant 0 : index
    %82 = vector.load %arg8[%c0_70, %c2_71, %c0_72, %c0_73] : memref<1x4x8x32xf32, #tpu.memory_space<vmem>>, vector<1x1x8x32xf32>
    %83 = vector.shape_cast %82 : vector<1x1x8x32xf32> to vector<8x32xf32>
    %cst_74 = arith.constant dense<0.000000e+00> : vector<64x32xf32>
    %84 = tpu.matmul %81, %83, %cst_74 {dimension_numbers = #tpu.dot_dimension_numbers<[1], [0], [0], [1], [0, 0, 1, 1], [], []>} : vector<64x8xf32>, vector<8x32xf32>, vector<64x32xf32> -> vector<64x32xf32>
    %85 = arith.addf %58, %84 : vector<64x32xf32>
    %c0_75 = arith.constant 0 : index
    %c3 = arith.constant 3 : index
    %c0_76 = arith.constant 0 : index
    %c0_77 = arith.constant 0 : index
    %86 = vector.load %arg5[%c0_75, %c3, %c0_76, %c0_77] : memref<1x4x32x8xf32, #tpu.memory_space<vmem>>, vector<1x1x32x8xf32>
    %87 = vector.shape_cast %86 : vector<1x1x32x8xf32> to vector<32x8xf32>
    %cst_78 = arith.constant dense<0.000000e+00> : vector<64x8xf32>
    %88 = tpu.matmul %3, %87, %cst_78 {dimension_numbers = #tpu.dot_dimension_numbers<[1], [0], [0], [1], [0, 0, 1, 1], [], []>} : vector<64x32xf32>, vector<32x8xf32>, vector<64x8xf32> -> vector<64x8xf32>
    %cst_79 = arith.constant 0.353553385 : f32
    %89 = vector.broadcast %cst_79 : f32 to vector<64x8xf32>
    %90 = arith.mulf %88, %89 : vector<64x8xf32>
    %c0_80 = arith.constant 0 : index
    %c3_81 = arith.constant 3 : index
    %c0_82 = arith.constant 0 : index
    %c0_83 = arith.constant 0 : index
    %91 = vector.load %arg6[%c0_80, %c3_81, %c0_82, %c0_83] : memref<1x4x32x8xf32, #tpu.memory_space<vmem>>, vector<1x1x32x8xf32>
    %92 = vector.shape_cast %91 : vector<1x1x32x8xf32> to vector<32x8xf32>
    %cst_84 = arith.constant dense<0.000000e+00> : vector<64x8xf32>
    %93 = tpu.matmul %3, %92, %cst_84 {dimension_numbers = #tpu.dot_dimension_numbers<[1], [0], [0], [1], [0, 0, 1, 1], [], []>} : vector<64x32xf32>, vector<32x8xf32>, vector<64x8xf32> -> vector<64x8xf32>
    %c0_85 = arith.constant 0 : index
    %c3_86 = arith.constant 3 : index
    %c0_87 = arith.constant 0 : index
    %c0_88 = arith.constant 0 : index
    %94 = vector.load %arg7[%c0_85, %c3_86, %c0_87, %c0_88] : memref<1x4x32x8xf32, #tpu.memory_space<vmem>>, vector<1x1x32x8xf32>
    %95 = vector.shape_cast %94 : vector<1x1x32x8xf32> to vector<32x8xf32>
    %cst_89 = arith.constant dense<0.000000e+00> : vector<64x8xf32>
    %96 = tpu.matmul %3, %95, %cst_89 {dimension_numbers = #tpu.dot_dimension_numbers<[1], [0], [0], [1], [0, 0, 1, 1], [], []>} : vector<64x32xf32>, vector<32x8xf32>, vector<64x8xf32> -> vector<64x8xf32>
    %cst_90 = arith.constant dense<0.000000e+00> : vector<64x64xf32>
    %97 = tpu.matmul %90, %93, %cst_90 {dimension_numbers = #tpu.dot_dimension_numbers<[1], [1], [0], [0], [0, 0, 1, 0], [], []>} : vector<64x8xf32>, vector<64x8xf32>, vector<64x64xf32> -> vector<64x64xf32>
    %cst_91 = arith.constant dense<0xFF800000> : vector<64xf32>
    %98 = vector.multi_reduction <maximumf>, %97, %cst_91 [1] : vector<64x64xf32> to vector<64xf32>
    %99 = vector.shape_cast %98 : vector<64xf32> to vector<64x1xf32>
    %100 = vector.broadcast %99 : vector<64x1xf32> to vector<64x64xf32>
    %101 = arith.subf %97, %100 : vector<64x64xf32>
    %102 = math.exp %101 : vector<64x64xf32>
    %cst_92 = arith.constant dense<0.000000e+00> : vector<64xf32>
    %103 = vector.multi_reduction <add>, %102, %cst_92 [1] : vector<64x64xf32> to vector<64xf32>
    %104 = vector.shape_cast %103 : vector<64xf32> to vector<64x1xf32>
    %105 = tpu.reciprocal %104 {approx = true} : vector<64x1xf32> -> vector<64x1xf32>
    %106 = vector.broadcast %105 : vector<64x1xf32> to vector<64x64xf32>
    %107 = arith.mulf %102, %106 : vector<64x64xf32>
    %cst_93 = arith.constant dense<0.000000e+00> : vector<64x8xf32>
    %108 = tpu.matmul %107, %96, %cst_93 {dimension_numbers = #tpu.dot_dimension_numbers<[1], [0], [0], [1], [0, 0, 1, 1], [], []>} : vector<64x64xf32>, vector<64x8xf32>, vector<64x8xf32> -> vector<64x8xf32>
    %c0_94 = arith.constant 0 : index
    %c3_95 = arith.constant 3 : index
    %c0_96 = arith.constant 0 : index
    %c0_97 = arith.constant 0 : index
    %109 = vector.load %arg8[%c0_94, %c3_95, %c0_96, %c0_97] : memref<1x4x8x32xf32, #tpu.memory_space<vmem>>, vector<1x1x8x32xf32>
    %110 = vector.shape_cast %109 : vector<1x1x8x32xf32> to vector<8x32xf32>
    %cst_98 = arith.constant dense<0.000000e+00> : vector<64x32xf32>
    %111 = tpu.matmul %108, %110, %cst_98 {dimension_numbers = #tpu.dot_dimension_numbers<[1], [0], [0], [1], [0, 0, 1, 1], [], []>} : vector<64x8xf32>, vector<8x32xf32>, vector<64x32xf32> -> vector<64x32xf32>
    %112 = arith.addf %85, %111 : vector<64x32xf32>
    %113 = arith.addf %3, %112 : vector<64x32xf32>
    %c0_99 = arith.constant 0 : index
    %c0_100 = arith.constant 0 : index
    %c0_101 = arith.constant 0 : index
    %114 = vector.load %arg11[%c0_99, %c0_100, %c0_101] : memref<1x1x32xf32, #tpu.memory_space<vmem>>, vector<1x1x32xf32>
    %115 = vector.shape_cast %114 : vector<1x1x32xf32> to vector<1x32xf32>
    %cst_102 = arith.constant dense<0.000000e+00> : vector<64xf32>
    %116 = vector.multi_reduction <add>, %113, %cst_102 [1] : vector<64x32xf32> to vector<64xf32>
    %117 = vector.shape_cast %116 : vector<64xf32> to vector<64x1xf32>
    %cst_103 = arith.constant 3.200000e+01 : f32
    %118 = vector.broadcast %cst_103 : f32 to vector<64x1xf32>
    %119 = arith.divf %117, %118 : vector<64x1xf32>
    %120 = vector.broadcast %119 : vector<64x1xf32> to vector<64x32xf32>
    %121 = arith.subf %113, %120 : vector<64x32xf32>
    %122 = arith.mulf %121, %121 : vector<64x32xf32>
    %cst_104 = arith.constant dense<0.000000e+00> : vector<64xf32>
    %123 = vector.multi_reduction <add>, %122, %cst_104 [1] : vector<64x32xf32> to vector<64xf32>
    %124 = vector.shape_cast %123 : vector<64xf32> to vector<64x1xf32>
    %cst_105 = arith.constant 3.200000e+01 : f32
    %125 = vector.broadcast %cst_105 : f32 to vector<64x1xf32>
    %126 = arith.divf %124, %125 : vector<64x1xf32>
    %127 = vector.broadcast %119 : vector<64x1xf32> to vector<64x32xf32>
    %128 = arith.subf %113, %127 : vector<64x32xf32>
    %cst_106 = arith.constant 9.99999974E-6 : f32
    %129 = vector.broadcast %cst_106 : f32 to vector<64x1xf32>
    %130 = arith.addf %126, %129 : vector<64x1xf32>
    %131 = math.rsqrt %130 : vector<64x1xf32>
    %132 = vector.broadcast %131 : vector<64x1xf32> to vector<64x32xf32>
    %133 = arith.mulf %128, %132 : vector<64x32xf32>
    %134 = vector.broadcast %115 : vector<1x32xf32> to vector<64x32xf32>
    %135 = arith.mulf %133, %134 : vector<64x32xf32>
    %c0_107 = arith.constant 0 : index
    %c0_108 = arith.constant 0 : index
    %c0_109 = arith.constant 0 : index
    %136 = vector.load %arg9[%c0_107, %c0_108, %c0_109] : memref<1x32x64xf32, #tpu.memory_space<vmem>>, vector<1x32x64xf32>
    %137 = vector.shape_cast %136 : vector<1x32x64xf32> to vector<32x64xf32>
    %cst_110 = arith.constant dense<0.000000e+00> : vector<64x64xf32>
    %138 = tpu.matmul %135, %137, %cst_110 {dimension_numbers = #tpu.dot_dimension_numbers<[1], [0], [0], [1], [0, 0, 1, 1], [], []>} : vector<64x32xf32>, vector<32x64xf32>, vector<64x64xf32> -> vector<64x64xf32>
    %cst_111 = arith.constant 0.000000e+00 : f32
    %139 = vector.broadcast %cst_111 : f32 to vector<64x64xf32>
    %140 = arith.maximumf %138, %139 : vector<64x64xf32>
    %c0_112 = arith.constant 0 : index
    %c0_113 = arith.constant 0 : index
    %c0_114 = arith.constant 0 : index
    %141 = vector.load %arg10[%c0_112, %c0_113, %c0_114] : memref<1x64x32xf32, #tpu.memory_space<vmem>>, vector<1x64x32xf32>
    %142 = vector.shape_cast %141 : vector<1x64x32xf32> to vector<64x32xf32>
    %cst_115 = arith.constant dense<0.000000e+00> : vector<64x32xf32>
    %143 = tpu.matmul %140, %142, %cst_115 {dimension_numbers = #tpu.dot_dimension_numbers<[1], [0], [0], [1], [0, 0, 1, 1], [], []>} : vector<64x64xf32>, vector<64x32xf32>, vector<64x32xf32> -> vector<64x32xf32>
    %144 = arith.addf %135, %143 : vector<64x32xf32>
    %c0_116 = arith.constant 0 : index
    %c0_117 = arith.constant 0 : index
    %c0_118 = arith.constant 0 : index
    %145 = vector.load %arg12[%c0_116, %c0_117, %c0_118] : memref<1x1x32xf32, #tpu.memory_space<vmem>>, vector<1x1x32xf32>
    %146 = vector.shape_cast %145 : vector<1x1x32xf32> to vector<1x32xf32>
    %cst_119 = arith.constant dense<0.000000e+00> : vector<64xf32>
    %147 = vector.multi_reduction <add>, %144, %cst_119 [1] : vector<64x32xf32> to vector<64xf32>
    %148 = vector.shape_cast %147 : vector<64xf32> to vector<64x1xf32>
    %cst_120 = arith.constant 3.200000e+01 : f32
    %149 = vector.broadcast %cst_120 : f32 to vector<64x1xf32>
    %150 = arith.divf %148, %149 : vector<64x1xf32>
    %151 = vector.broadcast %150 : vector<64x1xf32> to vector<64x32xf32>
    %152 = arith.subf %144, %151 : vector<64x32xf32>
    %153 = arith.mulf %152, %152 : vector<64x32xf32>
    %cst_121 = arith.constant dense<0.000000e+00> : vector<64xf32>
    %154 = vector.multi_reduction <add>, %153, %cst_121 [1] : vector<64x32xf32> to vector<64xf32>
    %155 = vector.shape_cast %154 : vector<64xf32> to vector<64x1xf32>
    %cst_122 = arith.constant 3.200000e+01 : f32
    %156 = vector.broadcast %cst_122 : f32 to vector<64x1xf32>
    %157 = arith.divf %155, %156 : vector<64x1xf32>
    %158 = vector.broadcast %150 : vector<64x1xf32> to vector<64x32xf32>
    %159 = arith.subf %144, %158 : vector<64x32xf32>
    %cst_123 = arith.constant 9.99999974E-6 : f32
    %160 = vector.broadcast %cst_123 : f32 to vector<64x1xf32>
    %161 = arith.addf %157, %160 : vector<64x1xf32>
    %162 = math.rsqrt %161 : vector<64x1xf32>
    %163 = vector.broadcast %162 : vector<64x1xf32> to vector<64x32xf32>
    %164 = arith.mulf %159, %163 : vector<64x32xf32>
    %165 = vector.broadcast %146 : vector<1x32xf32> to vector<64x32xf32>
    %166 = arith.mulf %164, %165 : vector<64x32xf32>
    %c0_124 = arith.constant 0 : index
    %c0_125 = arith.constant 0 : index
    %167 = vector.load %arg14[%c0_124, %c0_125] : memref<64x32xf32, #tpu.memory_space<vmem>>, vector<64x32xf32>
    tpu.vector_store %arg14[%c0_124, %c0_125], %166 {strides = array<i32>} : memref<64x32xf32, #tpu.memory_space<vmem>>, vector<64x32xf32>,
    %c1_i32 = arith.constant 1 : i32
    %168 = arith.cmpi eq, %arg1, %c1_i32 : i32
    %169 = arith.extui %168 : i1 to i32
    %c0_i32_126 = arith.constant 0 : i32
    %170 = arith.cmpi ne, %169, %c0_i32_126 : i32
    scf.if %170 {
      %c0_127 = arith.constant 0 : index
      %c0_128 = arith.constant 0 : index
      %c0_129 = arith.constant 0 : index
      %171 = vector.load %arg13[%c0_127, %c0_128, %c0_129] : memref<1x64x32xf32, #tpu.memory_space<vmem>>, vector<1x64x32xf32>
      %172 = vector.shape_cast %171 : vector<1x64x32xf32> to vector<64x32xf32>
      %173 = vector.shape_cast %166 : vector<64x32xf32> to vector<1x64x32xf32>
      tpu.vector_store %arg13[%c0_127, %c0_128, %c0_129], %173 {strides = array<i32>} : memref<1x64x32xf32, #tpu.memory_space<vmem>>, vector<1x64x32xf32>,
    } else {
    }
    return
  }
  func.func @transform_0(%arg0: i32, %arg1: i32) -> (i32, i32, i32) {
    %c0_i32 = arith.constant 0 : i32
    %c0_i32_0 = arith.constant 0 : i32
    %c0_i32_1 = arith.constant 0 : i32
    return %arg0, %c0_i32, %c0_i32_0 : i32, i32, i32
  }
  func.func @transform_1(%arg0: i32, %arg1: i32) -> (i32, i32) {
    %c0_i32 = arith.constant 0 : i32
    %c0_i32_0 = arith.constant 0 : i32
    %c0_i32_1 = arith.constant 0 : i32
    return %c0_i32, %c0_i32_0 : i32, i32
  }
  func.func @transform_2(%arg0: i32, %arg1: i32) -> (i32, i32) {
    %c0_i32 = arith.constant 0 : i32
    %c0_i32_0 = arith.constant 0 : i32
    %c0_i32_1 = arith.constant 0 : i32
    return %c0_i32, %c0_i32_0 : i32, i32
  }
  func.func @transform_3(%arg0: i32, %arg1: i32) -> (i32, i32, i32, i32) {
    %c0_i32 = arith.constant 0 : i32
    %c0_i32_0 = arith.constant 0 : i32
    %c0_i32_1 = arith.constant 0 : i32
    %c0_i32_2 = arith.constant 0 : i32
    return %arg1, %c0_i32, %c0_i32_0, %c0_i32_1 : i32, i32, i32, i32
  }
  func.func @transform_4(%arg0: i32, %arg1: i32) -> (i32, i32, i32, i32) {
    %c0_i32 = arith.constant 0 : i32
    %c0_i32_0 = arith.constant 0 : i32
    %c0_i32_1 = arith.constant 0 : i32
    %c0_i32_2 = arith.constant 0 : i32
    return %arg1, %c0_i32, %c0_i32_0, %c0_i32_1 : i32, i32, i32, i32
  }
  func.func @transform_5(%arg0: i32, %arg1: i32) -> (i32, i32, i32, i32) {
    %c0_i32 = arith.constant 0 : i32
    %c0_i32_0 = arith.constant 0 : i32
    %c0_i32_1 = arith.constant 0 : i32
    %c0_i32_2 = arith.constant 0 : i32
    return %arg1, %c0_i32, %c0_i32_0, %c0_i32_1 : i32, i32, i32, i32
  }
  func.func @transform_6(%arg0: i32, %arg1: i32) -> (i32, i32, i32, i32) {
    %c0_i32 = arith.constant 0 : i32
    %c0_i32_0 = arith.constant 0 : i32
    %c0_i32_1 = arith.constant 0 : i32
    %c0_i32_2 = arith.constant 0 : i32
    return %arg1, %c0_i32, %c0_i32_0, %c0_i32_1 : i32, i32, i32, i32
  }
  func.func @transform_7(%arg0: i32, %arg1: i32) -> (i32, i32, i32) {
    %c0_i32 = arith.constant 0 : i32
    %c0_i32_0 = arith.constant 0 : i32
    %c0_i32_1 = arith.constant 0 : i32
    return %arg1, %c0_i32, %c0_i32_0 : i32, i32, i32
  }
  func.func @transform_8(%arg0: i32, %arg1: i32) -> (i32, i32, i32) {
    %c0_i32 = arith.constant 0 : i32
    %c0_i32_0 = arith.constant 0 : i32
    %c0_i32_1 = arith.constant 0 : i32
    return %arg1, %c0_i32, %c0_i32_0 : i32, i32, i32
  }
  func.func @transform_9(%arg0: i32, %arg1: i32) -> (i32, i32, i32) {
    %c0_i32 = arith.constant 0 : i32
    %c0_i32_0 = arith.constant 0 : i32
    %c0_i32_1 = arith.constant 0 : i32
    return %arg1, %c0_i32, %c0_i32_0 : i32, i32, i32
  }
  func.func @transform_10(%arg0: i32, %arg1: i32) -> (i32, i32, i32) {
    %c0_i32 = arith.constant 0 : i32
    %c0_i32_0 = arith.constant 0 : i32
    %c0_i32_1 = arith.constant 0 : i32
    return %arg1, %c0_i32, %c0_i32_0 : i32, i32, i32
  }
  func.func @transform_11(%arg0: i32, %arg1: i32) -> (i32, i32, i32) {
    %c0_i32 = arith.constant 0 : i32
    %c0_i32_0 = arith.constant 0 : i32
    %c0_i32_1 = arith.constant 0 : i32
    return %arg0, %c0_i32, %c0_i32_0 : i32, i32, i32
  }
}

</mosaic_0001>

<llo_original>
// kernel: tpu_custom_call.1
$region0: #{tpu_custom_call.1}
  #allocation0 [shape = 'u32[]', space=smem, size = 0x4, offset = 0x4, fixed_abs, tag = 'smem constant byte address 0x4 - core index']
  #allocation1 [shape = 'u32[144,128]{1,0:T(1,128)}', space=vmem, size = 0x12000, scoped, tag = 'internal scratch']
  #allocation2 [shape = 'f32[64,32]{1,0:T(8,128)}', space=vmem, size = 0x8000, scoped, tag = 'scratch operand']
  %s0 = inlined_call_operand.vmem [shape: f32[2,64,3], index: 0, kind: input, shape index: {}]
  %s1 = inlined_call_operand.vmem [shape: f32[3,32], index: 1, kind: input, shape index: {}]
  %s2 = inlined_call_operand.vmem [shape: f32[64,32], index: 2, kind: input, shape index: {}]
  %s3 = inlined_call_operand.vmem [shape: f32[2,4,32,8], index: 3, kind: input, shape index: {}]
  %s4 = inlined_call_operand.vmem [shape: f32[2,4,32,8], index: 4, kind: input, shape index: {}]
  %s5 = inlined_call_operand.vmem [shape: f32[2,4,32,8], index: 5, kind: input, shape index: {}]
  %s6 = inlined_call_operand.vmem [shape: f32[2,4,8,32], index: 6, kind: input, shape index: {}]
  %s7 = inlined_call_operand.vmem [shape: f32[2,32,64], index: 7, kind: input, shape index: {}]
  %s8 = inlined_call_operand.vmem [shape: f32[2,64,32], index: 8, kind: input, shape index: {}]
  %s9 = inlined_call_operand.vmem [shape: f32[2,1,32], index: 9, kind: input, shape index: {}]
  %s10 = inlined_call_operand.vmem [shape: f32[2,1,32], index: 10, kind: input, shape index: {}]
  %s11 = inlined_call_operand.vmem [shape: f32[2,64,32], index: 11, kind: output, shape index: {}]
  %s12 = sld [smem:[#allocation0]]
  $region85: #{tpu_custom_call.1} parent=0
    _
  %s14 = ssub.s32 1, %s12
  %s15 = scalar_select 0, %s14, %s12
  loop: start=0, step=1, limit=6
  $region2: #{tpu_custom_call.1} parent=0 // loop_pre_header
    _
  $region3: #{tpu_custom_call.1} parent=0 // loop_header
    %s17 = sphi 0, %s21
    %p18 = scmp.ge.s32.totalorder %s17, 6
    %s24 = sphi 0, %s36
    %s25 = sphi 0, %s32
    %s26 = sphi 0, %s24
    %s27 = sphi 0, %s25
    %s28 = sphi 0, %s26
    %s29 = sphi 0, %s27
    %s39 = sphi 0, %s41
    %s42 = sphi 0, %s39
    %s43 = sphi 0, %s42
    %s59 = sphi 0, %s43
    %s63 = sphi 0, %s63
    %s65 = sphi 0, %s63
    %s66 = sphi 0, %s65
    %s80 = sphi 0, %s66
    %s84 = sphi 0, %s84
    %s86 = sphi 0, %s84
    %s87 = sphi 0, %s86
    %s101 = sphi 0, %s87
    %s107 = sphi 0, %s109
    %s110 = sphi 0, %s107
    %s111 = sphi 0, %s110
    %s127 = sphi 0, %s111
    %s133 = sphi 0, %s135
    %s136 = sphi 0, %s133
    %s137 = sphi 0, %s136
    %s153 = sphi 0, %s137
    %s159 = sphi 0, %s161
    %s162 = sphi 0, %s159
    %s163 = sphi 0, %s162
    %s179 = sphi 0, %s163
    %s185 = sphi 0, %s187
    %s188 = sphi 0, %s185
    %s189 = sphi 0, %s188
    %s205 = sphi 0, %s189
    %s211 = sphi 0, %s213
    %s214 = sphi 0, %s211
    %s215 = sphi 0, %s214
    %s231 = sphi 0, %s215
    %s237 = sphi 0, %s239
    %s240 = sphi 0, %s237
    %s241 = sphi 0, %s240
    %s257 = sphi 0, %s241
    %s263 = sphi 0, %s265
    %s266 = sphi 0, %s263
    %s267 = sphi 0, %s266
    %s283 = sphi 0, %s267
    %s289 = sphi 0, %s291
    %s292 = sphi 0, %s289
    %s293 = sphi 0, %s292
    %s309 = sphi 0, %s293
    %s315 = sphi 0, %s317
    %s318 = sphi 0, %s315
    %s319 = sphi 0, %s318
    %s335 = sphi 0, %s319
  $region4: #{tpu_custom_call.1} parent=0 // loop_header_branch
    %20 = sbr.rel (%p18) target = $region8
  $region5: #{tpu_custom_call.1} parent=0 // loop_body
    %s22 = ssub.s32 %s17, 1
    %s23 = ssub.s32 %s17, 2
    %s30 = sadd.s32 1, %s25
    %p31 = scmp.ge.s32.totalorder %s30, 2
    %s32 = scalar_select %p31, 0, %s30
    %s33 = sadd.s32 1, %s24
    %s34 = scalar_select %p31, %s33, %s24
    %p35 = scmp.ge.s32.totalorder %s34, 2
    %s36 = scalar_select %p35, 0, %s34
    %s37 = ssub.s32 %s24, %s36
    %p38 = scmp.eq.s32.totalorder %s37, 0
    %s40 = sadd.s32 %s39, 1
    %s41 = scalar_select %p38, %s39, %s40
    %p44 = pneg %p38
    %p45 = scmp.eq.s32.totalorder %s17, 3
    %p46 = por %p44, %p45
    %p47 = scmp.ne.s32.totalorder %s39, %s42
    %p48 = scmp.eq.s32.totalorder %s17, 0
    %p49 = por %p47, %p48
    %p50 = scmp.ne.s32.totalorder %s39, %s42
    %p51 = scmp.eq.s32.totalorder %s22, 3
    %p52 = por %p50, %p51
    %p53 = scmp.ne.s32.totalorder %s42, %s43
    %p54 = scmp.eq.s32.totalorder %s22, 0
    %p55 = por %p53, %p54
    %p56 = scmp.ne.s32.totalorder %s42, %s43
    %p57 = scmp.eq.s32.totalorder %s23, 3
    %p58 = por %p56, %p57
    %p60 = scmp.ne.s32.totalorder %s43, %s59
    %p61 = scmp.eq.s32.totalorder %s23, 0
    %p62 = por %p60, %p61
    %s64 = sadd.s32 %s63, 1
    %p67 = scmp.eq.s32.totalorder %s17, 3
    %p68 = scmp.ne.s32.totalorder %s63, %s65
    %p69 = scmp.eq.s32.totalorder %s17, 0
    %p70 = por %p68, %p69
    %p71 = scmp.ne.s32.totalorder %s63, %s65
    %p72 = scmp.eq.s32.totalorder %s22, 3
    %p73 = por %p71, %p72
    %p74 = scmp.ne.s32.totalorder %s65, %s66
    %p75 = scmp.eq.s32.totalorder %s22, 0
    %p76 = por %p74, %p75
    %p77 = scmp.ne.s32.totalorder %s65, %s66
    %p78 = scmp.eq.s32.totalorder %s23, 3
    %p79 = por %p77, %p78
    %p81 = scmp.ne.s32.totalorder %s66, %s80
    %p82 = scmp.eq.s32.totalorder %s23, 0
    %p83 = por %p81, %p82
    %s85 = sadd.s32 %s84, 1
    %p88 = scmp.eq.s32.totalorder %s17, 3
    %p89 = scmp.ne.s32.totalorder %s84, %s86
    %p90 = scmp.eq.s32.totalorder %s17, 0
    %p91 = por %p89, %p90
    %p92 = scmp.ne.s32.totalorder %s84, %s86
    %p93 = scmp.eq.s32.totalorder %s22, 3
    %p94 = por %p92, %p93
    %p95 = scmp.ne.s32.totalorder %s86, %s87
    %p96 = scmp.eq.s32.totalorder %s22, 0
    %p97 = por %p95, %p96
    %p98 = scmp.ne.s32.totalorder %s86, %s87
    %p99 = scmp.eq.s32.totalorder %s23, 3
    %p100 = por %p98, %p99
    %p102 = scmp.ne.s32.totalorder %s87, %s101
    %p103 = scmp.eq.s32.totalorder %s23, 0
    %p104 = por %p102, %p103
    %s105 = ssub.s32 %s25, %s32
    %p106 = scmp.eq.s32.totalorder %s105, 0
    %s108 = sadd.s32 %s107, 1
    %s109 = scalar_select %p106, %s107, %s108
    %p112 = pneg %p106
    %p113 = scmp.eq.s32.totalorder %s17, 3
    %p114 = por %p112, %p113
    %p115 = scmp.ne.s32.totalorder %s107, %s110
    %p116 = scmp.eq.s32.totalorder %s17, 0
    %p117 = por %p115, %p116
    %p118 = scmp.ne.s32.totalorder %s107, %s110
    %p119 = scmp.eq.s32.totalorder %s22, 3
    %p120 = por %p118, %p119
    %p121 = scmp.ne.s32.totalorder %s110, %s111
    %p122 = scmp.eq.s32.totalorder %s22, 0
    %p123 = por %p121, %p122
    %p124 = scmp.ne.s32.totalorder %s110, %s111
    %p125 = scmp.eq.s32.totalorder %s23, 3
    %p126 = por %p124, %p125
    %p128 = scmp.ne.s32.totalorder %s111, %s127
    %p129 = scmp.eq.s32.totalorder %s23, 0
    %p130 = por %p128, %p129
    %s131 = ssub.s32 %s25, %s32
    %p132 = scmp.eq.s32.totalorder %s131, 0
    %s134 = sadd.s32 %s133, 1
    %s135 = scalar_select %p132, %s133, %s134
    %p138 = pneg %p132
    %p139 = scmp.eq.s32.totalorder %s17, 3
    %p140 = por %p138, %p139
    %p141 = scmp.ne.s32.totalorder %s133, %s136
    %p142 = scmp.eq.s32.totalorder %s17, 0
    %p143 = por %p141, %p142
    %p144 = scmp.ne.s32.totalorder %s133, %s136
    %p145 = scmp.eq.s32.totalorder %s22, 3
    %p146 = por %p144, %p145
    %p147 = scmp.ne.s32.totalorder %s136, %s137
    %p148 = scmp.eq.s32.totalorder %s22, 0
    %p149 = por %p147, %p148
    %p150 = scmp.ne.s32.totalorder %s136, %s137
    %p151 = scmp.eq.s32.totalorder %s23, 3
    %p152 = por %p150, %p151
    %p154 = scmp.ne.s32.totalorder %s137, %s153
    %p155 = scmp.eq.s32.totalorder %s23, 0
    %p156 = por %p154, %p155
    %s157 = ssub.s32 %s25, %s32
    %p158 = scmp.eq.s32.totalorder %s157, 0
    %s160 = sadd.s32 %s159, 1
    %s161 = scalar_select %p158, %s159, %s160
    %p164 = pneg %p158
    %p165 = scmp.eq.s32.totalorder %s17, 3
    %p166 = por %p164, %p165
    %p167 = scmp.ne.s32.totalorder %s159, %s162
    %p168 = scmp.eq.s32.totalorder %s17, 0
    %p169 = por %p167, %p168
    %p170 = scmp.ne.s32.totalorder %s159, %s162
    %p171 = scmp.eq.s32.totalorder %s22, 3
    %p172 = por %p170, %p171
    %p173 = scmp.ne.s32.totalorder %s162, %s163
    %p174 = scmp.eq.s32.totalorder %s22, 0
    %p175 = por %p173, %p174
    %p176 = scmp.ne.s32.totalorder %s162, %s163
    %p177 = scmp.eq.s32.totalorder %s23, 3
    %p178 = por %p176, %p177
    %p180 = scmp.ne.s32.totalorder %s163, %s179
    %p181 = scmp.eq.s32.totalorder %s23, 0
    %p182 = por %p180, %p181
    %s183 = ssub.s32 %s25, %s32
    %p184 = scmp.eq.s32.totalorder %s183, 0
    %s186 = sadd.s32 %s185, 1
    %s187 = scalar_select %p184, %s185, %s186
    %p190 = pneg %p184
    %p191 = scmp.eq.s32.totalorder %s17, 3
    %p192 = por %p190, %p191
    %p193 = scmp.ne.s32.totalorder %s185, %s188
    %p194 = scmp.eq.s32.totalorder %s17, 0
    %p195 = por %p193, %p194
    %p196 = scmp.ne.s32.totalorder %s185, %s188
    %p197 = scmp.eq.s32.totalorder %s22, 3
    %p198 = por %p196, %p197
    %p199 = scmp.ne.s32.totalorder %s188, %s189
    %p200 = scmp.eq.s32.totalorder %s22, 0
    %p201 = por %p199, %p200
    %p202 = scmp.ne.s32.totalorder %s188, %s189
    %p203 = scmp.eq.s32.totalorder %s23, 3
    %p204 = por %p202, %p203
    %p206 = scmp.ne.s32.totalorder %s189, %s205
    %p207 = scmp.eq.s32.totalorder %s23, 0
    %p208 = por %p206, %p207
    %s209 = ssub.s32 %s25, %s32
    %p210 = scmp.eq.s32.totalorder %s209, 0
    %s212 = sadd.s32 %s211, 1
    %s213 = scalar_select %p210, %s211, %s212
    %p216 = pneg %p210
    %p217 = scmp.eq.s32.totalorder %s17, 3
    %p218 = por %p216, %p217
    %p219 = scmp.ne.s32.totalorder %s211, %s214
    %p220 = scmp.eq.s32.totalorder %s17, 0
    %p221 = por %p219, %p220
    %p222 = scmp.ne.s32.totalorder %s211, %s214
    %p223 = scmp.eq.s32.totalorder %s22, 3
    %p224 = por %p222, %p223
    %p225 = scmp.ne.s32.totalorder %s214, %s215
    %p226 = scmp.eq.s32.totalorder %s22, 0
    %p227 = por %p225, %p226
    %p228 = scmp.ne.s32.totalorder %s214, %s215
    %p229 = scmp.eq.s32.totalorder %s23, 3
    %p230 = por %p228, %p229
    %p232 = scmp.ne.s32.totalorder %s215, %s231
    %p233 = scmp.eq.s32.totalorder %s23, 0
    %p234 = por %p232, %p233
    %s235 = ssub.s32 %s25, %s32
    %p236 = scmp.eq.s32.totalorder %s235, 0
    %s238 = sadd.s32 %s237, 1
    %s239 = scalar_select %p236, %s237, %s238
    %p242 = pneg %p236
    %p243 = scmp.eq.s32.totalorder %s17, 3
    %p244 = por %p242, %p243
    %p245 = scmp.ne.s32.totalorder %s237, %s240
    %p246 = scmp.eq.s32.totalorder %s17, 0
    %p247 = por %p245, %p246
    %p248 = scmp.ne.s32.totalorder %s237, %s240
    %p249 = scmp.eq.s32.totalorder %s22, 3
    %p250 = por %p248, %p249
    %p251 = scmp.ne.s32.totalorder %s240, %s241
    %p252 = scmp.eq.s32.totalorder %s22, 0
    %p253 = por %p251, %p252
    %p254 = scmp.ne.s32.totalorder %s240, %s241
    %p255 = scmp.eq.s32.totalorder %s23, 3
    %p256 = por %p254, %p255
    %p258 = scmp.ne.s32.totalorder %s241, %s257
    %p259 = scmp.eq.s32.totalorder %s23, 0
    %p260 = por %p258, %p259
    %s261 = ssub.s32 %s25, %s32
    %p262 = scmp.eq.s32.totalorder %s261, 0
    %s264 = sadd.s32 %s263, 1
    %s265 = scalar_select %p262, %s263, %s264
    %p268 = pneg %p262
    %p269 = scmp.eq.s32.totalorder %s17, 3
    %p270 = por %p268, %p269
    %p271 = scmp.ne.s32.totalorder %s263, %s266
    %p272 = scmp.eq.s32.totalorder %s17, 0
    %p273 = por %p271, %p272
    %p274 = scmp.ne.s32.totalorder %s263, %s266
    %p275 = scmp.eq.s32.totalorder %s22, 3
    %p276 = por %p274, %p275
    %p277 = scmp.ne.s32.totalorder %s266, %s267
    %p278 = scmp.eq.s32.totalorder %s22, 0
    %p279 = por %p277, %p278
    %p280 = scmp.ne.s32.totalorder %s266, %s267
    %p281 = scmp.eq.s32.totalorder %s23, 3
    %p282 = por %p280, %p281
    %p284 = scmp.ne.s32.totalorder %s267, %s283
    %p285 = scmp.eq.s32.totalorder %s23, 0
    %p286 = por %p284, %p285
    %s287 = ssub.s32 %s25, %s32
    %p288 = scmp.eq.s32.totalorder %s287, 0
    %s290 = sadd.s32 %s289, 1
    %s291 = scalar_select %p288, %s289, %s290
    %p294 = pneg %p288
    %p295 = scmp.eq.s32.totalorder %s17, 3
    %p296 = por %p294, %p295
    %p297 = scmp.ne.s32.totalorder %s289, %s292
    %p298 = scmp.eq.s32.totalorder %s17, 0
    %p299 = por %p297, %p298
    %p300 = scmp.ne.s32.totalorder %s289, %s292
    %p301 = scmp.eq.s32.totalorder %s22, 3
    %p302 = por %p300, %p301
    %p303 = scmp.ne.s32.totalorder %s292, %s293
    %p304 = scmp.eq.s32.totalorder %s22, 0
    %p305 = por %p303, %p304
    %p306 = scmp.ne.s32.totalorder %s292, %s293
    %p307 = scmp.eq.s32.totalorder %s23, 3
    %p308 = por %p306, %p307
    %p310 = scmp.ne.s32.totalorder %s293, %s309
    %p311 = scmp.eq.s32.totalorder %s23, 0
    %p312 = por %p310, %p311
    %s313 = ssub.s32 %s24, %s36
    %p314 = scmp.eq.s32.totalorder %s313, 0
    %s316 = sadd.s32 %s315, 1
    %s317 = scalar_select %p314, %s315, %s316
    %p320 = pneg %p314
    %p321 = scmp.eq.s32.totalorder %s17, 3
    %p322 = por %p320, %p321
    %p323 = scmp.ne.s32.totalorder %s315, %s318
    %p324 = scmp.eq.s32.totalorder %s17, 0
    %p325 = por %p323, %p324
    %p326 = scmp.ne.s32.totalorder %s315, %s318
    %p327 = scmp.eq.s32.totalorder %s22, 3
    %p328 = por %p326, %p327
    %p329 = scmp.ne.s32.totalorder %s318, %s319
    %p330 = scmp.eq.s32.totalorder %s22, 0
    %p331 = por %p329, %p330
    %p332 = scmp.ne.s32.totalorder %s318, %s319
    %p333 = scmp.eq.s32.totalorder %s23, 3
    %p334 = por %p332, %p333
    %p336 = scmp.ne.s32.totalorder %s319, %s335
    %p337 = scmp.eq.s32.totalorder %s23, 0
    %p338 = por %p336, %p337
    %p339 = scmp.le.s32.totalorder 1, %s17
    %p340 = scmp.lt.s32.totalorder %s17, 5
    %p341 = pnand %p339, %p340
    %p342 = pneg %p341
    // Predicated region
    $region9: #{tpu_custom_call.1} parent=5 // pred_check
      _
    $region10: #{tpu_custom_call.1} parent=5 // pred_check_branch
      %344 = sbr.rel (%p341) target = $region12
    $region11: #{tpu_custom_call.1} parent=5 // pred_region
      %s345 = ssub.s32 %s17, 1
      // Predicated region
      $region13: #{tpu_custom_call.1} parent=11 // pred_check
        %p346 = pneg %p76
      $region14: #{tpu_custom_call.1} parent=11 // pred_check_branch
        %348 = sbr.rel (%p346) target = $region16
      $region15: #{tpu_custom_call.1} parent=11 // pred_region
        _
      $region16: #{tpu_custom_call.1} parent=11 // pred_fallthru
        _
      // Predicated region
      $region17: #{tpu_custom_call.1} parent=11 // pred_check
        %p349 = pneg %p97
      $region18: #{tpu_custom_call.1} parent=11 // pred_check_branch
        %351 = sbr.rel (%p349) target = $region20
      $region19: #{tpu_custom_call.1} parent=11 // pred_region
        _
      $region20: #{tpu_custom_call.1} parent=11 // pred_fallthru
        _
    $region12: #{tpu_custom_call.1} parent=5 // pred_fallthru
      _
    %p352 = scmp.lt.s32.totalorder %s17, 4
    // Predicated region
    $region21: #{tpu_custom_call.1} parent=5 // pred_check
      %p353 = pneg %p352
    $region22: #{tpu_custom_call.1} parent=5 // pred_check_branch
      %355 = sbr.rel (%p353) target = $region24
    $region23: #{tpu_custom_call.1} parent=5 // pred_region
      // Predicated region
      $region25: #{tpu_custom_call.1} parent=23 // pred_check
        %p356 = pneg %p49
      $region26: #{tpu_custom_call.1} parent=23 // pred_check_branch
        %358 = sbr.rel (%p356) target = $region28
      $region27: #{tpu_custom_call.1} parent=23 // pred_region
        %p359 = scmp.lt.s32.totalorder %s24, 1
        %s360 = scalar_select %p359, %s24, 1
        %s361 = smul.addr %s360, 8
        %s362 = smul.addr %s361, 8
        %s363 = scalar_lea.vmem %s0, %s362
      $region28: #{tpu_custom_call.1} parent=23 // pred_fallthru
        _
      // Predicated region
      $region29: #{tpu_custom_call.1} parent=23 // pred_check
        %p364 = pneg %p117
      $region30: #{tpu_custom_call.1} parent=23 // pred_check_branch
        %366 = sbr.rel (%p364) target = $region32
      $region31: #{tpu_custom_call.1} parent=23 // pred_region
        %p367 = scmp.lt.s32.totalorder %s25, 1
        %s368 = scalar_select %p367, %s25, 1
        %s369 = smul.addr %s368, 16
        %s370 = smul.addr %s369, 8
        %s371 = scalar_lea.vmem %s3, %s370
      $region32: #{tpu_custom_call.1} parent=23 // pred_fallthru
        _
      // Predicated region
      $region33: #{tpu_custom_call.1} parent=23 // pred_check
        %p372 = pneg %p143
      $region34: #{tpu_custom_call.1} parent=23 // pred_check_branch
        %374 = sbr.rel (%p372) target = $region36
      $region35: #{tpu_custom_call.1} parent=23 // pred_region
        %p375 = scmp.lt.s32.totalorder %s25, 1
        %s376 = scalar_select %p375, %s25, 1
        %s377 = smul.addr %s376, 16
        %s378 = smul.addr %s377, 8
        %s379 = scalar_lea.vmem %s4, %s378
      $region36: #{tpu_custom_call.1} parent=23 // pred_fallthru
        _
      // Predicated region
      $region37: #{tpu_custom_call.1} parent=23 // pred_check
        %p380 = pneg %p169
      $region38: #{tpu_custom_call.1} parent=23 // pred_check_branch
        %382 = sbr.rel (%p380) target = $region40
      $region39: #{tpu_custom_call.1} parent=23 // pred_region
        %p383 = scmp.lt.s32.totalorder %s25, 1
        %s384 = scalar_select %p383, %s25, 1
        %s385 = smul.addr %s384, 16
        %s386 = smul.addr %s385, 8
        %s387 = scalar_lea.vmem %s5, %s386
      $region40: #{tpu_custom_call.1} parent=23 // pred_fallthru
        _
      // Predicated region
      $region41: #{tpu_custom_call.1} parent=23 // pred_check
        %p388 = pneg %p195
      $region42: #{tpu_custom_call.1} parent=23 // pred_check_branch
        %390 = sbr.rel (%p388) target = $region44
      $region43: #{tpu_custom_call.1} parent=23 // pred_region
        %p391 = scmp.lt.s32.totalorder %s25, 1
        %s392 = scalar_select %p391, %s25, 1
        %s393 = smul.addr %s392, 4
        %s394 = smul.addr %s393, 8
        %s395 = scalar_lea.vmem %s6, %s394
      $region44: #{tpu_custom_call.1} parent=23 // pred_fallthru
        _
      // Predicated region
      $region45: #{tpu_custom_call.1} parent=23 // pred_check
        %p396 = pneg %p221
      $region46: #{tpu_custom_call.1} parent=23 // pred_check_branch
        %398 = sbr.rel (%p396) target = $region48
      $region47: #{tpu_custom_call.1} parent=23 // pred_region
        %p399 = scmp.lt.s32.totalorder %s25, 1
        %s400 = scalar_select %p399, %s25, 1
        %s401 = smul.addr %s400, 4
        %s402 = smul.addr %s401, 8
        %s403 = scalar_lea.vmem %s7, %s402
      $region48: #{tpu_custom_call.1} parent=23 // pred_fallthru
        _
      // Predicated region
      $region49: #{tpu_custom_call.1} parent=23 // pred_check
        %p404 = pneg %p247
      $region50: #{tpu_custom_call.1} parent=23 // pred_check_branch
        %406 = sbr.rel (%p404) target = $region52
      $region51: #{tpu_custom_call.1} parent=23 // pred_region
        %p407 = scmp.lt.s32.totalorder %s25, 1
        %s408 = scalar_select %p407, %s25, 1
        %s409 = smul.addr %s408, 8
        %s410 = smul.addr %s409, 8
        %s411 = scalar_lea.vmem %s8, %s410
      $region52: #{tpu_custom_call.1} parent=23 // pred_fallthru
        _
      // Predicated region
      $region53: #{tpu_custom_call.1} parent=23 // pred_check
        %p412 = pneg %p273
      $region54: #{tpu_custom_call.1} parent=23 // pred_check_branch
        %414 = sbr.rel (%p412) target = $region56
      $region55: #{tpu_custom_call.1} parent=23 // pred_region
        %p415 = scmp.lt.s32.totalorder %s25, 1
        %s416 = scalar_select %p415, %s25, 1
        %s417 = scalar_lea.vmem %s9, %s416
      $region56: #{tpu_custom_call.1} parent=23 // pred_fallthru
        _
      // Predicated region
      $region57: #{tpu_custom_call.1} parent=23 // pred_check
        %p418 = pneg %p299
      $region58: #{tpu_custom_call.1} parent=23 // pred_check_branch
        %420 = sbr.rel (%p418) target = $region60
      $region59: #{tpu_custom_call.1} parent=23 // pred_region
        %p421 = scmp.lt.s32.totalorder %s25, 1
        %s422 = scalar_select %p421, %s25, 1
        %s423 = scalar_lea.vmem %s10, %s422
      $region60: #{tpu_custom_call.1} parent=23 // pred_fallthru
        _
    $region24: #{tpu_custom_call.1} parent=5 // pred_fallthru
      _
    %p424 = scmp.le.s32.totalorder 1, %s17
    %p425 = scmp.lt.s32.totalorder %s17, 5
    %p426 = pnand %p424, %p425
    %p427 = pneg %p426
    // Predicated region
    $region61: #{tpu_custom_call.1} parent=5 // pred_check
      _
    $region62: #{tpu_custom_call.1} parent=5 // pred_check_branch
      %429 = sbr.rel (%p426) target = $region64
    $region63: #{tpu_custom_call.1} parent=5 // pred_region
      %s430 = ssub.s32 %s17, 1
      %p431 = scmp.lt.s32.totalorder %s26, 1
      %s432 = scalar_select %p431, %s26, 1
      %s433 = smul.addr %s432, 8
      %s434 = smul.addr %s433, 8
      %s435 = scalar_lea.vmem %s0, %s434
      %p436 = pneg %p55
      %p437 = pneg %p52
      %p438 = pneg %p76
      %p439 = pneg %p73
      %p440 = pneg %p97
      %p441 = pneg %p94
      %p442 = scmp.lt.s32.totalorder %s27, 1
      %s443 = scalar_select %p442, %s27, 1
      %s444 = smul.addr %s443, 16
      %s445 = smul.addr %s444, 8
      %s446 = scalar_lea.vmem %s3, %s445
      %p447 = pneg %p123
      %p448 = pneg %p120
      %p449 = scmp.lt.s32.totalorder %s27, 1
      %s450 = scalar_select %p449, %s27, 1
      %s451 = smul.addr %s450, 16
      %s452 = smul.addr %s451, 8
      %s453 = scalar_lea.vmem %s4, %s452
      %p454 = pneg %p149
      %p455 = pneg %p146
      %p456 = scmp.lt.s32.totalorder %s27, 1
      %s457 = scalar_select %p456, %s27, 1
      %s458 = smul.addr %s457, 16
      %s459 = smul.addr %s458, 8
      %s460 = scalar_lea.vmem %s5, %s459
      %p461 = pneg %p175
      %p462 = pneg %p172
      %p463 = scmp.lt.s32.totalorder %s27, 1
      %s464 = scalar_select %p463, %s27, 1
      %s465 = smul.addr %s464, 4
      %s466 = smul.addr %s465, 8
      %s467 = scalar_lea.vmem %s6, %s466
      %p468 = pneg %p201
      %p469 = pneg %p198
      %p470 = scmp.lt.s32.totalorder %s27, 1
      %s471 = scalar_select %p470, %s27, 1
      %s472 = smul.addr %s471, 4
      %s473 = smul.addr %s472, 8
      %s474 = scalar_lea.vmem %s7, %s473
      %p475 = pneg %p227
      %p476 = pneg %p224
      %p477 = scmp.lt.s32.totalorder %s27, 1
      %s478 = scalar_select %p477, %s27, 1
      %s479 = smul.addr %s478, 8
      %s480 = smul.addr %s479, 8
      %s481 = scalar_lea.vmem %s8, %s480
      %p482 = pneg %p253
      %p483 = pneg %p250
      %p484 = scmp.lt.s32.totalorder %s27, 1
      %s485 = scalar_select %p484, %s27, 1
      %s486 = scalar_lea.vmem %s9, %s485
      %p487 = pneg %p279
      %p488 = pneg %p276
      %p489 = scmp.lt.s32.totalorder %s27, 1
      %s490 = scalar_select %p489, %s27, 1
      %s491 = scalar_lea.vmem %s10, %s490
      %p492 = pneg %p305
      %p493 = pneg %p302
      %p494 = pneg %p331
      %p495 = pneg %p328
      %p496 = scmp.lt.s32.totalorder %s26, 1
      %s497 = scalar_select %p496, %s26, 1
      %s498 = smul.addr %s497, 8
      %s499 = smul.addr %s498, 8
      %s500 = scalar_lea.vmem %s11, %s499
      %p501 = scmp.lt.s32.totalorder %s26, 1
      %s502 = scalar_select %p501, %s26, 1
      %s503 = smul.addr %s502, 8
      %s504 = smul.addr %s503, 8
      %s505 = scalar_lea.vmem %s0, %s504
      %p506 = scmp.lt.s32.totalorder %s27, 1
      %s507 = scalar_select %p506, %s27, 1
      %s508 = smul.addr %s507, 16
      %s509 = smul.addr %s508, 8
      %s510 = scalar_lea.vmem %s3, %s509
      %p511 = scmp.lt.s32.totalorder %s27, 1
      %s512 = scalar_select %p511, %s27, 1
      %s513 = smul.addr %s512, 16
      %s514 = smul.addr %s513, 8
      %s515 = scalar_lea.vmem %s4, %s514
      %p516 = scmp.lt.s32.totalorder %s27, 1
      %s517 = scalar_select %p516, %s27, 1
      %s518 = smul.addr %s517, 16
      %s519 = smul.addr %s518, 8
      %s520 = scalar_lea.vmem %s5, %s519
      %p521 = scmp.lt.s32.totalorder %s27, 1
      %s522 = scalar_select %p521, %s27, 1
      %s523 = smul.addr %s522, 4
      %s524 = smul.addr %s523, 8
      %s525 = scalar_lea.vmem %s6, %s524
      %p526 = scmp.lt.s32.totalorder %s27, 1
      %s527 = scalar_select %p526, %s27, 1
      %s528 = smul.addr %s527, 4
      %s529 = smul.addr %s528, 8
      %s530 = scalar_lea.vmem %s7, %s529
      %p531 = scmp.lt.s32.totalorder %s27, 1
      %s532 = scalar_select %p531, %s27, 1
      %s533 = smul.addr %s532, 8
      %s534 = smul.addr %s533, 8
      %s535 = scalar_lea.vmem %s8, %s534
      %p536 = scmp.lt.s32.totalorder %s27, 1
      %s537 = scalar_select %p536, %s27, 1
      %s538 = scalar_lea.vmem %s9, %s537
      %p539 = scmp.lt.s32.totalorder %s27, 1
      %s540 = scalar_select %p539, %s27, 1
      %s541 = scalar_lea.vmem %s10, %s540
      %p542 = scmp.lt.s32.totalorder %s26, 1
      %s543 = scalar_select %p542, %s26, 1
      %s544 = smul.addr %s543, 8
      %s545 = smul.addr %s544, 8
      %s546 = scalar_lea.vmem %s11, %s545
      %p547 = scmp.eq.s32.totalorder %s27, 0
      // Predicated region
      $region65: #{tpu_custom_call.1} parent=63 // pred_check
        %p548 = pneg %p547
      $region66: #{tpu_custom_call.1} parent=63 // pred_check_branch
        %550 = sbr.rel (%p548) target = $region68
      $region67: #{tpu_custom_call.1} parent=63 // pred_region
        %v551 = vld [vmem:[%s505] sm:$0xff]
        %v552 = vld [vmem:[%s505 + $0x8] sm:$0xff]
        %v553 = vld [vmem:[%s505 + $0x10] sm:$0xff]
        %v554 = vld [vmem:[%s505 + $0x18] sm:$0xff]
        %v555 = vld [vmem:[%s505 + $0x20] sm:$0xff]
        %v556 = vld [vmem:[%s505 + $0x28] sm:$0xff]
        %v557 = vld [vmem:[%s505 + $0x30] sm:$0xff]
        %v558 = vld [vmem:[%s505 + $0x38] sm:$0xff]
        %v559 = vld [vmem:[%s1] sm:$0x7]
        %v560 = vld [vmem:[%s2] sm:$0xff]
        %v561 = vld [vmem:[%s2 + $0x8] sm:$0xff]
        %v562 = vld [vmem:[%s2 + $0x10] sm:$0xff]
        %v563 = vld [vmem:[%s2 + $0x18] sm:$0xff]
        %v564 = vld [vmem:[%s2 + $0x20] sm:$0xff]
        %v565 = vld [vmem:[%s2 + $0x28] sm:$0xff]
        %v566 = vld [vmem:[%s2 + $0x30] sm:$0xff]
        %v567 = vld [vmem:[%s2 + $0x38] sm:$0xff]
        %vm568 = vcmask 23552
        %v570 = vsel %vm568, %v551, 0
        %v573 = vsel %vm568, %v552, 0
        %v576 = vsel %vm568, %v553, 0
        %v579 = vsel %vm568, %v554, 0
        %v582 = vsel %vm568, %v555, 0
        %v585 = vsel %vm568, %v556, 0
        %v588 = vsel %vm568, %v557, 0
        %v591 = vsel %vm568, %v558, 0
        %vm593 = vcmask 1042432
        %v595 = vsel %vm593, %v559, 0
        %597 = vmatprep.subr.mxu0 0.0
        %598 = vmatpush1.msra.mxu0 %v595
        %599 = vmatprep.subr.mxu0 0.0
        %600 = vmatpush1.msra.mxu0 0.0
        %601 = vmatprep.subr.mxu0 0.0
        %602 = vmatpush1.msra.mxu0 0.0
        %603 = vmatprep.subr.mxu0 0.0
        %604 = vmatpush1.msra.mxu0 0.0
        %605 = vmatprep.subr.mxu0 0.0
        %606 = vmatpush1.msra.mxu0 0.0
        %607 = vmatprep.subr.mxu0 0.0
        %608 = vmatpush1.msra.mxu0 0.0
        %609 = vmatprep.subr.mxu0 0.0
        %610 = vmatpush1.msra.mxu0 0.0
        %611 = vmatprep.subr.mxu0 0.0
        %612 = vmatpush1.msra.mxu0 0.0
        %613 = vmatprep.subr.mxu0 0.0
        %614 = vmatpush1.msra.mxu0 0.0
        %615 = vmatprep.subr.mxu0 0.0
        %616 = vmatpush1.msra.mxu0 0.0
        %617 = vmatprep.subr.mxu0 0.0
        %618 = vmatpush1.msra.mxu0 0.0
        %619 = vmatprep.subr.mxu0 0.0
        %620 = vmatpush1.msra.mxu0 0.0
        %621 = vmatprep.subr.mxu0 0.0
        %622 = vmatpush1.msra.mxu0 0.0
        %623 = vmatprep.subr.mxu0 0.0
        %624 = vmatpush1.msra.mxu0 0.0
        %625 = vmatprep.subr.mxu0 0.0
        %626 = vmatpush1.msra.mxu0 0.0
        %627 = vmatprep.subr.mxu0 0.0
        %628 = vmatpush1.msra.mxu0 0.0
        %629 = vmatprep.subr.mxu0 0.0
        %630 = vmatpush1.msra.mxu0 0.0
        %631 = vmatprep.subr.mxu0 0.0
        %632 = vmatpush1.msra.mxu0 0.0
        %633 = vmatprep.subr.mxu0 0.0
        %634 = vmatpush1.msra.mxu0 0.0
        %635 = vmatprep.subr.mxu0 0.0
        %636 = vmatpush1.msra.mxu0 0.0
        %637 = vmatprep.subr.mxu0 0.0
        %638 = vmatpush1.msra.mxu0 0.0
        %639 = vmatprep.subr.mxu0 0.0
        %640 = vmatpush1.msra.mxu0 0.0
        %641 = vmatprep.subr.mxu0 0.0
        %642 = vmatpush1.msra.mxu0 0.0
        %643 = vmatprep.subr.mxu0 0.0
        %644 = vmatpush1.msra.mxu0 0.0
        %645 = vmatprep.subr.mxu0 0.0
        %646 = vmatpush1.msra.mxu0 0.0
        %647 = vmatprep.subr.mxu0 0.0
        %648 = vmatpush1.msra.mxu0 0.0
        %649 = vmatprep.subr.mxu0 0.0
        %650 = vmatpush1.msra.mxu0 0.0
        %651 = vmatprep.subr.mxu0 0.0
        %652 = vmatpush1.msra.mxu0 0.0
        %653 = vmatprep.subr.mxu0 0.0
        %654 = vmatpush1.msra.mxu0 0.0
        %655 = vmatprep.subr.mxu0 0.0
        %656 = vmatpush1.msra.mxu0 0.0
        %657 = vmatprep.subr.mxu0 0.0
        %658 = vmatpush1.msra.mxu0 0.0
        %659 = vmatprep.subr.mxu0 0.0
        %660 = vmatpush1.msra.mxu0 0.0
        %661 = vmatprep.mubr.f32.mxu0 0.0
        %662 = vmatmul.mubr.f32.gmra.mrb[0].mxu0 %v570
        %v663 = vpop.f32.mrb[0].mxu0
        %v664 = vadd.f32 %v560, %v663
        %v665 = vpop.f32.mrb[0].mxu0
        %666 = vmatprep.mubr.f32.mxu0 0.0
        %667 = vmatmul.mubr.f32.gmra.mrb[0].mxu0 %v573
        %v668 = vpop.f32.mrb[0].mxu0
        %v669 = vadd.f32 %v561, %v668
        %v670 = vpop.f32.mrb[0].mxu0
        %671 = vmatprep.mubr.f32.mxu0 0.0
        %672 = vmatmul.mubr.f32.gmra.mrb[0].mxu0 %v576
        %v673 = vpop.f32.mrb[0].mxu0
        %v674 = vadd.f32 %v562, %v673
        %v675 = vpop.f32.mrb[0].mxu0
        %676 = vmatprep.mubr.f32.mxu0 0.0
        %677 = vmatmul.mubr.f32.gmra.mrb[0].mxu0 %v579
        %v678 = vpop.f32.mrb[0].mxu0
        %v679 = vadd.f32 %v563, %v678
        %v680 = vpop.f32.mrb[0].mxu0
        %681 = vmatprep.mubr.f32.mxu0 0.0
        %682 = vmatmul.mubr.f32.gmra.mrb[0].mxu0 %v582
        %v683 = vpop.f32.mrb[0].mxu0
        %v684 = vadd.f32 %v564, %v683
        %v685 = vpop.f32.mrb[0].mxu0
        %686 = vmatprep.mubr.f32.mxu0 0.0
        %687 = vmatmul.mubr.f32.gmra.mrb[0].mxu0 %v585
        %v688 = vpop.f32.mrb[0].mxu0
        %v689 = vadd.f32 %v565, %v688
        %v690 = vpop.f32.mrb[0].mxu0
        %691 = vmatprep.mubr.f32.mxu0 0.0
        %692 = vmatmul.mubr.f32.gmra.mrb[0].mxu0 %v588
        %v693 = vpop.f32.mrb[0].mxu0
        %v694 = vadd.f32 %v566, %v693
        %v695 = vpop.f32.mrb[0].mxu0
        %696 = vmatprep.mubr.f32.mxu0 0.0
        %697 = vmatmul.mubr.f32.gmra.mrb[0].mxu0 %v591
        %v698 = vpop.f32.mrb[0].mxu0
        %v699 = vadd.f32 %v567, %v698
        %v700 = vpop.f32.mrb[0].mxu0
        %701 = vdwg.mxu0
        %vm702 = vcmask 261120
        %703 = vst.msk [vmem:[#allocation2] sm:$0xff] %vm702, %v664
        %704 = vst.msk [vmem:[#allocation2 + $0x8] sm:$0xff] %vm702, %v669
        %705 = vst.msk [vmem:[#allocation2 + $0x10] sm:$0xff] %vm702, %v674
        %706 = vst.msk [vmem:[#allocation2 + $0x18] sm:$0xff] %vm702, %v679
        %707 = vst.msk [vmem:[#allocation2 + $0x20] sm:$0xff] %vm702, %v684
        %708 = vst.msk [vmem:[#allocation2 + $0x28] sm:$0xff] %vm702, %v689
        %709 = vst.msk [vmem:[#allocation2 + $0x30] sm:$0xff] %vm702, %v694
        %710 = vst.msk [vmem:[#allocation2 + $0x38] sm:$0xff] %vm702, %v699
      $region68: #{tpu_custom_call.1} parent=63 // pred_fallthru
        _
      %v711 = vld [vmem:[#allocation2] sm:$0xff]
      %v712 = vld [vmem:[#allocation2 + $0x8] sm:$0xff]
      %v713 = vld [vmem:[#allocation2 + $0x10] sm:$0xff]
      %v714 = vld [vmem:[#allocation2 + $0x18] sm:$0xff]
      %v715 = vld [vmem:[#allocation2 + $0x20] sm:$0xff]
      %v716 = vld [vmem:[#allocation2 + $0x28] sm:$0xff]
      %v717 = vld [vmem:[#allocation2 + $0x30] sm:$0xff]
      %v718 = vld [vmem:[#allocation2 + $0x38] sm:$0xff]
      %v719 = vld [vmem:[%s510] sm:$0xff]
      %v720 = vld [vmem:[%s510 + $0x8] sm:$0xff]
      %v721 = vld [vmem:[%s510 + $0x10] sm:$0xff]
      %v722 = vld [vmem:[%s510 + $0x18] sm:$0xff]
      %vm723 = vcmask 261120
      %v725 = vsel %vm723, %v711, 0
      %v728 = vsel %vm723, %v712, 0
      %v731 = vsel %vm723, %v713, 0
      %v734 = vsel %vm723, %v714, 0
      %v737 = vsel %vm723, %v715, 0
      %v740 = vsel %vm723, %v716, 0
      %v743 = vsel %vm723, %v717, 0
      %v746 = vsel %vm723, %v718, 0
      %748 = vmatprep.subr.mxu0 0.0
      %749 = vmatpush1.msra.mxu0 %v719
      %750 = vmatprep.subr.mxu0 0.0
      %751 = vmatpush1.msra.mxu0 %v720
      %752 = vmatprep.subr.mxu0 0.0
      %753 = vmatpush1.msra.mxu0 %v721
      %754 = vmatprep.subr.mxu0 0.0
      %755 = vmatpush1.msra.mxu0 %v722
      %756 = vmatprep.subr.mxu0 0.0
      %757 = vmatpush1.msra.mxu0 0.0
      %758 = vmatprep.subr.mxu0 0.0
      %759 = vmatpush1.msra.mxu0 0.0
      %760 = vmatprep.subr.mxu0 0.0
      %761 = vmatpush1.msra.mxu0 0.0
      %762 = vmatprep.subr.mxu0 0.0
      %763 = vmatpush1.msra.mxu0 0.0
      %764 = vmatprep.subr.mxu0 0.0
      %765 = vmatpush1.msra.mxu0 0.0
      %766 = vmatprep.subr.mxu0 0.0
      %767 = vmatpush1.msra.mxu0 0.0
      %768 = vmatprep.subr.mxu0 0.0
      %769 = vmatpush1.msra.mxu0 0.0
      %770 = vmatprep.subr.mxu0 0.0
      %771 = vmatpush1.msra.mxu0 0.0
      %772 = vmatprep.subr.mxu0 0.0
      %773 = vmatpush1.msra.mxu0 0.0
      %774 = vmatprep.subr.mxu0 0.0
      %775 = vmatpush1.msra.mxu0 0.0
      %776 = vmatprep.subr.mxu0 0.0
      %777 = vmatpush1.msra.mxu0 0.0
      %778 = vmatprep.subr.mxu0 0.0
      %779 = vmatpush1.msra.mxu0 0.0
      %780 = vmatprep.subr.mxu0 0.0
      %781 = vmatpush1.msra.mxu0 0.0
      %782 = vmatprep.subr.mxu0 0.0
      %783 = vmatpush1.msra.mxu0 0.0
      %784 = vmatprep.subr.mxu0 0.0
      %785 = vmatpush1.msra.mxu0 0.0
      %786 = vmatprep.subr.mxu0 0.0
      %787 = vmatpush1.msra.mxu0 0.0
      %788 = vmatprep.subr.mxu0 0.0
      %789 = vmatpush1.msra.mxu0 0.0
      %790 = vmatprep.subr.mxu0 0.0
      %791 = vmatpush1.msra.mxu0 0.0
      %792 = vmatprep.subr.mxu0 0.0
      %793 = vmatpush1.msra.mxu0 0.0
      %794 = vmatprep.subr.mxu0 0.0
      %795 = vmatpush1.msra.mxu0 0.0
      %796 = vmatprep.subr.mxu0 0.0
      %797 = vmatpush1.msra.mxu0 0.0
      %798 = vmatprep.subr.mxu0 0.0
      %799 = vmatpush1.msra.mxu0 0.0
      %800 = vmatprep.subr.mxu0 0.0
      %801 = vmatpush1.msra.mxu0 0.0
      %802 = vmatprep.subr.mxu0 0.0
      %803 = vmatpush1.msra.mxu0 0.0
      %804 = vmatprep.subr.mxu0 0.0
      %805 = vmatpush1.msra.mxu0 0.0
      %806 = vmatprep.subr.mxu0 0.0
      %807 = vmatpush1.msra.mxu0 0.0
      %808 = vmatprep.subr.mxu0 0.0
      %809 = vmatpush1.msra.mxu0 0.0
      %810 = vmatprep.subr.mxu0 0.0
      %811 = vmatpush1.msra.mxu0 0.0
      %812 = vmatprep.mubr.f32.mxu0 0.0
      %813 = vmatmul.mubr.f32.gmra.mrb[0].mxu0 %v725
      %v814 = vpop.f32.mrb[0].mxu0
      %v815 = vadd.f32 0.0, %v814
      %v816 = vpop.f32.mrb[0].mxu0
      %817 = vmatprep.mubr.f32.mxu0 0.0
      %818 = vmatmul.mubr.f32.gmra.mrb[0].mxu0 %v728
      %v819 = vpop.f32.mrb[0].mxu0
      %v820 = vadd.f32 0.0, %v819
      %v821 = vpop.f32.mrb[0].mxu0
      %822 = vmatprep.mubr.f32.mxu0 0.0
      %823 = vmatmul.mubr.f32.gmra.mrb[0].mxu0 %v731
      %v824 = vpop.f32.mrb[0].mxu0
      %v825 = vadd.f32 0.0, %v824
      %v826 = vpop.f32.mrb[0].mxu0
      %827 = vmatprep.mubr.f32.mxu0 0.0
      %828 = vmatmul.mubr.f32.gmra.mrb[0].mxu0 %v734
      %v829 = vpop.f32.mrb[0].mxu0
      %v830 = vadd.f32 0.0, %v829
      %v831 = vpop.f32.mrb[0].mxu0
      %832 = vmatprep.mubr.f32.mxu0 0.0
      %833 = vmatmul.mubr.f32.gmra.mrb[0].mxu0 %v737
      %v834 = vpop.f32.mrb[0].mxu0
      %v835 = vadd.f32 0.0, %v834
      %v836 = vpop.f32.mrb[0].mxu0
      %837 = vmatprep.mubr.f32.mxu0 0.0
      %838 = vmatmul.mubr.f32.gmra.mrb[0].mxu0 %v740
      %v839 = vpop.f32.mrb[0].mxu0
      %v840 = vadd.f32 0.0, %v839
      %v841 = vpop.f32.mrb[0].mxu0
      %842 = vmatprep.mubr.f32.mxu0 0.0
      %843 = vmatmul.mubr.f32.gmra.mrb[0].mxu0 %v743
      %v844 = vpop.f32.mrb[0].mxu0
      %v845 = vadd.f32 0.0, %v844
      %v846 = vpop.f32.mrb[0].mxu0
      %847 = vmatprep.mubr.f32.mxu0 0.0
      %848 = vmatmul.mubr.f32.gmra.mrb[0].mxu0 %v746
      %v849 = vpop.f32.mrb[0].mxu0
      %v850 = vadd.f32 0.0, %v849
      %v851 = vpop.f32.mrb[0].mxu0
      %852 = vdwg.mxu0
      %v853 = vmul.f32 %v815, 0.35355338
      %v854 = vmul.f32 %v820, 0.35355338
      %v855 = vmul.f32 %v825, 0.35355338
      %v856 = vmul.f32 %v830, 0.35355338
      %v857 = vmul.f32 %v835, 0.35355338
      %v858 = vmul.f32 %v840, 0.35355338
      %v859 = vmul.f32 %v845, 0.35355338
      %v860 = vmul.f32 %v850, 0.35355338
      %v861 = vld [vmem:[%s515] sm:$0xff]
      %v862 = vld [vmem:[%s515 + $0x8] sm:$0xff]
      %v863 = vld [vmem:[%s515 + $0x10] sm:$0xff]
      %v864 = vld [vmem:[%s515 + $0x18] sm:$0xff]
      %865 = vmatprep.subr.mxu0 0.0
      %866 = vmatpush1.msra.mxu0 %v861
      %867 = vmatprep.subr.mxu0 0.0
      %868 = vmatpush1.msra.mxu0 %v862
      %869 = vmatprep.subr.mxu0 0.0
      %870 = vmatpush1.msra.mxu0 %v863
      %871 = vmatprep.subr.mxu0 0.0
      %872 = vmatpush1.msra.mxu0 %v864
      %873 = vmatprep.subr.mxu0 0.0
      %874 = vmatpush1.msra.mxu0 0.0
      %875 = vmatprep.subr.mxu0 0.0
      %876 = vmatpush1.msra.mxu0 0.0
      %877 = vmatprep.subr.mxu0 0.0
      %878 = vmatpush1.msra.mxu0 0.0
      %879 = vmatprep.subr.mxu0 0.0
      %880 = vmatpush1.msra.mxu0 0.0
      %881 = vmatprep.subr.mxu0 0.0
      %882 = vmatpush1.msra.mxu0 0.0
      %883 = vmatprep.subr.mxu0 0.0
      %884 = vmatpush1.msra.mxu0 0.0
      %885 = vmatprep.subr.mxu0 0.0
      %886 = vmatpush1.msra.mxu0 0.0
      %887 = vmatprep.subr.mxu0 0.0
      %888 = vmatpush1.msra.mxu0 0.0
      %889 = vmatprep.subr.mxu0 0.0
      %890 = vmatpush1.msra.mxu0 0.0
      %891 = vmatprep.subr.mxu0 0.0
      %892 = vmatpush1.msra.mxu0 0.0
      %893 = vmatprep.subr.mxu0 0.0
      %894 = vmatpush1.msra.mxu0 0.0
      %895 = vmatprep.subr.mxu0 0.0
      %896 = vmatpush1.msra.mxu0 0.0
      %897 = vmatprep.subr.mxu0 0.0
      %898 = vmatpush1.msra.mxu0 0.0
      %899 = vmatprep.subr.mxu0 0.0
      %900 = vmatpush1.msra.mxu0 0.0
      %901 = vmatprep.subr.mxu0 0.0
      %902 = vmatpush1.msra.mxu0 0.0
      %903 = vmatprep.subr.mxu0 0.0
      %904 = vmatpush1.msra.mxu0 0.0
      %905 = vmatprep.subr.mxu0 0.0
      %906 = vmatpush1.msra.mxu0 0.0
      %907 = vmatprep.subr.mxu0 0.0
      %908 = vmatpush1.msra.mxu0 0.0
      %909 = vmatprep.subr.mxu0 0.0
      %910 = vmatpush1.msra.mxu0 0.0
      %911 = vmatprep.subr.mxu0 0.0
      %912 = vmatpush1.msra.mxu0 0.0
      %913 = vmatprep.subr.mxu0 0.0
      %914 = vmatpush1.msra.mxu0 0.0
      %915 = vmatprep.subr.mxu0 0.0
      %916 = vmatpush1.msra.mxu0 0.0
      %917 = vmatprep.subr.mxu0 0.0
      %918 = vmatpush1.msra.mxu0 0.0
      %919 = vmatprep.subr.mxu0 0.0
      %920 = vmatpush1.msra.mxu0 0.0
      %921 = vmatprep.subr.mxu0 0.0
      %922 = vmatpush1.msra.mxu0 0.0
      %923 = vmatprep.subr.mxu0 0.0
      %924 = vmatpush1.msra.mxu0 0.0
      %925 = vmatprep.subr.mxu0 0.0
      %926 = vmatpush1.msra.mxu0 0.0
      %927 = vmatprep.subr.mxu0 0.0
      %928 = vmatpush1.msra.mxu0 0.0
      %929 = vmatprep.mubr.f32.mxu0 0.0
      %930 = vmatmul.mubr.f32.gmra.mrb[0].mxu0 %v725
      %v931 = vpop.f32.mrb[0].mxu0
      %v932 = vadd.f32 0.0, %v931
      %v933 = vpop.f32.mrb[0].mxu0
      %934 = vmatprep.mubr.f32.mxu0 0.0
      %935 = vmatmul.mubr.f32.gmra.mrb[0].mxu0 %v728
      %v936 = vpop.f32.mrb[0].mxu0
      %v937 = vadd.f32 0.0, %v936
      %v938 = vpop.f32.mrb[0].mxu0
      %939 = vmatprep.mubr.f32.mxu0 0.0
      %940 = vmatmul.mubr.f32.gmra.mrb[0].mxu0 %v731
      %v941 = vpop.f32.mrb[0].mxu0
      %v942 = vadd.f32 0.0, %v941
      %v943 = vpop.f32.mrb[0].mxu0
      %944 = vmatprep.mubr.f32.mxu0 0.0
      %945 = vmatmul.mubr.f32.gmra.mrb[0].mxu0 %v734
      %v946 = vpop.f32.mrb[0].mxu0
      %v947 = vadd.f32 0.0, %v946
      %v948 = vpop.f32.mrb[0].mxu0
      %949 = vmatprep.mubr.f32.mxu0 0.0
      %950 = vmatmul.mubr.f32.gmra.mrb[0].mxu0 %v737
      %v951 = vpop.f32.mrb[0].mxu0
      %v952 = vadd.f32 0.0, %v951
      %v953 = vpop.f32.mrb[0].mxu0
      %954 = vmatprep.mubr.f32.mxu0 0.0
      %955 = vmatmul.mubr.f32.gmra.mrb[0].mxu0 %v740
      %v956 = vpop.f32.mrb[0].mxu0
      %v957 = vadd.f32 0.0, %v956
      %v958 = vpop.f32.mrb[0].mxu0
      %959 = vmatprep.mubr.f32.mxu0 0.0
      %960 = vmatmul.mubr.f32.gmra.mrb[0].mxu0 %v743
      %v961 = vpop.f32.mrb[0].mxu0
      %v962 = vadd.f32 0.0, %v961
      %v963 = vpop.f32.mrb[0].mxu0
      %964 = vmatprep.mubr.f32.mxu0 0.0
      %965 = vmatmul.mubr.f32.gmra.mrb[0].mxu0 %v746
      %v966 = vpop.f32.mrb[0].mxu0
      %v967 = vadd.f32 0.0, %v966
      %v968 = vpop.f32.mrb[0].mxu0
      %969 = vdwg.mxu0
      %v970 = vld [vmem:[%s520] sm:$0xff]
      %v971 = vld [vmem:[%s520 + $0x8] sm:$0xff]
      %v972 = vld [vmem:[%s520 + $0x10] sm:$0xff]
      %v973 = vld [vmem:[%s520 + $0x18] sm:$0xff]
      %974 = vmatprep.subr.mxu0 0.0
      %975 = vmatpush1.msra.mxu0 %v970
      %976 = vmatprep.subr.mxu0 0.0
      %977 = vmatpush1.msra.mxu0 %v971
      %978 = vmatprep.subr.mxu0 0.0
      %979 = vmatpush1.msra.mxu0 %v972
      %980 = vmatprep.subr.mxu0 0.0
      %981 = vmatpush1.msra.mxu0 %v973
      %982 = vmatprep.subr.mxu0 0.0
      %983 = vmatpush1.msra.mxu0 0.0
      %984 = vmatprep.subr.mxu0 0.0
      %985 = vmatpush1.msra.mxu0 0.0
      %986 = vmatprep.subr.mxu0 0.0
      %987 = vmatpush1.msra.mxu0 0.0
      %988 = vmatprep.subr.mxu0 0.0
      %989 = vmatpush1.msra.mxu0 0.0
      %990 = vmatprep.subr.mxu0 0.0
      %991 = vmatpush1.msra.mxu0 0.0
      %992 = vmatprep.subr.mxu0 0.0
      %993 = vmatpush1.msra.mxu0 0.0
      %994 = vmatprep.subr.mxu0 0.0
      %995 = vmatpush1.msra.mxu0 0.0
      %996 = vmatprep.subr.mxu0 0.0
      %997 = vmatpush1.msra.mxu0 0.0
      %998 = vmatprep.subr.mxu0 0.0
      %999 = vmatpush1.msra.mxu0 0.0
      %1000 = vmatprep.subr.mxu0 0.0
      %1001 = vmatpush1.msra.mxu0 0.0
      %1002 = vmatprep.subr.mxu0 0.0
      %1003 = vmatpush1.msra.mxu0 0.0
      %1004 = vmatprep.subr.mxu0 0.0
      %1005 = vmatpush1.msra.mxu0 0.0
      %1006 = vmatprep.subr.mxu0 0.0
      %1007 = vmatpush1.msra.mxu0 0.0
      %1008 = vmatprep.subr.mxu0 0.0
      %1009 = vmatpush1.msra.mxu0 0.0
      %1010 = vmatprep.subr.mxu0 0.0
      %1011 = vmatpush1.msra.mxu0 0.0
      %1012 = vmatprep.subr.mxu0 0.0
      %1013 = vmatpush1.msra.mxu0 0.0
      %1014 = vmatprep.subr.mxu0 0.0
      %1015 = vmatpush1.msra.mxu0 0.0
      %1016 = vmatprep.subr.mxu0 0.0
      %1017 = vmatpush1.msra.mxu0 0.0
      %1018 = vmatprep.subr.mxu0 0.0
      %1019 = vmatpush1.msra.mxu0 0.0
      %1020 = vmatprep.subr.mxu0 0.0
      %1021 = vmatpush1.msra.mxu0 0.0
      %1022 = vmatprep.subr.mxu0 0.0
      %1023 = vmatpush1.msra.mxu0 0.0
      %1024 = vmatprep.subr.mxu0 0.0
      %1025 = vmatpush1.msra.mxu0 0.0
      %1026 = vmatprep.subr.mxu0 0.0
      %1027 = vmatpush1.msra.mxu0 0.0
      %1028 = vmatprep.subr.mxu0 0.0
      %1029 = vmatpush1.msra.mxu0 0.0
      %1030 = vmatprep.subr.mxu0 0.0
      %1031 = vmatpush1.msra.mxu0 0.0
      %1032 = vmatprep.subr.mxu0 0.0
      %1033 = vmatpush1.msra.mxu0 0.0
      %1034 = vmatprep.subr.mxu0 0.0
      %1035 = vmatpush1.msra.mxu0 0.0
      %1036 = vmatprep.subr.mxu0 0.0
      %1037 = vmatpush1.msra.mxu0 0.0
      %1038 = vmatprep.mubr.f32.mxu0 0.0
      %1039 = vmatmul.mubr.f32.gmra.mrb[0].mxu0 %v725
      %v1040 = vpop.f32.mrb[0].mxu0
      %v1041 = vadd.f32 0.0, %v1040
      %v1042 = vpop.f32.mrb[0].mxu0
      %1043 = vmatprep.mubr.f32.mxu0 0.0
      %1044 = vmatmul.mubr.f32.gmra.mrb[0].mxu0 %v728
      %v1045 = vpop.f32.mrb[0].mxu0
      %v1046 = vadd.f32 0.0, %v1045
      %v1047 = vpop.f32.mrb[0].mxu0
      %1048 = vmatprep.mubr.f32.mxu0 0.0
      %1049 = vmatmul.mubr.f32.gmra.mrb[0].mxu0 %v731
      %v1050 = vpop.f32.mrb[0].mxu0
      %v1051 = vadd.f32 0.0, %v1050
      %v1052 = vpop.f32.mrb[0].mxu0
      %1053 = vmatprep.mubr.f32.mxu0 0.0
      %1054 = vmatmul.mubr.f32.gmra.mrb[0].mxu0 %v734
      %v1055 = vpop.f32.mrb[0].mxu0
      %v1056 = vadd.f32 0.0, %v1055
      %v1057 = vpop.f32.mrb[0].mxu0
      %1058 = vmatprep.mubr.f32.mxu0 0.0
      %1059 = vmatmul.mubr.f32.gmra.mrb[0].mxu0 %v737
      %v1060 = vpop.f32.mrb[0].mxu0
      %v1061 = vadd.f32 0.0, %v1060
      %v1062 = vpop.f32.mrb[0].mxu0
      %1063 = vmatprep.mubr.f32.mxu0 0.0
      %1064 = vmatmul.mubr.f32.gmra.mrb[0].mxu0 %v740
      %v1065 = vpop.f32.mrb[0].mxu0
      %v1066 = vadd.f32 0.0, %v1065
      %v1067 = vpop.f32.mrb[0].mxu0
      %1068 = vmatprep.mubr.f32.mxu0 0.0
      %1069 = vmatmul.mubr.f32.gmra.mrb[0].mxu0 %v743
      %v1070 = vpop.f32.mrb[0].mxu0
      %v1071 = vadd.f32 0.0, %v1070
      %v1072 = vpop.f32.mrb[0].mxu0
      %1073 = vmatprep.mubr.f32.mxu0 0.0
      %1074 = vmatmul.mubr.f32.gmra.mrb[0].mxu0 %v746
      %v1075 = vpop.f32.mrb[0].mxu0
      %v1076 = vadd.f32 0.0, %v1075
      %v1077 = vpop.f32.mrb[0].mxu0
      %1078 = vdwg.mxu0
      %vm1079 = vcmask 64512
      %v1081 = vsel %vm1079, %v853, 0
      %v1084 = vsel %vm1079, %v854, 0
      %v1087 = vsel %vm1079, %v855, 0
      %v1090 = vsel %vm1079, %v856, 0
      %v1093 = vsel %vm1079, %v857, 0
      %v1096 = vsel %vm1079, %v858, 0
      %v1099 = vsel %vm1079, %v859, 0
      %v1102 = vsel %vm1079, %v860, 0
      %v1105 = vsel %vm1079, %v932, 0
      %v1108 = vsel %vm1079, %v937, 0
      %v1111 = vsel %vm1079, %v942, 0
      %v1114 = vsel %vm1079, %v947, 0
      %v1117 = vsel %vm1079, %v952, 0
      %v1120 = vsel %vm1079, %v957, 0
      %v1123 = vsel %vm1079, %v962, 0
      %v1126 = vsel %vm1079, %v967, 0
      %1128 = vmatprep.subr.mxu0 0.0
      %1129 = vmatpush1.xpose.msra.mxu0 %v1105
      %1130 = vmatprep.subr.mxu0 0.0
      %1131 = vmatpush1.xpose.msra.mxu0 %v1108
      %1132 = vmatprep.subr.mxu0 0.0
      %1133 = vmatpush1.xpose.msra.mxu0 %v1111
      %1134 = vmatprep.subr.mxu0 0.0
      %1135 = vmatpush1.xpose.msra.mxu0 %v1114
      %1136 = vmatprep.subr.mxu0 0.0
      %1137 = vmatpush1.xpose.msra.mxu0 %v1117
      %1138 = vmatprep.subr.mxu0 0.0
      %1139 = vmatpush1.xpose.msra.mxu0 %v1120
      %1140 = vmatprep.subr.mxu0 0.0
      %1141 = vmatpush1.xpose.msra.mxu0 %v1123
      %1142 = vmatprep.subr.mxu0 0.0
      %1143 = vmatpush1.xpose.msra.mxu0 %v1126
      %1144 = vmatprep.subr.mxu0 0.0
      %1145 = vmatpush1.xpose.msra.mxu0 0.0
      %1146 = vmatprep.subr.mxu0 0.0
      %1147 = vmatpush1.xpose.msra.mxu0 0.0
      %1148 = vmatprep.subr.mxu0 0.0
      %1149 = vmatpush1.xpose.msra.mxu0 0.0
      %1150 = vmatprep.subr.mxu0 0.0
      %1151 = vmatpush1.xpose.msra.mxu0 0.0
      %1152 = vmatprep.subr.mxu0 0.0
      %1153 = vmatpush1.xpose.msra.mxu0 0.0
      %1154 = vmatprep.subr.mxu0 0.0
      %1155 = vmatpush1.xpose.msra.mxu0 0.0
      %1156 = vmatprep.subr.mxu0 0.0
      %1157 = vmatpush1.xpose.msra.mxu0 0.0
      %1158 = vmatprep.subr.mxu0 0.0
      %1159 = vmatpush1.xpose.msra.mxu0 0.0
      %1160 = vmatprep.subr.mxu0 0.0
      %1161 = vmatpush1.xpose.msra.mxu0 0.0
      %1162 = vmatprep.subr.mxu0 0.0
      %1163 = vmatpush1.xpose.msra.mxu0 0.0
      %1164 = vmatprep.subr.mxu0 0.0
      %1165 = vmatpush1.xpose.msra.mxu0 0.0
      %1166 = vmatprep.subr.mxu0 0.0
      %1167 = vmatpush1.xpose.msra.mxu0 0.0
      %1168 = vmatprep.subr.mxu0 0.0
      %1169 = vmatpush1.xpose.msra.mxu0 0.0
      %1170 = vmatprep.subr.mxu0 0.0
      %1171 = vmatpush1.xpose.msra.mxu0 0.0
      %1172 = vmatprep.subr.mxu0 0.0
      %1173 = vmatpush1.xpose.msra.mxu0 0.0
      %1174 = vmatprep.subr.mxu0 0.0
      %1175 = vmatpush1.xpose.msra.mxu0 0.0
      %1176 = vmatprep.subr.mxu0 0.0
      %1177 = vmatpush1.xpose.msra.mxu0 0.0
      %1178 = vmatprep.subr.mxu0 0.0
      %1179 = vmatpush1.xpose.msra.mxu0 0.0
      %1180 = vmatprep.subr.mxu0 0.0
      %1181 = vmatpush1.xpose.msra.mxu0 0.0
      %1182 = vmatprep.subr.mxu0 0.0
      %1183 = vmatpush1.xpose.msra.mxu0 0.0
      %1184 = vmatprep.subr.mxu0 0.0
      %1185 = vmatpush1.xpose.msra.mxu0 0.0
      %1186 = vmatprep.subr.mxu0 0.0
      %1187 = vmatpush1.xpose.msra.mxu0 0.0
      %1188 = vmatprep.subr.mxu0 0.0
      %1189 = vmatpush1.xpose.msra.mxu0 0.0
      %1190 = vmatprep.subr.mxu0 0.0
      %1191 = vmatpush1.xpose.msra.mxu0 0.0
      %1192 = vmatprep.mubr.f32.mxu0 0.0
      %1193 = vmatmul.mubr.f32.gmra.mrb[0].mxu0 %v1081
      %v1194 = vpop.f32.mrb[0].mxu0
      %v1195 = vadd.f32 0.0, %v1194
      %v1196 = vpop.f32.mrb[0].mxu0
      %1197 = vmatprep.mubr.f32.mxu0 0.0
      %1198 = vmatmul.mubr.f32.gmra.mrb[0].mxu0 %v1084
      %v1199 = vpop.f32.mrb[0].mxu0
      %v1200 = vadd.f32 0.0, %v1199
      %v1201 = vpop.f32.mrb[0].mxu0
      %1202 = vmatprep.mubr.f32.mxu0 0.0
      %1203 = vmatmul.mubr.f32.gmra.mrb[0].mxu0 %v1087
      %v1204 = vpop.f32.mrb[0].mxu0
      %v1205 = vadd.f32 0.0, %v1204
      %v1206 = vpop.f32.mrb[0].mxu0
      %1207 = vmatprep.mubr.f32.mxu0 0.0
      %1208 = vmatmul.mubr.f32.gmra.mrb[0].mxu0 %v1090
      %v1209 = vpop.f32.mrb[0].mxu0
      %v1210 = vadd.f32 0.0, %v1209
      %v1211 = vpop.f32.mrb[0].mxu0
      %1212 = vmatprep.mubr.f32.mxu0 0.0
      %1213 = vmatmul.mubr.f32.gmra.mrb[0].mxu0 %v1093
      %v1214 = vpop.f32.mrb[0].mxu0
      %v1215 = vadd.f32 0.0, %v1214
      %v1216 = vpop.f32.mrb[0].mxu0
      %1217 = vmatprep.mubr.f32.mxu0 0.0
      %1218 = vmatmul.mubr.f32.gmra.mrb[0].mxu0 %v1096
      %v1219 = vpop.f32.mrb[0].mxu0
      %v1220 = vadd.f32 0.0, %v1219
      %v1221 = vpop.f32.mrb[0].mxu0
      %1222 = vmatprep.mubr.f32.mxu0 0.0
      %1223 = vmatmul.mubr.f32.gmra.mrb[0].mxu0 %v1099
      %v1224 = vpop.f32.mrb[0].mxu0
      %v1225 = vadd.f32 0.0, %v1224
      %v1226 = vpop.f32.mrb[0].mxu0
      %1227 = vmatprep.mubr.f32.mxu0 0.0
      %1228 = vmatmul.mubr.f32.gmra.mrb[0].mxu0 %v1102
      %v1229 = vpop.f32.mrb[0].mxu0
      %v1230 = vadd.f32 0.0, %v1229
      %v1231 = vpop.f32.mrb[0].mxu0
      %1232 = vdwg.mxu0
      %vm1233 = vcmask 523264
      %v1234 = vsel %vm1233, %v1195, -inf
      %1235 = vmax.xlane.f32.xlu0 %v1234
      %v1236 = vpop.xlane.xlu0 %1235
      %v1237 = vsel %vm1233, %v1200, -inf
      %1238 = vmax.xlane.f32.xlu0 %v1237
      %v1239 = vpop.xlane.xlu0 %1238
      %v1240 = vsel %vm1233, %v1205, -inf
      %1241 = vmax.xlane.f32.xlu0 %v1240
      %v1242 = vpop.xlane.xlu0 %1241
      %v1243 = vsel %vm1233, %v1210, -inf
      %1244 = vmax.xlane.f32.xlu0 %v1243
      %v1245 = vpop.xlane.xlu0 %1244
      %v1246 = vsel %vm1233, %v1215, -inf
      %1247 = vmax.xlane.f32.xlu0 %v1246
      %v1248 = vpop.xlane.xlu0 %1247
      %v1249 = vsel %vm1233, %v1220, -inf
      %1250 = vmax.xlane.f32.xlu0 %v1249
      %v1251 = vpop.xlane.xlu0 %1250
      %v1252 = vsel %vm1233, %v1225, -inf
      %1253 = vmax.xlane.f32.xlu0 %v1252
      %v1254 = vpop.xlane.xlu0 %1253
      %v1255 = vsel %vm1233, %v1230, -inf
      %1256 = vmax.xlane.f32.xlu0 %v1255
      %v1257 = vpop.xlane.xlu0 %1256
      %v1258 = vsub.f32 %v1195, %v1236
      %v1259 = vsub.f32 %v1200, %v1239
      %v1260 = vsub.f32 %v1205, %v1242
      %v1261 = vsub.f32 %v1210, %v1245
      %v1262 = vsub.f32 %v1215, %v1248
      %v1263 = vsub.f32 %v1220, %v1251
      %v1264 = vsub.f32 %v1225, %v1254
      %v1265 = vsub.f32 %v1230, %v1257
      %v1266 = vmul.f32 %v1258, 1.442695
      %v1267 = vpow.pop %v1266
      %v1268 = vmul.f32 %v1259, 1.442695
      %v1269 = vpow.pop %v1268
      %v1270 = vmul.f32 %v1260, 1.442695
      %v1271 = vpow.pop %v1270
      %v1272 = vmul.f32 %v1261, 1.442695
      %v1273 = vpow.pop %v1272
      %v1274 = vmul.f32 %v1262, 1.442695
      %v1275 = vpow.pop %v1274
      %v1276 = vmul.f32 %v1263, 1.442695
      %v1277 = vpow.pop %v1276
      %v1278 = vmul.f32 %v1264, 1.442695
      %v1279 = vpow.pop %v1278
      %v1280 = vmul.f32 %v1265, 1.442695
      %v1281 = vpow.pop %v1280
      %v1282 = vsel %vm1233, %v1267, 0.0
      %1283 = vadd.xlane.f32.xlu0 %v1282
      %v1284 = vpop.xlane.xlu0 %1283
      %v1285 = vsel %vm1233, %v1269, 0.0
      %1286 = vadd.xlane.f32.xlu0 %v1285
      %v1287 = vpop.xlane.xlu0 %1286
      %v1288 = vsel %vm1233, %v1271, 0.0
      %1289 = vadd.xlane.f32.xlu0 %v1288
      %v1290 = vpop.xlane.xlu0 %1289
      %v1291 = vsel %vm1233, %v1273, 0.0
      %1292 = vadd.xlane.f32.xlu0 %v1291
      %v1293 = vpop.xlane.xlu0 %1292
      %v1294 = vsel %vm1233, %v1275, 0.0
      %1295 = vadd.xlane.f32.xlu0 %v1294
      %v1296 = vpop.xlane.xlu0 %1295
      %v1297 = vsel %vm1233, %v1277, 0.0
      %1298 = vadd.xlane.f32.xlu0 %v1297
      %v1299 = vpop.xlane.xlu0 %1298
      %v1300 = vsel %vm1233, %v1279, 0.0
      %1301 = vadd.xlane.f32.xlu0 %v1300
      %v1302 = vpop.xlane.xlu0 %1301
      %v1303 = vsel %vm1233, %v1281, 0.0
      %1304 = vadd.xlane.f32.xlu0 %v1303
      %v1305 = vpop.xlane.xlu0 %1304
      %v1306 = vrcp.pop %v1284
      %v1307 = vrcp.pop %v1287
      %v1308 = vrcp.pop %v1290
      %v1309 = vrcp.pop %v1293
      %v1310 = vrcp.pop %v1296
      %v1311 = vrcp.pop %v1299
      %v1312 = vrcp.pop %v1302
      %v1313 = vrcp.pop %v1305
      %v1314 = vmul.f32 %v1267, %v1306
      %v1315 = vmul.f32 %v1269, %v1307
      %v1316 = vmul.f32 %v1271, %v1308
      %v1317 = vmul.f32 %v1273, %v1309
      %v1318 = vmul.f32 %v1275, %v1310
      %v1319 = vmul.f32 %v1277, %v1311
      %v1320 = vmul.f32 %v1279, %v1312
      %v1321 = vmul.f32 %v1281, %v1313
      %v1323 = vsel %vm1233, %v1314, 0
      %v1326 = vsel %vm1233, %v1315, 0
      %v1329 = vsel %vm1233, %v1316, 0
      %v1332 = vsel %vm1233, %v1317, 0
      %v1335 = vsel %vm1233, %v1318, 0
      %v1338 = vsel %vm1233, %v1319, 0
      %v1341 = vsel %vm1233, %v1320, 0
      %v1344 = vsel %vm1233, %v1321, 0
      %1346 = vmatprep.subr.mxu0 0.0
      %1347 = vmatpush1.msra.mxu0 %v1041
      %1348 = vmatprep.subr.mxu0 0.0
      %1349 = vmatpush1.msra.mxu0 %v1046
      %1350 = vmatprep.subr.mxu0 0.0
      %1351 = vmatpush1.msra.mxu0 %v1051
      %1352 = vmatprep.subr.mxu0 0.0
      %1353 = vmatpush1.msra.mxu0 %v1056
      %1354 = vmatprep.subr.mxu0 0.0
      %1355 = vmatpush1.msra.mxu0 %v1061
      %1356 = vmatprep.subr.mxu0 0.0
      %1357 = vmatpush1.msra.mxu0 %v1066
      %1358 = vmatprep.subr.mxu0 0.0
      %1359 = vmatpush1.msra.mxu0 %v1071
      %1360 = vmatprep.subr.mxu0 0.0
      %1361 = vmatpush1.msra.mxu0 %v1076
      %1362 = vmatprep.subr.mxu0 0.0
      %1363 = vmatpush1.msra.mxu0 0.0
      %1364 = vmatprep.subr.mxu0 0.0
      %1365 = vmatpush1.msra.mxu0 0.0
      %1366 = vmatprep.subr.mxu0 0.0
      %1367 = vmatpush1.msra.mxu0 0.0
      %1368 = vmatprep.subr.mxu0 0.0
      %1369 = vmatpush1.msra.mxu0 0.0
      %1370 = vmatprep.subr.mxu0 0.0
      %1371 = vmatpush1.msra.mxu0 0.0
      %1372 = vmatprep.subr.mxu0 0.0
      %1373 = vmatpush1.msra.mxu0 0.0
      %1374 = vmatprep.subr.mxu0 0.0
      %1375 = vmatpush1.msra.mxu0 0.0
      %1376 = vmatprep.subr.mxu0 0.0
      %1377 = vmatpush1.msra.mxu0 0.0
      %1378 = vmatprep.subr.mxu0 0.0
      %1379 = vmatpush1.msra.mxu0 0.0
      %1380 = vmatprep.subr.mxu0 0.0
      %1381 = vmatpush1.msra.mxu0 0.0
      %1382 = vmatprep.subr.mxu0 0.0
      %1383 = vmatpush1.msra.mxu0 0.0
      %1384 = vmatprep.subr.mxu0 0.0
      %1385 = vmatpush1.msra.mxu0 0.0
      %1386 = vmatprep.subr.mxu0 0.0
      %1387 = vmatpush1.msra.mxu0 0.0
      %1388 = vmatprep.subr.mxu0 0.0
      %1389 = vmatpush1.msra.mxu0 0.0
      %1390 = vmatprep.subr.mxu0 0.0
      %1391 = vmatpush1.msra.mxu0 0.0
      %1392 = vmatprep.subr.mxu0 0.0
      %1393 = vmatpush1.msra.mxu0 0.0
      %1394 = vmatprep.subr.mxu0 0.0
      %1395 = vmatpush1.msra.mxu0 0.0
      %1396 = vmatprep.subr.mxu0 0.0
      %1397 = vmatpush1.msra.mxu0 0.0
      %1398 = vmatprep.subr.mxu0 0.0
      %1399 = vmatpush1.msra.mxu0 0.0
      %1400 = vmatprep.subr.mxu0 0.0
      %1401 = vmatpush1.msra.mxu0 0.0
      %1402 = vmatprep.subr.mxu0 0.0
      %1403 = vmatpush1.msra.mxu0 0.0
      %1404 = vmatprep.subr.mxu0 0.0
      %1405 = vmatpush1.msra.mxu0 0.0
      %1406 = vmatprep.subr.mxu0 0.0
      %1407 = vmatpush1.msra.mxu0 0.0
      %1408 = vmatprep.subr.mxu0 0.0
      %1409 = vmatpush1.msra.mxu0 0.0
      %1410 = vmatprep.mubr.f32.mxu0 0.0
      %1411 = vmatmul.mubr.f32.gmra.mrb[0].mxu0 %v1323
      %v1412 = vpop.f32.mrb[0].mxu0
      %v1413 = vadd.f32 0.0, %v1412
      %v1414 = vpop.f32.mrb[0].mxu0
      %1415 = vmatprep.mubr.f32.mxu0 0.0
      %1416 = vmatmul.mubr.f32.gmra.mrb[0].mxu0 %v1326
      %v1417 = vpop.f32.mrb[0].mxu0
      %v1418 = vadd.f32 0.0, %v1417
      %v1419 = vpop.f32.mrb[0].mxu0
      %1420 = vmatprep.mubr.f32.mxu0 0.0
      %1421 = vmatmul.mubr.f32.gmra.mrb[0].mxu0 %v1329
      %v1422 = vpop.f32.mrb[0].mxu0
      %v1423 = vadd.f32 0.0, %v1422
      %v1424 = vpop.f32.mrb[0].mxu0
      %1425 = vmatprep.mubr.f32.mxu0 0.0
      %1426 = vmatmul.mubr.f32.gmra.mrb[0].mxu0 %v1332
      %v1427 = vpop.f32.mrb[0].mxu0
      %v1428 = vadd.f32 0.0, %v1427
      %v1429 = vpop.f32.mrb[0].mxu0
      %1430 = vmatprep.mubr.f32.mxu0 0.0
      %1431 = vmatmul.mubr.f32.gmra.mrb[0].mxu0 %v1335
      %v1432 = vpop.f32.mrb[0].mxu0
      %v1433 = vadd.f32 0.0, %v1432
      %v1434 = vpop.f32.mrb[0].mxu0
      %1435 = vmatprep.mubr.f32.mxu0 0.0
      %1436 = vmatmul.mubr.f32.gmra.mrb[0].mxu0 %v1338
      %v1437 = vpop.f32.mrb[0].mxu0
      %v1438 = vadd.f32 0.0, %v1437
      %v1439 = vpop.f32.mrb[0].mxu0
      %1440 = vmatprep.mubr.f32.mxu0 0.0
      %1441 = vmatmul.mubr.f32.gmra.mrb[0].mxu0 %v1341
      %v1442 = vpop.f32.mrb[0].mxu0
      %v1443 = vadd.f32 0.0, %v1442
      %v1444 = vpop.f32.mrb[0].mxu0
      %1445 = vmatprep.mubr.f32.mxu0 0.0
      %1446 = vmatmul.mubr.f32.gmra.mrb[0].mxu0 %v1344
      %v1447 = vpop.f32.mrb[0].mxu0
      %v1448 = vadd.f32 0.0, %v1447
      %v1449 = vpop.f32.mrb[0].mxu0
      %1450 = vdwg.mxu0
      %v1451 = vld [vmem:[%s525] sm:$0xff]
      %s1452 = scalar_lea.vmem %s510, 32
      %v1453 = vld [vmem:[%s1452] sm:$0xff]
      %v1454 = vld [vmem:[%s1452 + $0x8] sm:$0xff]
      %v1455 = vld [vmem:[%s1452 + $0x10] sm:$0xff]
      %v1456 = vld [vmem:[%s1452 + $0x18] sm:$0xff]
      %1457 = vmatprep.subr.mxu0 0.0
      %1458 = vmatpush1.msra.mxu0 %v1453
      %1459 = vmatprep.subr.mxu0 0.0
      %1460 = vmatpush1.msra.mxu0 %v1454
      %1461 = vmatprep.subr.mxu0 0.0
      %1462 = vmatpush1.msra.mxu0 %v1455
      %1463 = vmatprep.subr.mxu0 0.0
      %1464 = vmatpush1.msra.mxu0 %v1456
      %1465 = vmatprep.subr.mxu0 0.0
      %1466 = vmatpush1.msra.mxu0 0.0
      %1467 = vmatprep.subr.mxu0 0.0
      %1468 = vmatpush1.msra.mxu0 0.0
      %1469 = vmatprep.subr.mxu0 0.0
      %1470 = vmatpush1.msra.mxu0 0.0
      %1471 = vmatprep.subr.mxu0 0.0
      %1472 = vmatpush1.msra.mxu0 0.0
      %1473 = vmatprep.subr.mxu0 0.0
      %1474 = vmatpush1.msra.mxu0 0.0
      %1475 = vmatprep.subr.mxu0 0.0
      %1476 = vmatpush1.msra.mxu0 0.0
      %1477 = vmatprep.subr.mxu0 0.0
      %1478 = vmatpush1.msra.mxu0 0.0
      %1479 = vmatprep.subr.mxu0 0.0
      %1480 = vmatpush1.msra.mxu0 0.0
      %1481 = vmatprep.subr.mxu0 0.0
      %1482 = vmatpush1.msra.mxu0 0.0
      %1483 = vmatprep.subr.mxu0 0.0
      %1484 = vmatpush1.msra.mxu0 0.0
      %1485 = vmatprep.subr.mxu0 0.0
      %1486 = vmatpush1.msra.mxu0 0.0
      %1487 = vmatprep.subr.mxu0 0.0
      %1488 = vmatpush1.msra.mxu0 0.0
      %1489 = vmatprep.subr.mxu0 0.0
      %1490 = vmatpush1.msra.mxu0 0.0
      %1491 = vmatprep.subr.mxu0 0.0
      %1492 = vmatpush1.msra.mxu0 0.0
      %1493 = vmatprep.subr.mxu0 0.0
      %1494 = vmatpush1.msra.mxu0 0.0
      %1495 = vmatprep.subr.mxu0 0.0
      %1496 = vmatpush1.msra.mxu0 0.0
      %1497 = vmatprep.subr.mxu0 0.0
      %1498 = vmatpush1.msra.mxu0 0.0
      %1499 = vmatprep.subr.mxu0 0.0
      %1500 = vmatpush1.msra.mxu0 0.0
      %1501 = vmatprep.subr.mxu0 0.0
      %1502 = vmatpush1.msra.mxu0 0.0
      %1503 = vmatprep.subr.mxu0 0.0
      %1504 = vmatpush1.msra.mxu0 0.0
      %1505 = vmatprep.subr.mxu0 0.0
      %1506 = vmatpush1.msra.mxu0 0.0
      %1507 = vmatprep.subr.mxu0 0.0
      %1508 = vmatpush1.msra.mxu0 0.0
      %1509 = vmatprep.subr.mxu0 0.0
      %1510 = vmatpush1.msra.mxu0 0.0
      %1511 = vmatprep.subr.mxu0 0.0
      %1512 = vmatpush1.msra.mxu0 0.0
      %1513 = vmatprep.subr.mxu0 0.0
      %1514 = vmatpush1.msra.mxu0 0.0
      %1515 = vmatprep.subr.mxu0 0.0
      %1516 = vmatpush1.msra.mxu0 0.0
      %1517 = vmatprep.subr.mxu0 0.0
      %1518 = vmatpush1.msra.mxu0 0.0
      %1519 = vmatprep.subr.mxu0 0.0
      %1520 = vmatpush1.msra.mxu0 0.0
      %1521 = vmatprep.mubr.f32.mxu0 0.0
      %1522 = vmatmul.mubr.f32.gmra.mrb[0].mxu0 %v725
      %v1523 = vpop.f32.mrb[0].mxu0
      %v1524 = vadd.f32 0.0, %v1523
      %v1525 = vpop.f32.mrb[0].mxu0
      %1526 = vmatprep.mubr.f32.mxu0 0.0
      %1527 = vmatmul.mubr.f32.gmra.mrb[0].mxu0 %v728
      %v1528 = vpop.f32.mrb[0].mxu0
      %v1529 = vadd.f32 0.0, %v1528
      %v1530 = vpop.f32.mrb[0].mxu0
      %1531 = vmatprep.mubr.f32.mxu0 0.0
      %1532 = vmatmul.mubr.f32.gmra.mrb[0].mxu0 %v731
      %v1533 = vpop.f32.mrb[0].mxu0
      %v1534 = vadd.f32 0.0, %v1533
      %v1535 = vpop.f32.mrb[0].mxu0
      %1536 = vmatprep.mubr.f32.mxu0 0.0
      %1537 = vmatmul.mubr.f32.gmra.mrb[0].mxu0 %v734
      %v1538 = vpop.f32.mrb[0].mxu0
      %v1539 = vadd.f32 0.0, %v1538
      %v1540 = vpop.f32.mrb[0].mxu0
      %1541 = vmatprep.mubr.f32.mxu0 0.0
      %1542 = vmatmul.mubr.f32.gmra.mrb[0].mxu0 %v737
      %v1543 = vpop.f32.mrb[0].mxu0
      %v1544 = vadd.f32 0.0, %v1543
      %v1545 = vpop.f32.mrb[0].mxu0
      %1546 = vmatprep.mubr.f32.mxu0 0.0
      %1547 = vmatmul.mubr.f32.gmra.mrb[0].mxu0 %v740
      %v1548 = vpop.f32.mrb[0].mxu0
      %v1549 = vadd.f32 0.0, %v1548
      %v1550 = vpop.f32.mrb[0].mxu0
      %1551 = vmatprep.mubr.f32.mxu0 0.0
      %1552 = vmatmul.mubr.f32.gmra.mrb[0].mxu0 %v743
      %v1553 = vpop.f32.mrb[0].mxu0
      %v1554 = vadd.f32 0.0, %v1553
      %v1555 = vpop.f32.mrb[0].mxu0
      %1556 = vmatprep.mubr.f32.mxu0 0.0
      %1557 = vmatmul.mubr.f32.gmra.mrb[0].mxu0 %v746
      %v1558 = vpop.f32.mrb[0].mxu0
      %v1559 = vadd.f32 0.0, %v1558
      %v1560 = vpop.f32.mrb[0].mxu0
      %1561 = vdwg.mxu0
      %v1562 = vmul.f32 %v1524, 0.35355338
      %v1563 = vmul.f32 %v1529, 0.35355338
      %v1564 = vmul.f32 %v1534, 0.35355338
      %v1565 = vmul.f32 %v1539, 0.35355338
      %v1566 = vmul.f32 %v1544, 0.35355338
      %v1567 = vmul.f32 %v1549, 0.35355338
      %v1568 = vmul.f32 %v1554, 0.35355338
      %v1569 = vmul.f32 %v1559, 0.35355338
      %s1570 = scalar_lea.vmem %s515, 32
      %v1571 = vld [vmem:[%s1570] sm:$0xff]
      %v1572 = vld [vmem:[%s1570 + $0x8] sm:$0xff]
      %v1573 = vld [vmem:[%s1570 + $0x10] sm:$0xff]
      %v1574 = vld [vmem:[%s1570 + $0x18] sm:$0xff]
      %1575 = vmatprep.subr.mxu0 0.0
      %1576 = vmatpush1.msra.mxu0 %v1571
      %1577 = vmatprep.subr.mxu0 0.0
      %1578 = vmatpush1.msra.mxu0 %v1572
      %1579 = vmatprep.subr.mxu0 0.0
      %1580 = vmatpush1.msra.mxu0 %v1573
      %1581 = vmatprep.subr.mxu0 0.0
      %1582 = vmatpush1.msra.mxu0 %v1574
      %1583 = vmatprep.subr.mxu0 0.0
      %1584 = vmatpush1.msra.mxu0 0.0
      %1585 = vmatprep.subr.mxu0 0.0
      %1586 = vmatpush1.msra.mxu0 0.0
      %1587 = vmatprep.subr.mxu0 0.0
      %1588 = vmatpush1.msra.mxu0 0.0
      %1589 = vmatprep.subr.mxu0 0.0
      %1590 = vmatpush1.msra.mxu0 0.0
      %1591 = vmatprep.subr.mxu0 0.0
      %1592 = vmatpush1.msra.mxu0 0.0
      %1593 = vmatprep.subr.mxu0 0.0
      %1594 = vmatpush1.msra.mxu0 0.0
      %1595 = vmatprep.subr.mxu0 0.0
      %1596 = vmatpush1.msra.mxu0 0.0
      %1597 = vmatprep.subr.mxu0 0.0
      %1598 = vmatpush1.msra.mxu0 0.0
      %1599 = vmatprep.subr.mxu0 0.0
      %1600 = vmatpush1.msra.mxu0 0.0
      %1601 = vmatprep.subr.mxu0 0.0
      %1602 = vmatpush1.msra.mxu0 0.0
      %1603 = vmatprep.subr.mxu0 0.0
      %1604 = vmatpush1.msra.mxu0 0.0
      %1605 = vmatprep.subr.mxu0 0.0
      %1606 = vmatpush1.msra.mxu0 0.0
      %1607 = vmatprep.subr.mxu0 0.0
      %1608 = vmatpush1.msra.mxu0 0.0
      %1609 = vmatprep.subr.mxu0 0.0
      %1610 = vmatpush1.msra.mxu0 0.0
      %1611 = vmatprep.subr.mxu0 0.0
      %1612 = vmatpush1.msra.mxu0 0.0
      %1613 = vmatprep.subr.mxu0 0.0
      %1614 = vmatpush1.msra.mxu0 0.0
      %1615 = vmatprep.subr.mxu0 0.0
      %1616 = vmatpush1.msra.mxu0 0.0
      %1617 = vmatprep.subr.mxu0 0.0
      %1618 = vmatpush1.msra.mxu0 0.0
      %1619 = vmatprep.subr.mxu0 0.0
      %1620 = vmatpush1.msra.mxu0 0.0
      %1621 = vmatprep.subr.mxu0 0.0
      %1622 = vmatpush1.msra.mxu0 0.0
      %1623 = vmatprep.subr.mxu0 0.0
      %1624 = vmatpush1.msra.mxu0 0.0
      %1625 = vmatprep.subr.mxu0 0.0
      %1626 = vmatpush1.msra.mxu0 0.0
      %1627 = vmatprep.subr.mxu0 0.0
      %1628 = vmatpush1.msra.mxu0 0.0
      %1629 = vmatprep.subr.mxu0 0.0
      %1630 = vmatpush1.msra.mxu0 0.0
      %1631 = vmatprep.subr.mxu0 0.0
      %1632 = vmatpush1.msra.mxu0 0.0
      %1633 = vmatprep.subr.mxu0 0.0
      %1634 = vmatpush1.msra.mxu0 0.0
      %1635 = vmatprep.subr.mxu0 0.0
      %1636 = vmatpush1.msra.mxu0 0.0
      %1637 = vmatprep.subr.mxu0 0.0
      %1638 = vmatpush1.msra.mxu0 0.0
      %1639 = vmatprep.mubr.f32.mxu0 0.0
      %1640 = vmatmul.mubr.f32.gmra.mrb[0].mxu0 %v725
      %v1641 = vpop.f32.mrb[0].mxu0
      %v1642 = vadd.f32 0.0, %v1641
      %v1643 = vpop.f32.mrb[0].mxu0
      %1644 = vmatprep.mubr.f32.mxu0 0.0
      %1645 = vmatmul.mubr.f32.gmra.mrb[0].mxu0 %v728
      %v1646 = vpop.f32.mrb[0].mxu0
      %v1647 = vadd.f32 0.0, %v1646
      %v1648 = vpop.f32.mrb[0].mxu0
      %1649 = vmatprep.mubr.f32.mxu0 0.0
      %1650 = vmatmul.mubr.f32.gmra.mrb[0].mxu0 %v731
      %v1651 = vpop.f32.mrb[0].mxu0
      %v1652 = vadd.f32 0.0, %v1651
      %v1653 = vpop.f32.mrb[0].mxu0
      %1654 = vmatprep.mubr.f32.mxu0 0.0
      %1655 = vmatmul.mubr.f32.gmra.mrb[0].mxu0 %v734
      %v1656 = vpop.f32.mrb[0].mxu0
      %v1657 = vadd.f32 0.0, %v1656
      %v1658 = vpop.f32.mrb[0].mxu0
      %1659 = vmatprep.mubr.f32.mxu0 0.0
      %1660 = vmatmul.mubr.f32.gmra.mrb[0].mxu0 %v737
      %v1661 = vpop.f32.mrb[0].mxu0
      %v1662 = vadd.f32 0.0, %v1661
      %v1663 = vpop.f32.mrb[0].mxu0
      %1664 = vmatprep.mubr.f32.mxu0 0.0
      %1665 = vmatmul.mubr.f32.gmra.mrb[0].mxu0 %v740
      %v1666 = vpop.f32.mrb[0].mxu0
      %v1667 = vadd.f32 0.0, %v1666
      %v1668 = vpop.f32.mrb[0].mxu0
      %1669 = vmatprep.mubr.f32.mxu0 0.0
      %1670 = vmatmul.mubr.f32.gmra.mrb[0].mxu0 %v743
      %v1671 = vpop.f32.mrb[0].mxu0
      %v1672 = vadd.f32 0.0, %v1671
      %v1673 = vpop.f32.mrb[0].mxu0
      %1674 = vmatprep.mubr.f32.mxu0 0.0
      %1675 = vmatmul.mubr.f32.gmra.mrb[0].mxu0 %v746
      %v1676 = vpop.f32.mrb[0].mxu0
      %v1677 = vadd.f32 0.0, %v1676
      %v1678 = vpop.f32.mrb[0].mxu0
      %1679 = vdwg.mxu0
      %s1680 = scalar_lea.vmem %s520, 32
      %v1681 = vld [vmem:[%s1680] sm:$0xff]
      %v1682 = vld [vmem:[%s1680 + $0x8] sm:$0xff]
      %v1683 = vld [vmem:[%s1680 + $0x10] sm:$0xff]
      %v1684 = vld [vmem:[%s1680 + $0x18] sm:$0xff]
      %1685 = vmatprep.subr.mxu0 0.0
      %1686 = vmatpush1.msra.mxu0 %v1681
      %1687 = vmatprep.subr.mxu0 0.0
      %1688 = vmatpush1.msra.mxu0 %v1682
      %1689 = vmatprep.subr.mxu0 0.0
      %1690 = vmatpush1.msra.mxu0 %v1683
      %1691 = vmatprep.subr.mxu0 0.0
      %1692 = vmatpush1.msra.mxu0 %v1684
      %1693 = vmatprep.subr.mxu0 0.0
      %1694 = vmatpush1.msra.mxu0 0.0
      %1695 = vmatprep.subr.mxu0 0.0
      %1696 = vmatpush1.msra.mxu0 0.0
      %1697 = vmatprep.subr.mxu0 0.0
      %1698 = vmatpush1.msra.mxu0 0.0
      %1699 = vmatprep.subr.mxu0 0.0
      %1700 = vmatpush1.msra.mxu0 0.0
      %1701 = vmatprep.subr.mxu0 0.0
      %1702 = vmatpush1.msra.mxu0 0.0
      %1703 = vmatprep.subr.mxu0 0.0
      %1704 = vmatpush1.msra.mxu0 0.0
      %1705 = vmatprep.subr.mxu0 0.0
      %1706 = vmatpush1.msra.mxu0 0.0
      %1707 = vmatprep.subr.mxu0 0.0
      %1708 = vmatpush1.msra.mxu0 0.0
      %1709 = vmatprep.subr.mxu0 0.0
      %1710 = vmatpush1.msra.mxu0 0.0
      %1711 = vmatprep.subr.mxu0 0.0
      %1712 = vmatpush1.msra.mxu0 0.0
      %1713 = vmatprep.subr.mxu0 0.0
      %1714 = vmatpush1.msra.mxu0 0.0
      %1715 = vmatprep.subr.mxu0 0.0
      %1716 = vmatpush1.msra.mxu0 0.0
      %1717 = vmatprep.subr.mxu0 0.0
      %1718 = vmatpush1.msra.mxu0 0.0
      %1719 = vmatprep.subr.mxu0 0.0
      %1720 = vmatpush1.msra.mxu0 0.0
      %1721 = vmatprep.subr.mxu0 0.0
      %1722 = vmatpush1.msra.mxu0 0.0
      %1723 = vmatprep.subr.mxu0 0.0
      %1724 = vmatpush1.msra.mxu0 0.0
      %1725 = vmatprep.subr.mxu0 0.0
      %1726 = vmatpush1.msra.mxu0 0.0
      %1727 = vmatprep.subr.mxu0 0.0
      %1728 = vmatpush1.msra.mxu0 0.0
      %1729 = vmatprep.subr.mxu0 0.0
      %1730 = vmatpush1.msra.mxu0 0.0
      %1731 = vmatprep.subr.mxu0 0.0
      %1732 = vmatpush1.msra.mxu0 0.0
      %1733 = vmatprep.subr.mxu0 0.0
      %1734 = vmatpush1.msra.mxu0 0.0
      %1735 = vmatprep.subr.mxu0 0.0
      %1736 = vmatpush1.msra.mxu0 0.0
      %1737 = vmatprep.subr.mxu0 0.0
      %1738 = vmatpush1.msra.mxu0 0.0
      %1739 = vmatprep.subr.mxu0 0.0
      %1740 = vmatpush1.msra.mxu0 0.0
      %1741 = vmatprep.subr.mxu0 0.0
      %1742 = vmatpush1.msra.mxu0 0.0
      %1743 = vmatprep.subr.mxu0 0.0
      %1744 = vmatpush1.msra.mxu0 0.0
      %1745 = vmatprep.subr.mxu0 0.0
      %1746 = vmatpush1.msra.mxu0 0.0
      %1747 = vmatprep.subr.mxu0 0.0
      %1748 = vmatpush1.msra.mxu0 0.0
      %1749 = vmatprep.mubr.f32.mxu0 0.0
      %1750 = vmatmul.mubr.f32.gmra.mrb[0].mxu0 %v725
      %v1751 = vpop.f32.mrb[0].mxu0
      %v1752 = vadd.f32 0.0, %v1751
      %v1753 = vpop.f32.mrb[0].mxu0
      %1754 = vmatprep.mubr.f32.mxu0 0.0
      %1755 = vmatmul.mubr.f32.gmra.mrb[0].mxu0 %v728
      %v1756 = vpop.f32.mrb[0].mxu0
      %v1757 = vadd.f32 0.0, %v1756
      %v1758 = vpop.f32.mrb[0].mxu0
      %1759 = vmatprep.mubr.f32.mxu0 0.0
      %1760 = vmatmul.mubr.f32.gmra.mrb[0].mxu0 %v731
      %v1761 = vpop.f32.mrb[0].mxu0
      %v1762 = vadd.f32 0.0, %v1761
      %v1763 = vpop.f32.mrb[0].mxu0
      %1764 = vmatprep.mubr.f32.mxu0 0.0
      %1765 = vmatmul.mubr.f32.gmra.mrb[0].mxu0 %v734
      %v1766 = vpop.f32.mrb[0].mxu0
      %v1767 = vadd.f32 0.0, %v1766
      %v1768 = vpop.f32.mrb[0].mxu0
      %1769 = vmatprep.mubr.f32.mxu0 0.0
      %1770 = vmatmul.mubr.f32.gmra.mrb[0].mxu0 %v737
      %v1771 = vpop.f32.mrb[0].mxu0
      %v1772 = vadd.f32 0.0, %v1771
      %v1773 = vpop.f32.mrb[0].mxu0
      %1774 = vmatprep.mubr.f32.mxu0 0.0
      %1775 = vmatmul.mubr.f32.gmra.mrb[0].mxu0 %v740
      %v1776 = vpop.f32.mrb[0].mxu0
      %v1777 = vadd.f32 0.0, %v1776
      %v1778 = vpop.f32.mrb[0].mxu0
      %1779 = vmatprep.mubr.f32.mxu0 0.0
      %1780 = vmatmul.mubr.f32.gmra.mrb[0].mxu0 %v743
      %v1781 = vpop.f32.mrb[0].mxu0
      %v1782 = vadd.f32 0.0, %v1781
      %v1783 = vpop.f32.mrb[0].mxu0
      %1784 = vmatprep.mubr.f32.mxu0 0.0
      %1785 = vmatmul.mubr.f32.gmra.mrb[0].mxu0 %v746
      %v1786 = vpop.f32.mrb[0].mxu0
      %v1787 = vadd.f32 0.0, %v1786
      %v1788 = vpop.f32.mrb[0].mxu0
      %1789 = vdwg.mxu0
      %v1791 = vsel %vm1079, %v1562, 0
      %v1794 = vsel %vm1079, %v1563, 0
      %v1797 = vsel %vm1079, %v1564, 0
      %v1800 = vsel %vm1079, %v1565, 0
      %v1803 = vsel %vm1079, %v1566, 0
      %v1806 = vsel %vm1079, %v1567, 0
      %v1809 = vsel %vm1079, %v1568, 0
      %v1812 = vsel %vm1079, %v1569, 0
      %v1815 = vsel %vm1079, %v1642, 0
      %v1818 = vsel %vm1079, %v1647, 0
      %v1821 = vsel %vm1079, %v1652, 0
      %v1824 = vsel %vm1079, %v1657, 0
      %v1827 = vsel %vm1079, %v1662, 0
      %v1830 = vsel %vm1079, %v1667, 0
      %v1833 = vsel %vm1079, %v1672, 0
      %v1836 = vsel %vm1079, %v1677, 0
      %1838 = vmatprep.subr.mxu0 0.0
      %1839 = vmatpush1.xpose.msra.mxu0 %v1815
      %1840 = vmatprep.subr.mxu0 0.0
      %1841 = vmatpush1.xpose.msra.mxu0 %v1818
      %1842 = vmatprep.subr.mxu0 0.0
      %1843 = vmatpush1.xpose.msra.mxu0 %v1821
      %1844 = vmatprep.subr.mxu0 0.0
      %1845 = vmatpush1.xpose.msra.mxu0 %v1824
      %1846 = vmatprep.subr.mxu0 0.0
      %1847 = vmatpush1.xpose.msra.mxu0 %v1827
      %1848 = vmatprep.subr.mxu0 0.0
      %1849 = vmatpush1.xpose.msra.mxu0 %v1830
      %1850 = vmatprep.subr.mxu0 0.0
      %1851 = vmatpush1.xpose.msra.mxu0 %v1833
      %1852 = vmatprep.subr.mxu0 0.0
      %1853 = vmatpush1.xpose.msra.mxu0 %v1836
      %1854 = vmatprep.subr.mxu0 0.0
      %1855 = vmatpush1.xpose.msra.mxu0 0.0
      %1856 = vmatprep.subr.mxu0 0.0
      %1857 = vmatpush1.xpose.msra.mxu0 0.0
      %1858 = vmatprep.subr.mxu0 0.0
      %1859 = vmatpush1.xpose.msra.mxu0 0.0
      %1860 = vmatprep.subr.mxu0 0.0
      %1861 = vmatpush1.xpose.msra.mxu0 0.0
      %1862 = vmatprep.subr.mxu0 0.0
      %1863 = vmatpush1.xpose.msra.mxu0 0.0
      %1864 = vmatprep.subr.mxu0 0.0
      %1865 = vmatpush1.xpose.msra.mxu0 0.0
      %1866 = vmatprep.subr.mxu0 0.0
      %1867 = vmatpush1.xpose.msra.mxu0 0.0
      %1868 = vmatprep.subr.mxu0 0.0
      %1869 = vmatpush1.xpose.msra.mxu0 0.0
      %1870 = vmatprep.subr.mxu0 0.0
      %1871 = vmatpush1.xpose.msra.mxu0 0.0
      %1872 = vmatprep.subr.mxu0 0.0
      %1873 = vmatpush1.xpose.msra.mxu0 0.0
      %1874 = vmatprep.subr.mxu0 0.0
      %1875 = vmatpush1.xpose.msra.mxu0 0.0
      %1876 = vmatprep.subr.mxu0 0.0
      %1877 = vmatpush1.xpose.msra.mxu0 0.0
      %1878 = vmatprep.subr.mxu0 0.0
      %1879 = vmatpush1.xpose.msra.mxu0 0.0
      %1880 = vmatprep.subr.mxu0 0.0
      %1881 = vmatpush1.xpose.msra.mxu0 0.0
      %1882 = vmatprep.subr.mxu0 0.0
      %1883 = vmatpush1.xpose.msra.mxu0 0.0
      %1884 = vmatprep.subr.mxu0 0.0
      %1885 = vmatpush1.xpose.msra.mxu0 0.0
      %1886 = vmatprep.subr.mxu0 0.0
      %1887 = vmatpush1.xpose.msra.mxu0 0.0
      %1888 = vmatprep.subr.mxu0 0.0
      %1889 = vmatpush1.xpose.msra.mxu0 0.0
      %1890 = vmatprep.subr.mxu0 0.0
      %1891 = vmatpush1.xpose.msra.mxu0 0.0
      %1892 = vmatprep.subr.mxu0 0.0
      %1893 = vmatpush1.xpose.msra.mxu0 0.0
      %1894 = vmatprep.subr.mxu0 0.0
      %1895 = vmatpush1.xpose.msra.mxu0 0.0
      %1896 = vmatprep.subr.mxu0 0.0
      %1897 = vmatpush1.xpose.msra.mxu0 0.0
      %1898 = vmatprep.subr.mxu0 0.0
      %1899 = vmatpush1.xpose.msra.mxu0 0.0
      %1900 = vmatprep.subr.mxu0 0.0
      %1901 = vmatpush1.xpose.msra.mxu0 0.0
      %1902 = vmatprep.mubr.f32.mxu0 0.0
      %1903 = vmatmul.mubr.f32.gmra.mrb[0].mxu0 %v1791
      %v1904 = vpop.f32.mrb[0].mxu0
      %v1905 = vadd.f32 0.0, %v1904
      %v1906 = vpop.f32.mrb[0].mxu0
      %1907 = vmatprep.mubr.f32.mxu0 0.0
      %1908 = vmatmul.mubr.f32.gmra.mrb[0].mxu0 %v1794
      %v1909 = vpop.f32.mrb[0].mxu0
      %v1910 = vadd.f32 0.0, %v1909
      %v1911 = vpop.f32.mrb[0].mxu0
      %1912 = vmatprep.mubr.f32.mxu0 0.0
      %1913 = vmatmul.mubr.f32.gmra.mrb[0].mxu0 %v1797
      %v1914 = vpop.f32.mrb[0].mxu0
      %v1915 = vadd.f32 0.0, %v1914
      %v1916 = vpop.f32.mrb[0].mxu0
      %1917 = vmatprep.mubr.f32.mxu0 0.0
      %1918 = vmatmul.mubr.f32.gmra.mrb[0].mxu0 %v1800
      %v1919 = vpop.f32.mrb[0].mxu0
      %v1920 = vadd.f32 0.0, %v1919
      %v1921 = vpop.f32.mrb[0].mxu0
      %1922 = vmatprep.mubr.f32.mxu0 0.0
      %1923 = vmatmul.mubr.f32.gmra.mrb[0].mxu0 %v1803
      %v1924 = vpop.f32.mrb[0].mxu0
      %v1925 = vadd.f32 0.0, %v1924
      %v1926 = vpop.f32.mrb[0].mxu0
      %1927 = vmatprep.mubr.f32.mxu0 0.0
      %1928 = vmatmul.mubr.f32.gmra.mrb[0].mxu0 %v1806
      %v1929 = vpop.f32.mrb[0].mxu0
      %v1930 = vadd.f32 0.0, %v1929
      %v1931 = vpop.f32.mrb[0].mxu0
      %1932 = vmatprep.mubr.f32.mxu0 0.0
      %1933 = vmatmul.mubr.f32.gmra.mrb[0].mxu0 %v1809
      %v1934 = vpop.f32.mrb[0].mxu0
      %v1935 = vadd.f32 0.0, %v1934
      %v1936 = vpop.f32.mrb[0].mxu0
      %1937 = vmatprep.mubr.f32.mxu0 0.0
      %1938 = vmatmul.mubr.f32.gmra.mrb[0].mxu0 %v1812
      %v1939 = vpop.f32.mrb[0].mxu0
      %v1940 = vadd.f32 0.0, %v1939
      %v1941 = vpop.f32.mrb[0].mxu0
      %1942 = vdwg.mxu0
      %v1943 = vsel %vm1233, %v1905, -inf
      %1944 = vmax.xlane.f32.xlu0 %v1943
      %v1945 = vpop.xlane.xlu0 %1944
      %v1946 = vsel %vm1233, %v1910, -inf
      %1947 = vmax.xlane.f32.xlu0 %v1946
      %v1948 = vpop.xlane.xlu0 %1947
      %v1949 = vsel %vm1233, %v1915, -inf
      %1950 = vmax.xlane.f32.xlu0 %v1949
      %v1951 = vpop.xlane.xlu0 %1950
      %v1952 = vsel %vm1233, %v1920, -inf
      %1953 = vmax.xlane.f32.xlu0 %v1952
      %v1954 = vpop.xlane.xlu0 %1953
      %v1955 = vsel %vm1233, %v1925, -inf
      %1956 = vmax.xlane.f32.xlu0 %v1955
      %v1957 = vpop.xlane.xlu0 %1956
      %v1958 = vsel %vm1233, %v1930, -inf
      %1959 = vmax.xlane.f32.xlu0 %v1958
      %v1960 = vpop.xlane.xlu0 %1959
      %v1961 = vsel %vm1233, %v1935, -inf
      %1962 = vmax.xlane.f32.xlu0 %v1961
      %v1963 = vpop.xlane.xlu0 %1962
      %v1964 = vsel %vm1233, %v1940, -inf
      %1965 = vmax.xlane.f32.xlu0 %v1964
      %v1966 = vpop.xlane.xlu0 %1965
      %v1967 = vsub.f32 %v1905, %v1945
      %v1968 = vsub.f32 %v1910, %v1948
      %v1969 = vsub.f32 %v1915, %v1951
      %v1970 = vsub.f32 %v1920, %v1954
      %v1971 = vsub.f32 %v1925, %v1957
      %v1972 = vsub.f32 %v1930, %v1960
      %v1973 = vsub.f32 %v1935, %v1963
      %v1974 = vsub.f32 %v1940, %v1966
      %v1975 = vmul.f32 %v1967, 1.442695
      %v1976 = vpow.pop %v1975
      %v1977 = vmul.f32 %v1968, 1.442695
      %v1978 = vpow.pop %v1977
      %v1979 = vmul.f32 %v1969, 1.442695
      %v1980 = vpow.pop %v1979
      %v1981 = vmul.f32 %v1970, 1.442695
      %v1982 = vpow.pop %v1981
      %v1983 = vmul.f32 %v1971, 1.442695
      %v1984 = vpow.pop %v1983
      %v1985 = vmul.f32 %v1972, 1.442695
      %v1986 = vpow.pop %v1985
      %v1987 = vmul.f32 %v1973, 1.442695
      %v1988 = vpow.pop %v1987
      %v1989 = vmul.f32 %v1974, 1.442695
      %v1990 = vpow.pop %v1989
      %v1991 = vsel %vm1233, %v1976, 0.0
      %1992 = vadd.xlane.f32.xlu0 %v1991
      %v1993 = vpop.xlane.xlu0 %1992
      %v1994 = vsel %vm1233, %v1978, 0.0
      %1995 = vadd.xlane.f32.xlu0 %v1994
      %v1996 = vpop.xlane.xlu0 %1995
      %v1997 = vsel %vm1233, %v1980, 0.0
      %1998 = vadd.xlane.f32.xlu0 %v1997
      %v1999 = vpop.xlane.xlu0 %1998
      %v2000 = vsel %vm1233, %v1982, 0.0
      %2001 = vadd.xlane.f32.xlu0 %v2000
      %v2002 = vpop.xlane.xlu0 %2001
      %v2003 = vsel %vm1233, %v1984, 0.0
      %2004 = vadd.xlane.f32.xlu0 %v2003
      %v2005 = vpop.xlane.xlu0 %2004
      %v2006 = vsel %vm1233, %v1986, 0.0
      %2007 = vadd.xlane.f32.xlu0 %v2006
      %v2008 = vpop.xlane.xlu0 %2007
      %v2009 = vsel %vm1233, %v1988, 0.0
      %2010 = vadd.xlane.f32.xlu0 %v2009
      %v2011 = vpop.xlane.xlu0 %2010
      %v2012 = vsel %vm1233, %v1990, 0.0
      %2013 = vadd.xlane.f32.xlu0 %v2012
      %v2014 = vpop.xlane.xlu0 %2013
      %v2015 = vrcp.pop %v1993
      %v2016 = vrcp.pop %v1996
      %v2017 = vrcp.pop %v1999
      %v2018 = vrcp.pop %v2002
      %v2019 = vrcp.pop %v2005
      %v2020 = vrcp.pop %v2008
      %v2021 = vrcp.pop %v2011
      %v2022 = vrcp.pop %v2014
      %v2023 = vmul.f32 %v1976, %v2015
      %v2024 = vmul.f32 %v1978, %v2016
      %v2025 = vmul.f32 %v1980, %v2017
      %v2026 = vmul.f32 %v1982, %v2018
      %v2027 = vmul.f32 %v1984, %v2019
      %v2028 = vmul.f32 %v1986, %v2020
      %v2029 = vmul.f32 %v1988, %v2021
      %v2030 = vmul.f32 %v1990, %v2022
      %v2032 = vsel %vm1233, %v2023, 0
      %v2035 = vsel %vm1233, %v2024, 0
      %v2038 = vsel %vm1233, %v2025, 0
      %v2041 = vsel %vm1233, %v2026, 0
      %v2044 = vsel %vm1233, %v2027, 0
      %v2047 = vsel %vm1233, %v2028, 0
      %v2050 = vsel %vm1233, %v2029, 0
      %v2053 = vsel %vm1233, %v2030, 0
      %2055 = vmatprep.subr.mxu0 0.0
      %2056 = vmatpush1.msra.mxu0 %v1752
      %2057 = vmatprep.subr.mxu0 0.0
      %2058 = vmatpush1.msra.mxu0 %v1757
      %2059 = vmatprep.subr.mxu0 0.0
      %2060 = vmatpush1.msra.mxu0 %v1762
      %2061 = vmatprep.subr.mxu0 0.0
      %2062 = vmatpush1.msra.mxu0 %v1767
      %2063 = vmatprep.subr.mxu0 0.0
      %2064 = vmatpush1.msra.mxu0 %v1772
      %2065 = vmatprep.subr.mxu0 0.0
      %2066 = vmatpush1.msra.mxu0 %v1777
      %2067 = vmatprep.subr.mxu0 0.0
      %2068 = vmatpush1.msra.mxu0 %v1782
      %2069 = vmatprep.subr.mxu0 0.0
      %2070 = vmatpush1.msra.mxu0 %v1787
      %2071 = vmatprep.subr.mxu0 0.0
      %2072 = vmatpush1.msra.mxu0 0.0
      %2073 = vmatprep.subr.mxu0 0.0
      %2074 = vmatpush1.msra.mxu0 0.0
      %2075 = vmatprep.subr.mxu0 0.0
      %2076 = vmatpush1.msra.mxu0 0.0
      %2077 = vmatprep.subr.mxu0 0.0
      %2078 = vmatpush1.msra.mxu0 0.0
      %2079 = vmatprep.subr.mxu0 0.0
      %2080 = vmatpush1.msra.mxu0 0.0
      %2081 = vmatprep.subr.mxu0 0.0
      %2082 = vmatpush1.msra.mxu0 0.0
      %2083 = vmatprep.subr.mxu0 0.0
      %2084 = vmatpush1.msra.mxu0 0.0
      %2085 = vmatprep.subr.mxu0 0.0
      %2086 = vmatpush1.msra.mxu0 0.0
      %2087 = vmatprep.subr.mxu0 0.0
      %2088 = vmatpush1.msra.mxu0 0.0
      %2089 = vmatprep.subr.mxu0 0.0
      %2090 = vmatpush1.msra.mxu0 0.0
      %2091 = vmatprep.subr.mxu0 0.0
      %2092 = vmatpush1.msra.mxu0 0.0
      %2093 = vmatprep.subr.mxu0 0.0
      %2094 = vmatpush1.msra.mxu0 0.0
      %2095 = vmatprep.subr.mxu0 0.0
      %2096 = vmatpush1.msra.mxu0 0.0
      %2097 = vmatprep.subr.mxu0 0.0
      %2098 = vmatpush1.msra.mxu0 0.0
      %2099 = vmatprep.subr.mxu0 0.0
      %2100 = vmatpush1.msra.mxu0 0.0
      %2101 = vmatprep.subr.mxu0 0.0
      %2102 = vmatpush1.msra.mxu0 0.0
      %2103 = vmatprep.subr.mxu0 0.0
      %2104 = vmatpush1.msra.mxu0 0.0
      %2105 = vmatprep.subr.mxu0 0.0
      %2106 = vmatpush1.msra.mxu0 0.0
      %2107 = vmatprep.subr.mxu0 0.0
      %2108 = vmatpush1.msra.mxu0 0.0
      %2109 = vmatprep.subr.mxu0 0.0
      %2110 = vmatpush1.msra.mxu0 0.0
      %2111 = vmatprep.subr.mxu0 0.0
      %2112 = vmatpush1.msra.mxu0 0.0
      %2113 = vmatprep.subr.mxu0 0.0
      %2114 = vmatpush1.msra.mxu0 0.0
      %2115 = vmatprep.subr.mxu0 0.0
      %2116 = vmatpush1.msra.mxu0 0.0
      %2117 = vmatprep.subr.mxu0 0.0
      %2118 = vmatpush1.msra.mxu0 0.0
      %2119 = vmatprep.mubr.f32.mxu0 0.0
      %2120 = vmatmul.mubr.f32.gmra.mrb[0].mxu0 %v2032
      %v2121 = vpop.f32.mrb[0].mxu0
      %v2122 = vadd.f32 0.0, %v2121
      %v2123 = vpop.f32.mrb[0].mxu0
      %2124 = vmatprep.mubr.f32.mxu0 0.0
      %2125 = vmatmul.mubr.f32.gmra.mrb[0].mxu0 %v2035
      %v2126 = vpop.f32.mrb[0].mxu0
      %v2127 = vadd.f32 0.0, %v2126
      %v2128 = vpop.f32.mrb[0].mxu0
      %2129 = vmatprep.mubr.f32.mxu0 0.0
      %2130 = vmatmul.mubr.f32.gmra.mrb[0].mxu0 %v2038
      %v2131 = vpop.f32.mrb[0].mxu0
      %v2132 = vadd.f32 0.0, %v2131
      %v2133 = vpop.f32.mrb[0].mxu0
      %2134 = vmatprep.mubr.f32.mxu0 0.0
      %2135 = vmatmul.mubr.f32.gmra.mrb[0].mxu0 %v2041
      %v2136 = vpop.f32.mrb[0].mxu0
      %v2137 = vadd.f32 0.0, %v2136
      %v2138 = vpop.f32.mrb[0].mxu0
      %2139 = vmatprep.mubr.f32.mxu0 0.0
      %2140 = vmatmul.mubr.f32.gmra.mrb[0].mxu0 %v2044
      %v2141 = vpop.f32.mrb[0].mxu0
      %v2142 = vadd.f32 0.0, %v2141
      %v2143 = vpop.f32.mrb[0].mxu0
      %2144 = vmatprep.mubr.f32.mxu0 0.0
      %2145 = vmatmul.mubr.f32.gmra.mrb[0].mxu0 %v2047
      %v2146 = vpop.f32.mrb[0].mxu0
      %v2147 = vadd.f32 0.0, %v2146
      %v2148 = vpop.f32.mrb[0].mxu0
      %2149 = vmatprep.mubr.f32.mxu0 0.0
      %2150 = vmatmul.mubr.f32.gmra.mrb[0].mxu0 %v2050
      %v2151 = vpop.f32.mrb[0].mxu0
      %v2152 = vadd.f32 0.0, %v2151
      %v2153 = vpop.f32.mrb[0].mxu0
      %2154 = vmatprep.mubr.f32.mxu0 0.0
      %2155 = vmatmul.mubr.f32.gmra.mrb[0].mxu0 %v2053
      %v2156 = vpop.f32.mrb[0].mxu0
      %v2157 = vadd.f32 0.0, %v2156
      %v2158 = vpop.f32.mrb[0].mxu0
      %2159 = vdwg.mxu0
      %s2160 = scalar_lea.vmem %s525, 8
      %v2161 = vld [vmem:[%s2160] sm:$0xff]
      %v2163 = vsel %vm1079, %v2122, 0
      %v2166 = vsel %vm1079, %v2127, 0
      %v2169 = vsel %vm1079, %v2132, 0
      %v2172 = vsel %vm1079, %v2137, 0
      %v2175 = vsel %vm1079, %v2142, 0
      %v2178 = vsel %vm1079, %v2147, 0
      %v2181 = vsel %vm1079, %v2152, 0
      %v2184 = vsel %vm1079, %v2157, 0
      %2186 = vmatprep.subr.mxu0 0.0
      %2187 = vmatpush1.msra.mxu0 %v2161
      %2188 = vmatprep.subr.mxu0 0.0
      %2189 = vmatpush1.msra.mxu0 0.0
      %2190 = vmatprep.subr.mxu0 0.0
      %2191 = vmatpush1.msra.mxu0 0.0
      %2192 = vmatprep.subr.mxu0 0.0
      %2193 = vmatpush1.msra.mxu0 0.0
      %2194 = vmatprep.subr.mxu0 0.0
      %2195 = vmatpush1.msra.mxu0 0.0
      %2196 = vmatprep.subr.mxu0 0.0
      %2197 = vmatpush1.msra.mxu0 0.0
      %2198 = vmatprep.subr.mxu0 0.0
      %2199 = vmatpush1.msra.mxu0 0.0
      %2200 = vmatprep.subr.mxu0 0.0
      %2201 = vmatpush1.msra.mxu0 0.0
      %2202 = vmatprep.subr.mxu0 0.0
      %2203 = vmatpush1.msra.mxu0 0.0
      %2204 = vmatprep.subr.mxu0 0.0
      %2205 = vmatpush1.msra.mxu0 0.0
      %2206 = vmatprep.subr.mxu0 0.0
      %2207 = vmatpush1.msra.mxu0 0.0
      %2208 = vmatprep.subr.mxu0 0.0
      %2209 = vmatpush1.msra.mxu0 0.0
      %2210 = vmatprep.subr.mxu0 0.0
      %2211 = vmatpush1.msra.mxu0 0.0
      %2212 = vmatprep.subr.mxu0 0.0
      %2213 = vmatpush1.msra.mxu0 0.0
      %2214 = vmatprep.subr.mxu0 0.0
      %2215 = vmatpush1.msra.mxu0 0.0
      %2216 = vmatprep.subr.mxu0 0.0
      %2217 = vmatpush1.msra.mxu0 0.0
      %2218 = vmatprep.subr.mxu0 0.0
      %2219 = vmatpush1.msra.mxu0 0.0
      %2220 = vmatprep.subr.mxu0 0.0
      %2221 = vmatpush1.msra.mxu0 0.0
      %2222 = vmatprep.subr.mxu0 0.0
      %2223 = vmatpush1.msra.mxu0 0.0
      %2224 = vmatprep.subr.mxu0 0.0
      %2225 = vmatpush1.msra.mxu0 0.0
      %2226 = vmatprep.subr.mxu0 0.0
      %2227 = vmatpush1.msra.mxu0 0.0
      %2228 = vmatprep.subr.mxu0 0.0
      %2229 = vmatpush1.msra.mxu0 0.0
      %2230 = vmatprep.subr.mxu0 0.0
      %2231 = vmatpush1.msra.mxu0 0.0
      %2232 = vmatprep.subr.mxu0 0.0
      %2233 = vmatpush1.msra.mxu0 0.0
      %2234 = vmatprep.subr.mxu0 0.0
      %2235 = vmatpush1.msra.mxu0 0.0
      %2236 = vmatprep.subr.mxu0 0.0
      %2237 = vmatpush1.msra.mxu0 0.0
      %2238 = vmatprep.subr.mxu0 0.0
      %2239 = vmatpush1.msra.mxu0 0.0
      %2240 = vmatprep.subr.mxu0 0.0
      %2241 = vmatpush1.msra.mxu0 0.0
      %2242 = vmatprep.subr.mxu0 0.0
      %2243 = vmatpush1.msra.mxu0 0.0
      %2244 = vmatprep.subr.mxu0 0.0
      %2245 = vmatpush1.msra.mxu0 0.0
      %2246 = vmatprep.subr.mxu0 0.0
      %2247 = vmatpush1.msra.mxu0 0.0
      %2248 = vmatprep.subr.mxu0 0.0
      %2249 = vmatpush1.msra.mxu0 0.0
      %2250 = vmatprep.mubr.f32.mxu0 0.0
      %2251 = vmatmul.mubr.f32.gmra.mrb[0].mxu0 %v2163
      %v2252 = vpop.f32.mrb[0].mxu0
      %v2253 = vadd.f32 0.0, %v2252
      %v2254 = vpop.f32.mrb[0].mxu0
      %2255 = vmatprep.mubr.f32.mxu0 0.0
      %2256 = vmatmul.mubr.f32.gmra.mrb[0].mxu0 %v2166
      %v2257 = vpop.f32.mrb[0].mxu0
      %v2258 = vadd.f32 0.0, %v2257
      %v2259 = vpop.f32.mrb[0].mxu0
      %2260 = vmatprep.mubr.f32.mxu0 0.0
      %2261 = vmatmul.mubr.f32.gmra.mrb[0].mxu0 %v2169
      %v2262 = vpop.f32.mrb[0].mxu0
      %v2263 = vadd.f32 0.0, %v2262
      %v2264 = vpop.f32.mrb[0].mxu0
      %2265 = vmatprep.mubr.f32.mxu0 0.0
      %2266 = vmatmul.mubr.f32.gmra.mrb[0].mxu0 %v2172
      %v2267 = vpop.f32.mrb[0].mxu0
      %v2268 = vadd.f32 0.0, %v2267
      %v2269 = vpop.f32.mrb[0].mxu0
      %2270 = vmatprep.mubr.f32.mxu0 0.0
      %2271 = vmatmul.mubr.f32.gmra.mrb[0].mxu0 %v2175
      %v2272 = vpop.f32.mrb[0].mxu0
      %v2273 = vadd.f32 0.0, %v2272
      %v2274 = vpop.f32.mrb[0].mxu0
      %2275 = vmatprep.mubr.f32.mxu0 0.0
      %2276 = vmatmul.mubr.f32.gmra.mrb[0].mxu0 %v2178
      %v2277 = vpop.f32.mrb[0].mxu0
      %v2278 = vadd.f32 0.0, %v2277
      %v2279 = vpop.f32.mrb[0].mxu0
      %2280 = vmatprep.mubr.f32.mxu0 0.0
      %2281 = vmatmul.mubr.f32.gmra.mrb[0].mxu0 %v2181
      %v2282 = vpop.f32.mrb[0].mxu0
      %v2283 = vadd.f32 0.0, %v2282
      %v2284 = vpop.f32.mrb[0].mxu0
      %2285 = vmatprep.mubr.f32.mxu0 0.0
      %2286 = vmatmul.mubr.f32.gmra.mrb[0].mxu0 %v2184
      %v2287 = vpop.f32.mrb[0].mxu0
      %v2288 = vadd.f32 0.0, %v2287
      %v2289 = vpop.f32.mrb[0].mxu0
      %2290 = vdwg.mxu0
      %v2292 = vsel %vm1079, %v1413, 0
      %v2295 = vsel %vm1079, %v1418, 0
      %v2298 = vsel %vm1079, %v1423, 0
      %v2301 = vsel %vm1079, %v1428, 0
      %v2304 = vsel %vm1079, %v1433, 0
      %v2307 = vsel %vm1079, %v1438, 0
      %v2310 = vsel %vm1079, %v1443, 0
      %v2313 = vsel %vm1079, %v1448, 0
      %2315 = vmatprep.subr.mxu0 0.0
      %2316 = vmatpush1.msra.mxu0 %v1451
      %2317 = vmatprep.subr.mxu0 0.0
      %2318 = vmatpush1.msra.mxu0 0.0
      %2319 = vmatprep.subr.mxu0 0.0
      %2320 = vmatpush1.msra.mxu0 0.0
      %2321 = vmatprep.subr.mxu0 0.0
      %2322 = vmatpush1.msra.mxu0 0.0
      %2323 = vmatprep.subr.mxu0 0.0
      %2324 = vmatpush1.msra.mxu0 0.0
      %2325 = vmatprep.subr.mxu0 0.0
      %2326 = vmatpush1.msra.mxu0 0.0
      %2327 = vmatprep.subr.mxu0 0.0
      %2328 = vmatpush1.msra.mxu0 0.0
      %2329 = vmatprep.subr.mxu0 0.0
      %2330 = vmatpush1.msra.mxu0 0.0
      %2331 = vmatprep.subr.mxu0 0.0
      %2332 = vmatpush1.msra.mxu0 0.0
      %2333 = vmatprep.subr.mxu0 0.0
      %2334 = vmatpush1.msra.mxu0 0.0
      %2335 = vmatprep.subr.mxu0 0.0
      %2336 = vmatpush1.msra.mxu0 0.0
      %2337 = vmatprep.subr.mxu0 0.0
      %2338 = vmatpush1.msra.mxu0 0.0
      %2339 = vmatprep.subr.mxu0 0.0
      %2340 = vmatpush1.msra.mxu0 0.0
      %2341 = vmatprep.subr.mxu0 0.0
      %2342 = vmatpush1.msra.mxu0 0.0
      %2343 = vmatprep.subr.mxu0 0.0
      %2344 = vmatpush1.msra.mxu0 0.0
      %2345 = vmatprep.subr.mxu0 0.0
      %2346 = vmatpush1.msra.mxu0 0.0
      %2347 = vmatprep.subr.mxu0 0.0
      %2348 = vmatpush1.msra.mxu0 0.0
      %2349 = vmatprep.subr.mxu0 0.0
      %2350 = vmatpush1.msra.mxu0 0.0
      %2351 = vmatprep.subr.mxu0 0.0
      %2352 = vmatpush1.msra.mxu0 0.0
      %2353 = vmatprep.subr.mxu0 0.0
      %2354 = vmatpush1.msra.mxu0 0.0
      %2355 = vmatprep.subr.mxu0 0.0
      %2356 = vmatpush1.msra.mxu0 0.0
      %2357 = vmatprep.subr.mxu0 0.0
      %2358 = vmatpush1.msra.mxu0 0.0
      %2359 = vmatprep.subr.mxu0 0.0
      %2360 = vmatpush1.msra.mxu0 0.0
      %2361 = vmatprep.subr.mxu0 0.0
      %2362 = vmatpush1.msra.mxu0 0.0
      %2363 = vmatprep.subr.mxu0 0.0
      %2364 = vmatpush1.msra.mxu0 0.0
      %2365 = vmatprep.subr.mxu0 0.0
      %2366 = vmatpush1.msra.mxu0 0.0
      %2367 = vmatprep.subr.mxu0 0.0
      %2368 = vmatpush1.msra.mxu0 0.0
      %2369 = vmatprep.subr.mxu0 0.0
      %2370 = vmatpush1.msra.mxu0 0.0
      %2371 = vmatprep.subr.mxu0 0.0
      %2372 = vmatpush1.msra.mxu0 0.0
      %2373 = vmatprep.subr.mxu0 0.0
      %2374 = vmatpush1.msra.mxu0 0.0
      %2375 = vmatprep.subr.mxu0 0.0
      %2376 = vmatpush1.msra.mxu0 0.0
      %2377 = vmatprep.subr.mxu0 0.0
      %2378 = vmatpush1.msra.mxu0 0.0
      %2379 = vmatprep.mubr.f32.mxu0 0.0
      %2380 = vmatmul.mubr.f32.gmra.mrb[0].mxu0 %v2292
      %v2381 = vpop.f32.mrb[0].mxu0
      %v2382 = vadd.f32 %v2253, %v2381
      %v2383 = vpop.f32.mrb[0].mxu0
      %2384 = vmatprep.mubr.f32.mxu0 0.0
      %2385 = vmatmul.mubr.f32.gmra.mrb[0].mxu0 %v2295
      %v2386 = vpop.f32.mrb[0].mxu0
      %v2387 = vadd.f32 %v2258, %v2386
      %v2388 = vpop.f32.mrb[0].mxu0
      %2389 = vmatprep.mubr.f32.mxu0 0.0
      %2390 = vmatmul.mubr.f32.gmra.mrb[0].mxu0 %v2298
      %v2391 = vpop.f32.mrb[0].mxu0
      %v2392 = vadd.f32 %v2263, %v2391
      %v2393 = vpop.f32.mrb[0].mxu0
      %2394 = vmatprep.mubr.f32.mxu0 0.0
      %2395 = vmatmul.mubr.f32.gmra.mrb[0].mxu0 %v2301
      %v2396 = vpop.f32.mrb[0].mxu0
      %v2397 = vadd.f32 %v2268, %v2396
      %v2398 = vpop.f32.mrb[0].mxu0
      %2399 = vmatprep.mubr.f32.mxu0 0.0
      %2400 = vmatmul.mubr.f32.gmra.mrb[0].mxu0 %v2304
      %v2401 = vpop.f32.mrb[0].mxu0
      %v2402 = vadd.f32 %v2273, %v2401
      %v2403 = vpop.f32.mrb[0].mxu0
      %2404 = vmatprep.mubr.f32.mxu0 0.0
      %2405 = vmatmul.mubr.f32.gmra.mrb[0].mxu0 %v2307
      %v2406 = vpop.f32.mrb[0].mxu0
      %v2407 = vadd.f32 %v2278, %v2406
      %v2408 = vpop.f32.mrb[0].mxu0
      %2409 = vmatprep.mubr.f32.mxu0 0.0
      %2410 = vmatmul.mubr.f32.gmra.mrb[0].mxu0 %v2310
      %v2411 = vpop.f32.mrb[0].mxu0
      %v2412 = vadd.f32 %v2283, %v2411
      %v2413 = vpop.f32.mrb[0].mxu0
      %2414 = vmatprep.mubr.f32.mxu0 0.0
      %2415 = vmatmul.mubr.f32.gmra.mrb[0].mxu0 %v2313
      %v2416 = vpop.f32.mrb[0].mxu0
      %v2417 = vadd.f32 %v2288, %v2416
      %v2418 = vpop.f32.mrb[0].mxu0
      %2419 = vdwg.mxu0
      %s2420 = scalar_lea.vmem %s510, 64
      %v2421 = vld [vmem:[%s2420] sm:$0xff]
      %v2422 = vld [vmem:[%s2420 + $0x8] sm:$0xff]
      %v2423 = vld [vmem:[%s2420 + $0x10] sm:$0xff]
      %v2424 = vld [vmem:[%s2420 + $0x18] sm:$0xff]
      %2425 = vmatprep.subr.mxu0 0.0
      %2426 = vmatpush1.msra.mxu0 %v2421
      %2427 = vmatprep.subr.mxu0 0.0
      %2428 = vmatpush1.msra.mxu0 %v2422
      %2429 = vmatprep.subr.mxu0 0.0
      %2430 = vmatpush1.msra.mxu0 %v2423
      %2431 = vmatprep.subr.mxu0 0.0
      %2432 = vmatpush1.msra.mxu0 %v2424
      %2433 = vmatprep.subr.mxu0 0.0
      %2434 = vmatpush1.msra.mxu0 0.0
      %2435 = vmatprep.subr.mxu0 0.0
      %2436 = vmatpush1.msra.mxu0 0.0
      %2437 = vmatprep.subr.mxu0 0.0
      %2438 = vmatpush1.msra.mxu0 0.0
      %2439 = vmatprep.subr.mxu0 0.0
      %2440 = vmatpush1.msra.mxu0 0.0
      %2441 = vmatprep.subr.mxu0 0.0
      %2442 = vmatpush1.msra.mxu0 0.0
      %2443 = vmatprep.subr.mxu0 0.0
      %2444 = vmatpush1.msra.mxu0 0.0
      %2445 = vmatprep.subr.mxu0 0.0
      %2446 = vmatpush1.msra.mxu0 0.0
      %2447 = vmatprep.subr.mxu0 0.0
      %2448 = vmatpush1.msra.mxu0 0.0
      %2449 = vmatprep.subr.mxu0 0.0
      %2450 = vmatpush1.msra.mxu0 0.0
      %2451 = vmatprep.subr.mxu0 0.0
      %2452 = vmatpush1.msra.mxu0 0.0
      %2453 = vmatprep.subr.mxu0 0.0
      %2454 = vmatpush1.msra.mxu0 0.0
      %2455 = vmatprep.subr.mxu0 0.0
      %2456 = vmatpush1.msra.mxu0 0.0
      %2457 = vmatprep.subr.mxu0 0.0
      %2458 = vmatpush1.msra.mxu0 0.0
      %2459 = vmatprep.subr.mxu0 0.0
      %2460 = vmatpush1.msra.mxu0 0.0
      %2461 = vmatprep.subr.mxu0 0.0
      %2462 = vmatpush1.msra.mxu0 0.0
      %2463 = vmatprep.subr.mxu0 0.0
      %2464 = vmatpush1.msra.mxu0 0.0
      %2465 = vmatprep.subr.mxu0 0.0
      %2466 = vmatpush1.msra.mxu0 0.0
      %2467 = vmatprep.subr.mxu0 0.0
      %2468 = vmatpush1.msra.mxu0 0.0
      %2469 = vmatprep.subr.mxu0 0.0
      %2470 = vmatpush1.msra.mxu0 0.0
      %2471 = vmatprep.subr.mxu0 0.0
      %2472 = vmatpush1.msra.mxu0 0.0
      %2473 = vmatprep.subr.mxu0 0.0
      %2474 = vmatpush1.msra.mxu0 0.0
      %2475 = vmatprep.subr.mxu0 0.0
      %2476 = vmatpush1.msra.mxu0 0.0
      %2477 = vmatprep.subr.mxu0 0.0
      %2478 = vmatpush1.msra.mxu0 0.0
      %2479 = vmatprep.subr.mxu0 0.0
      %2480 = vmatpush1.msra.mxu0 0.0
      %2481 = vmatprep.subr.mxu0 0.0
      %2482 = vmatpush1.msra.mxu0 0.0
      %2483 = vmatprep.subr.mxu0 0.0
      %2484 = vmatpush1.msra.mxu0 0.0
      %2485 = vmatprep.subr.mxu0 0.0
      %2486 = vmatpush1.msra.mxu0 0.0
      %2487 = vmatprep.subr.mxu0 0.0
      %2488 = vmatpush1.msra.mxu0 0.0
      %2489 = vmatprep.mubr.f32.mxu0 0.0
      %2490 = vmatmul.mubr.f32.gmra.mrb[0].mxu0 %v725
      %v2491 = vpop.f32.mrb[0].mxu0
      %v2492 = vadd.f32 0.0, %v2491
      %v2493 = vpop.f32.mrb[0].mxu0
      %2494 = vmatprep.mubr.f32.mxu0 0.0
      %2495 = vmatmul.mubr.f32.gmra.mrb[0].mxu0 %v728
      %v2496 = vpop.f32.mrb[0].mxu0
      %v2497 = vadd.f32 0.0, %v2496
      %v2498 = vpop.f32.mrb[0].mxu0
      %2499 = vmatprep.mubr.f32.mxu0 0.0
      %2500 = vmatmul.mubr.f32.gmra.mrb[0].mxu0 %v731
      %v2501 = vpop.f32.mrb[0].mxu0
      %v2502 = vadd.f32 0.0, %v2501
      %v2503 = vpop.f32.mrb[0].mxu0
      %2504 = vmatprep.mubr.f32.mxu0 0.0
      %2505 = vmatmul.mubr.f32.gmra.mrb[0].mxu0 %v734
      %v2506 = vpop.f32.mrb[0].mxu0
      %v2507 = vadd.f32 0.0, %v2506
      %v2508 = vpop.f32.mrb[0].mxu0
      %2509 = vmatprep.mubr.f32.mxu0 0.0
      %2510 = vmatmul.mubr.f32.gmra.mrb[0].mxu0 %v737
      %v2511 = vpop.f32.mrb[0].mxu0
      %v2512 = vadd.f32 0.0, %v2511
      %v2513 = vpop.f32.mrb[0].mxu0
      %2514 = vmatprep.mubr.f32.mxu0 0.0
      %2515 = vmatmul.mubr.f32.gmra.mrb[0].mxu0 %v740
      %v2516 = vpop.f32.mrb[0].mxu0
      %v2517 = vadd.f32 0.0, %v2516
      %v2518 = vpop.f32.mrb[0].mxu0
      %2519 = vmatprep.mubr.f32.mxu0 0.0
      %2520 = vmatmul.mubr.f32.gmra.mrb[0].mxu0 %v743
      %v2521 = vpop.f32.mrb[0].mxu0
      %v2522 = vadd.f32 0.0, %v2521
      %v2523 = vpop.f32.mrb[0].mxu0
      %2524 = vmatprep.mubr.f32.mxu0 0.0
      %2525 = vmatmul.mubr.f32.gmra.mrb[0].mxu0 %v746
      %v2526 = vpop.f32.mrb[0].mxu0
      %v2527 = vadd.f32 0.0, %v2526
      %v2528 = vpop.f32.mrb[0].mxu0
      %2529 = vdwg.mxu0
      %v2530 = vmul.f32 %v2492, 0.35355338
      %v2531 = vmul.f32 %v2497, 0.35355338
      %v2532 = vmul.f32 %v2502, 0.35355338
      %v2533 = vmul.f32 %v2507, 0.35355338
      %v2534 = vmul.f32 %v2512, 0.35355338
      %v2535 = vmul.f32 %v2517, 0.35355338
      %v2536 = vmul.f32 %v2522, 0.35355338
      %v2537 = vmul.f32 %v2527, 0.35355338
      %s2538 = scalar_lea.vmem %s515, 64
      %v2539 = vld [vmem:[%s2538] sm:$0xff]
      %v2540 = vld [vmem:[%s2538 + $0x8] sm:$0xff]
      %v2541 = vld [vmem:[%s2538 + $0x10] sm:$0xff]
      %v2542 = vld [vmem:[%s2538 + $0x18] sm:$0xff]
      %2543 = vmatprep.subr.mxu0 0.0
      %2544 = vmatpush1.msra.mxu0 %v2539
      %2545 = vmatprep.subr.mxu0 0.0
      %2546 = vmatpush1.msra.mxu0 %v2540
      %2547 = vmatprep.subr.mxu0 0.0
      %2548 = vmatpush1.msra.mxu0 %v2541
      %2549 = vmatprep.subr.mxu0 0.0
      %2550 = vmatpush1.msra.mxu0 %v2542
      %2551 = vmatprep.subr.mxu0 0.0
      %2552 = vmatpush1.msra.mxu0 0.0
      %2553 = vmatprep.subr.mxu0 0.0
      %2554 = vmatpush1.msra.mxu0 0.0
      %2555 = vmatprep.subr.mxu0 0.0
      %2556 = vmatpush1.msra.mxu0 0.0
      %2557 = vmatprep.subr.mxu0 0.0
      %2558 = vmatpush1.msra.mxu0 0.0
      %2559 = vmatprep.subr.mxu0 0.0
      %2560 = vmatpush1.msra.mxu0 0.0
      %2561 = vmatprep.subr.mxu0 0.0
      %2562 = vmatpush1.msra.mxu0 0.0
      %2563 = vmatprep.subr.mxu0 0.0
      %2564 = vmatpush1.msra.mxu0 0.0
      %2565 = vmatprep.subr.mxu0 0.0
      %2566 = vmatpush1.msra.mxu0 0.0
      %2567 = vmatprep.subr.mxu0 0.0
      %2568 = vmatpush1.msra.mxu0 0.0
      %2569 = vmatprep.subr.mxu0 0.0
      %2570 = vmatpush1.msra.mxu0 0.0
      %2571 = vmatprep.subr.mxu0 0.0
      %2572 = vmatpush1.msra.mxu0 0.0
      %2573 = vmatprep.subr.mxu0 0.0
      %2574 = vmatpush1.msra.mxu0 0.0
      %2575 = vmatprep.subr.mxu0 0.0
      %2576 = vmatpush1.msra.mxu0 0.0
      %2577 = vmatprep.subr.mxu0 0.0
      %2578 = vmatpush1.msra.mxu0 0.0
      %2579 = vmatprep.subr.mxu0 0.0
      %2580 = vmatpush1.msra.mxu0 0.0
      %2581 = vmatprep.subr.mxu0 0.0
      %2582 = vmatpush1.msra.mxu0 0.0
      %2583 = vmatprep.subr.mxu0 0.0
      %2584 = vmatpush1.msra.mxu0 0.0
      %2585 = vmatprep.subr.mxu0 0.0
      %2586 = vmatpush1.msra.mxu0 0.0
      %2587 = vmatprep.subr.mxu0 0.0
      %2588 = vmatpush1.msra.mxu0 0.0
      %2589 = vmatprep.subr.mxu0 0.0
      %2590 = vmatpush1.msra.mxu0 0.0
      %2591 = vmatprep.subr.mxu0 0.0
      %2592 = vmatpush1.msra.mxu0 0.0
      %2593 = vmatprep.subr.mxu0 0.0
      %2594 = vmatpush1.msra.mxu0 0.0
      %2595 = vmatprep.subr.mxu0 0.0
      %2596 = vmatpush1.msra.mxu0 0.0
      %2597 = vmatprep.subr.mxu0 0.0
      %2598 = vmatpush1.msra.mxu0 0.0
      %2599 = vmatprep.subr.mxu0 0.0
      %2600 = vmatpush1.msra.mxu0 0.0
      %2601 = vmatprep.subr.mxu0 0.0
      %2602 = vmatpush1.msra.mxu0 0.0
      %2603 = vmatprep.subr.mxu0 0.0
      %2604 = vmatpush1.msra.mxu0 0.0
      %2605 = vmatprep.subr.mxu0 0.0
      %2606 = vmatpush1.msra.mxu0 0.0
      %2607 = vmatprep.mubr.f32.mxu0 0.0
      %2608 = vmatmul.mubr.f32.gmra.mrb[0].mxu0 %v725
      %v2609 = vpop.f32.mrb[0].mxu0
      %v2610 = vadd.f32 0.0, %v2609
      %v2611 = vpop.f32.mrb[0].mxu0
      %2612 = vmatprep.mubr.f32.mxu0 0.0
      %2613 = vmatmul.mubr.f32.gmra.mrb[0].mxu0 %v728
      %v2614 = vpop.f32.mrb[0].mxu0
      %v2615 = vadd.f32 0.0, %v2614
      %v2616 = vpop.f32.mrb[0].mxu0
      %2617 = vmatprep.mubr.f32.mxu0 0.0
      %2618 = vmatmul.mubr.f32.gmra.mrb[0].mxu0 %v731
      %v2619 = vpop.f32.mrb[0].mxu0
      %v2620 = vadd.f32 0.0, %v2619
      %v2621 = vpop.f32.mrb[0].mxu0
      %2622 = vmatprep.mubr.f32.mxu0 0.0
      %2623 = vmatmul.mubr.f32.gmra.mrb[0].mxu0 %v734
      %v2624 = vpop.f32.mrb[0].mxu0
      %v2625 = vadd.f32 0.0, %v2624
      %v2626 = vpop.f32.mrb[0].mxu0
      %2627 = vmatprep.mubr.f32.mxu0 0.0
      %2628 = vmatmul.mubr.f32.gmra.mrb[0].mxu0 %v737
      %v2629 = vpop.f32.mrb[0].mxu0
      %v2630 = vadd.f32 0.0, %v2629
      %v2631 = vpop.f32.mrb[0].mxu0
      %2632 = vmatprep.mubr.f32.mxu0 0.0
      %2633 = vmatmul.mubr.f32.gmra.mrb[0].mxu0 %v740
      %v2634 = vpop.f32.mrb[0].mxu0
      %v2635 = vadd.f32 0.0, %v2634
      %v2636 = vpop.f32.mrb[0].mxu0
      %2637 = vmatprep.mubr.f32.mxu0 0.0
      %2638 = vmatmul.mubr.f32.gmra.mrb[0].mxu0 %v743
      %v2639 = vpop.f32.mrb[0].mxu0
      %v2640 = vadd.f32 0.0, %v2639
      %v2641 = vpop.f32.mrb[0].mxu0
      %2642 = vmatprep.mubr.f32.mxu0 0.0
      %2643 = vmatmul.mubr.f32.gmra.mrb[0].mxu0 %v746
      %v2644 = vpop.f32.mrb[0].mxu0
      %v2645 = vadd.f32 0.0, %v2644
      %v2646 = vpop.f32.mrb[0].mxu0
      %2647 = vdwg.mxu0
      %s2648 = scalar_lea.vmem %s520, 64
      %v2649 = vld [vmem:[%s2648] sm:$0xff]
      %v2650 = vld [vmem:[%s2648 + $0x8] sm:$0xff]
      %v2651 = vld [vmem:[%s2648 + $0x10] sm:$0xff]
      %v2652 = vld [vmem:[%s2648 + $0x18] sm:$0xff]
      %2653 = vmatprep.subr.mxu0 0.0
      %2654 = vmatpush1.msra.mxu0 %v2649
      %2655 = vmatprep.subr.mxu0 0.0
      %2656 = vmatpush1.msra.mxu0 %v2650
      %2657 = vmatprep.subr.mxu0 0.0
      %2658 = vmatpush1.msra.mxu0 %v2651
      %2659 = vmatprep.subr.mxu0 0.0
      %2660 = vmatpush1.msra.mxu0 %v2652
      %2661 = vmatprep.subr.mxu0 0.0
      %2662 = vmatpush1.msra.mxu0 0.0
      %2663 = vmatprep.subr.mxu0 0.0
      %2664 = vmatpush1.msra.mxu0 0.0
      %2665 = vmatprep.subr.mxu0 0.0
      %2666 = vmatpush1.msra.mxu0 0.0
      %2667 = vmatprep.subr.mxu0 0.0
      %2668 = vmatpush1.msra.mxu0 0.0
      %2669 = vmatprep.subr.mxu0 0.0
      %2670 = vmatpush1.msra.mxu0 0.0
      %2671 = vmatprep.subr.mxu0 0.0
      %2672 = vmatpush1.msra.mxu0 0.0
      %2673 = vmatprep.subr.mxu0 0.0
      %2674 = vmatpush1.msra.mxu0 0.0
      %2675 = vmatprep.subr.mxu0 0.0
      %2676 = vmatpush1.msra.mxu0 0.0
      %2677 = vmatprep.subr.mxu0 0.0
      %2678 = vmatpush1.msra.mxu0 0.0
      %2679 = vmatprep.subr.mxu0 0.0
      %2680 = vmatpush1.msra.mxu0 0.0
      %2681 = vmatprep.subr.mxu0 0.0
      %2682 = vmatpush1.msra.mxu0 0.0
      %2683 = vmatprep.subr.mxu0 0.0
      %2684 = vmatpush1.msra.mxu0 0.0
      %2685 = vmatprep.subr.mxu0 0.0
      %2686 = vmatpush1.msra.mxu0 0.0
      %2687 = vmatprep.subr.mxu0 0.0
      %2688 = vmatpush1.msra.mxu0 0.0
      %2689 = vmatprep.subr.mxu0 0.0
      %2690 = vmatpush1.msra.mxu0 0.0
      %2691 = vmatprep.subr.mxu0 0.0
      %2692 = vmatpush1.msra.mxu0 0.0
      %2693 = vmatprep.subr.mxu0 0.0
      %2694 = vmatpush1.msra.mxu0 0.0
      %2695 = vmatprep.subr.mxu0 0.0
      %2696 = vmatpush1.msra.mxu0 0.0
      %2697 = vmatprep.subr.mxu0 0.0
      %2698 = vmatpush1.msra.mxu0 0.0
      %2699 = vmatprep.subr.mxu0 0.0
      %2700 = vmatpush1.msra.mxu0 0.0
      %2701 = vmatprep.subr.mxu0 0.0
      %2702 = vmatpush1.msra.mxu0 0.0
      %2703 = vmatprep.subr.mxu0 0.0
      %2704 = vmatpush1.msra.mxu0 0.0
      %2705 = vmatprep.subr.mxu0 0.0
      %2706 = vmatpush1.msra.mxu0 0.0
      %2707 = vmatprep.subr.mxu0 0.0
      %2708 = vmatpush1.msra.mxu0 0.0
      %2709 = vmatprep.subr.mxu0 0.0
      %2710 = vmatpush1.msra.mxu0 0.0
      %2711 = vmatprep.subr.mxu0 0.0
      %2712 = vmatpush1.msra.mxu0 0.0
      %2713 = vmatprep.subr.mxu0 0.0
      %2714 = vmatpush1.msra.mxu0 0.0
      %2715 = vmatprep.subr.mxu0 0.0
      %2716 = vmatpush1.msra.mxu0 0.0
      %2717 = vmatprep.mubr.f32.mxu0 0.0
      %2718 = vmatmul.mubr.f32.gmra.mrb[0].mxu0 %v725
      %v2719 = vpop.f32.mrb[0].mxu0
      %v2720 = vadd.f32 0.0, %v2719
      %v2721 = vpop.f32.mrb[0].mxu0
      %2722 = vmatprep.mubr.f32.mxu0 0.0
      %2723 = vmatmul.mubr.f32.gmra.mrb[0].mxu0 %v728
      %v2724 = vpop.f32.mrb[0].mxu0
      %v2725 = vadd.f32 0.0, %v2724
      %v2726 = vpop.f32.mrb[0].mxu0
      %2727 = vmatprep.mubr.f32.mxu0 0.0
      %2728 = vmatmul.mubr.f32.gmra.mrb[0].mxu0 %v731
      %v2729 = vpop.f32.mrb[0].mxu0
      %v2730 = vadd.f32 0.0, %v2729
      %v2731 = vpop.f32.mrb[0].mxu0
      %2732 = vmatprep.mubr.f32.mxu0 0.0
      %2733 = vmatmul.mubr.f32.gmra.mrb[0].mxu0 %v734
      %v2734 = vpop.f32.mrb[0].mxu0
      %v2735 = vadd.f32 0.0, %v2734
      %v2736 = vpop.f32.mrb[0].mxu0
      %2737 = vmatprep.mubr.f32.mxu0 0.0
      %2738 = vmatmul.mubr.f32.gmra.mrb[0].mxu0 %v737
      %v2739 = vpop.f32.mrb[0].mxu0
      %v2740 = vadd.f32 0.0, %v2739
      %v2741 = vpop.f32.mrb[0].mxu0
      %2742 = vmatprep.mubr.f32.mxu0 0.0
      %2743 = vmatmul.mubr.f32.gmra.mrb[0].mxu0 %v740
      %v2744 = vpop.f32.mrb[0].mxu0
      %v2745 = vadd.f32 0.0, %v2744
      %v2746 = vpop.f32.mrb[0].mxu0
      %2747 = vmatprep.mubr.f32.mxu0 0.0
      %2748 = vmatmul.mubr.f32.gmra.mrb[0].mxu0 %v743
      %v2749 = vpop.f32.mrb[0].mxu0
      %v2750 = vadd.f32 0.0, %v2749
      %v2751 = vpop.f32.mrb[0].mxu0
      %2752 = vmatprep.mubr.f32.mxu0 0.0
      %2753 = vmatmul.mubr.f32.gmra.mrb[0].mxu0 %v746
      %v2754 = vpop.f32.mrb[0].mxu0
      %v2755 = vadd.f32 0.0, %v2754
      %v2756 = vpop.f32.mrb[0].mxu0
      %2757 = vdwg.mxu0
      %v2759 = vsel %vm1079, %v2530, 0
      %v2762 = vsel %vm1079, %v2531, 0
      %v2765 = vsel %vm1079, %v2532, 0
      %v2768 = vsel %vm1079, %v2533, 0
      %v2771 = vsel %vm1079, %v2534, 0
      %v2774 = vsel %vm1079, %v2535, 0
      %v2777 = vsel %vm1079, %v2536, 0
      %v2780 = vsel %vm1079, %v2537, 0
      %v2783 = vsel %vm1079, %v2610, 0
      %v2786 = vsel %vm1079, %v2615, 0
      %v2789 = vsel %vm1079, %v2620, 0
      %v2792 = vsel %vm1079, %v2625, 0
      %v2795 = vsel %vm1079, %v2630, 0
      %v2798 = vsel %vm1079, %v2635, 0
      %v2801 = vsel %vm1079, %v2640, 0
      %v2804 = vsel %vm1079, %v2645, 0
      %2806 = vmatprep.subr.mxu0 0.0
      %2807 = vmatpush1.xpose.msra.mxu0 %v2783
      %2808 = vmatprep.subr.mxu0 0.0
      %2809 = vmatpush1.xpose.msra.mxu0 %v2786
      %2810 = vmatprep.subr.mxu0 0.0
      %2811 = vmatpush1.xpose.msra.mxu0 %v2789
      %2812 = vmatprep.subr.mxu0 0.0
      %2813 = vmatpush1.xpose.msra.mxu0 %v2792
      %2814 = vmatprep.subr.mxu0 0.0
      %2815 = vmatpush1.xpose.msra.mxu0 %v2795
      %2816 = vmatprep.subr.mxu0 0.0
      %2817 = vmatpush1.xpose.msra.mxu0 %v2798
      %2818 = vmatprep.subr.mxu0 0.0
      %2819 = vmatpush1.xpose.msra.mxu0 %v2801
      %2820 = vmatprep.subr.mxu0 0.0
      %2821 = vmatpush1.xpose.msra.mxu0 %v2804
      %2822 = vmatprep.subr.mxu0 0.0
      %2823 = vmatpush1.xpose.msra.mxu0 0.0
      %2824 = vmatprep.subr.mxu0 0.0
      %2825 = vmatpush1.xpose.msra.mxu0 0.0
      %2826 = vmatprep.subr.mxu0 0.0
      %2827 = vmatpush1.xpose.msra.mxu0 0.0
      %2828 = vmatprep.subr.mxu0 0.0
      %2829 = vmatpush1.xpose.msra.mxu0 0.0
      %2830 = vmatprep.subr.mxu0 0.0
      %2831 = vmatpush1.xpose.msra.mxu0 0.0
      %2832 = vmatprep.subr.mxu0 0.0
      %2833 = vmatpush1.xpose.msra.mxu0 0.0
      %2834 = vmatprep.subr.mxu0 0.0
      %2835 = vmatpush1.xpose.msra.mxu0 0.0
      %2836 = vmatprep.subr.mxu0 0.0
      %2837 = vmatpush1.xpose.msra.mxu0 0.0
      %2838 = vmatprep.subr.mxu0 0.0
      %2839 = vmatpush1.xpose.msra.mxu0 0.0
      %2840 = vmatprep.subr.mxu0 0.0
      %2841 = vmatpush1.xpose.msra.mxu0 0.0
      %2842 = vmatprep.subr.mxu0 0.0
      %2843 = vmatpush1.xpose.msra.mxu0 0.0
      %2844 = vmatprep.subr.mxu0 0.0
      %2845 = vmatpush1.xpose.msra.mxu0 0.0
      %2846 = vmatprep.subr.mxu0 0.0
      %2847 = vmatpush1.xpose.msra.mxu0 0.0
      %2848 = vmatprep.subr.mxu0 0.0
      %2849 = vmatpush1.xpose.msra.mxu0 0.0
      %2850 = vmatprep.subr.mxu0 0.0
      %2851 = vmatpush1.xpose.msra.mxu0 0.0
      %2852 = vmatprep.subr.mxu0 0.0
      %2853 = vmatpush1.xpose.msra.mxu0 0.0
      %2854 = vmatprep.subr.mxu0 0.0
      %2855 = vmatpush1.xpose.msra.mxu0 0.0
      %2856 = vmatprep.subr.mxu0 0.0
      %2857 = vmatpush1.xpose.msra.mxu0 0.0
      %2858 = vmatprep.subr.mxu0 0.0
      %2859 = vmatpush1.xpose.msra.mxu0 0.0
      %2860 = vmatprep.subr.mxu0 0.0
      %2861 = vmatpush1.xpose.msra.mxu0 0.0
      %2862 = vmatprep.subr.mxu0 0.0
      %2863 = vmatpush1.xpose.msra.mxu0 0.0
      %2864 = vmatprep.subr.mxu0 0.0
      %2865 = vmatpush1.xpose.msra.mxu0 0.0
      %2866 = vmatprep.subr.mxu0 0.0
      %2867 = vmatpush1.xpose.msra.mxu0 0.0
      %2868 = vmatprep.subr.mxu0 0.0
      %2869 = vmatpush1.xpose.msra.mxu0 0.0
      %2870 = vmatprep.mubr.f32.mxu0 0.0
      %2871 = vmatmul.mubr.f32.gmra.mrb[0].mxu0 %v2759
      %v2872 = vpop.f32.mrb[0].mxu0
      %v2873 = vadd.f32 0.0, %v2872
      %v2874 = vpop.f32.mrb[0].mxu0
      %2875 = vmatprep.mubr.f32.mxu0 0.0
      %2876 = vmatmul.mubr.f32.gmra.mrb[0].mxu0 %v2762
      %v2877 = vpop.f32.mrb[0].mxu0
      %v2878 = vadd.f32 0.0, %v2877
      %v2879 = vpop.f32.mrb[0].mxu0
      %2880 = vmatprep.mubr.f32.mxu0 0.0
      %2881 = vmatmul.mubr.f32.gmra.mrb[0].mxu0 %v2765
      %v2882 = vpop.f32.mrb[0].mxu0
      %v2883 = vadd.f32 0.0, %v2882
      %v2884 = vpop.f32.mrb[0].mxu0
      %2885 = vmatprep.mubr.f32.mxu0 0.0
      %2886 = vmatmul.mubr.f32.gmra.mrb[0].mxu0 %v2768
      %v2887 = vpop.f32.mrb[0].mxu0
      %v2888 = vadd.f32 0.0, %v2887
      %v2889 = vpop.f32.mrb[0].mxu0
      %2890 = vmatprep.mubr.f32.mxu0 0.0
      %2891 = vmatmul.mubr.f32.gmra.mrb[0].mxu0 %v2771
      %v2892 = vpop.f32.mrb[0].mxu0
      %v2893 = vadd.f32 0.0, %v2892
      %v2894 = vpop.f32.mrb[0].mxu0
      %2895 = vmatprep.mubr.f32.mxu0 0.0
      %2896 = vmatmul.mubr.f32.gmra.mrb[0].mxu0 %v2774
      %v2897 = vpop.f32.mrb[0].mxu0
      %v2898 = vadd.f32 0.0, %v2897
      %v2899 = vpop.f32.mrb[0].mxu0
      %2900 = vmatprep.mubr.f32.mxu0 0.0
      %2901 = vmatmul.mubr.f32.gmra.mrb[0].mxu0 %v2777
      %v2902 = vpop.f32.mrb[0].mxu0
      %v2903 = vadd.f32 0.0, %v2902
      %v2904 = vpop.f32.mrb[0].mxu0
      %2905 = vmatprep.mubr.f32.mxu0 0.0
      %2906 = vmatmul.mubr.f32.gmra.mrb[0].mxu0 %v2780
      %v2907 = vpop.f32.mrb[0].mxu0
      %v2908 = vadd.f32 0.0, %v2907
      %v2909 = vpop.f32.mrb[0].mxu0
      %2910 = vdwg.mxu0
      %v2911 = vsel %vm1233, %v2873, -inf
      %2912 = vmax.xlane.f32.xlu0 %v2911
      %v2913 = vpop.xlane.xlu0 %2912
      %v2914 = vsel %vm1233, %v2878, -inf
      %2915 = vmax.xlane.f32.xlu0 %v2914
      %v2916 = vpop.xlane.xlu0 %2915
      %v2917 = vsel %vm1233, %v2883, -inf
      %2918 = vmax.xlane.f32.xlu0 %v2917
      %v2919 = vpop.xlane.xlu0 %2918
      %v2920 = vsel %vm1233, %v2888, -inf
      %2921 = vmax.xlane.f32.xlu0 %v2920
      %v2922 = vpop.xlane.xlu0 %2921
      %v2923 = vsel %vm1233, %v2893, -inf
      %2924 = vmax.xlane.f32.xlu0 %v2923
      %v2925 = vpop.xlane.xlu0 %2924
      %v2926 = vsel %vm1233, %v2898, -inf
      %2927 = vmax.xlane.f32.xlu0 %v2926
      %v2928 = vpop.xlane.xlu0 %2927
      %v2929 = vsel %vm1233, %v2903, -inf
      %2930 = vmax.xlane.f32.xlu0 %v2929
      %v2931 = vpop.xlane.xlu0 %2930
      %v2932 = vsel %vm1233, %v2908, -inf
      %2933 = vmax.xlane.f32.xlu0 %v2932
      %v2934 = vpop.xlane.xlu0 %2933
      %v2935 = vsub.f32 %v2873, %v2913
      %v2936 = vsub.f32 %v2878, %v2916
      %v2937 = vsub.f32 %v2883, %v2919
      %v2938 = vsub.f32 %v2888, %v2922
      %v2939 = vsub.f32 %v2893, %v2925
      %v2940 = vsub.f32 %v2898, %v2928
      %v2941 = vsub.f32 %v2903, %v2931
      %v2942 = vsub.f32 %v2908, %v2934
      %v2943 = vmul.f32 %v2935, 1.442695
      %v2944 = vpow.pop %v2943
      %v2945 = vmul.f32 %v2936, 1.442695
      %v2946 = vpow.pop %v2945
      %v2947 = vmul.f32 %v2937, 1.442695
      %v2948 = vpow.pop %v2947
      %v2949 = vmul.f32 %v2938, 1.442695
      %v2950 = vpow.pop %v2949
      %v2951 = vmul.f32 %v2939, 1.442695
      %v2952 = vpow.pop %v2951
      %v2953 = vmul.f32 %v2940, 1.442695
      %v2954 = vpow.pop %v2953
      %v2955 = vmul.f32 %v2941, 1.442695
      %v2956 = vpow.pop %v2955
      %v2957 = vmul.f32 %v2942, 1.442695
      %v2958 = vpow.pop %v2957
      %v2959 = vsel %vm1233, %v2944, 0.0
      %2960 = vadd.xlane.f32.xlu0 %v2959
      %v2961 = vpop.xlane.xlu0 %2960
      %v2962 = vsel %vm1233, %v2946, 0.0
      %2963 = vadd.xlane.f32.xlu0 %v2962
      %v2964 = vpop.xlane.xlu0 %2963
      %v2965 = vsel %vm1233, %v2948, 0.0
      %2966 = vadd.xlane.f32.xlu0 %v2965
      %v2967 = vpop.xlane.xlu0 %2966
      %v2968 = vsel %vm1233, %v2950, 0.0
      %2969 = vadd.xlane.f32.xlu0 %v2968
      %v2970 = vpop.xlane.xlu0 %2969
      %v2971 = vsel %vm1233, %v2952, 0.0
      %2972 = vadd.xlane.f32.xlu0 %v2971
      %v2973 = vpop.xlane.xlu0 %2972
      %v2974 = vsel %vm1233, %v2954, 0.0
      %2975 = vadd.xlane.f32.xlu0 %v2974
      %v2976 = vpop.xlane.xlu0 %2975
      %v2977 = vsel %vm1233, %v2956, 0.0
      %2978 = vadd.xlane.f32.xlu0 %v2977
      %v2979 = vpop.xlane.xlu0 %2978
      %v2980 = vsel %vm1233, %v2958, 0.0
      %2981 = vadd.xlane.f32.xlu0 %v2980
      %v2982 = vpop.xlane.xlu0 %2981
      %v2983 = vrcp.pop %v2961
      %v2984 = vrcp.pop %v2964
      %v2985 = vrcp.pop %v2967
      %v2986 = vrcp.pop %v2970
      %v2987 = vrcp.pop %v2973
      %v2988 = vrcp.pop %v2976
      %v2989 = vrcp.pop %v2979
      %v2990 = vrcp.pop %v2982
      %v2991 = vmul.f32 %v2944, %v2983
      %v2992 = vmul.f32 %v2946, %v2984
      %v2993 = vmul.f32 %v2948, %v2985
      %v2994 = vmul.f32 %v2950, %v2986
      %v2995 = vmul.f32 %v2952, %v2987
      %v2996 = vmul.f32 %v2954, %v2988
      %v2997 = vmul.f32 %v2956, %v2989
      %v2998 = vmul.f32 %v2958, %v2990
      %v3000 = vsel %vm1233, %v2991, 0
      %v3003 = vsel %vm1233, %v2992, 0
      %v3006 = vsel %vm1233, %v2993, 0
      %v3009 = vsel %vm1233, %v2994, 0
      %v3012 = vsel %vm1233, %v2995, 0
      %v3015 = vsel %vm1233, %v2996, 0
      %v3018 = vsel %vm1233, %v2997, 0
      %v3021 = vsel %vm1233, %v2998, 0
      %3023 = vmatprep.subr.mxu0 0.0
      %3024 = vmatpush1.msra.mxu0 %v2720
      %3025 = vmatprep.subr.mxu0 0.0
      %3026 = vmatpush1.msra.mxu0 %v2725
      %3027 = vmatprep.subr.mxu0 0.0
      %3028 = vmatpush1.msra.mxu0 %v2730
      %3029 = vmatprep.subr.mxu0 0.0
      %3030 = vmatpush1.msra.mxu0 %v2735
      %3031 = vmatprep.subr.mxu0 0.0
      %3032 = vmatpush1.msra.mxu0 %v2740
      %3033 = vmatprep.subr.mxu0 0.0
      %3034 = vmatpush1.msra.mxu0 %v2745
      %3035 = vmatprep.subr.mxu0 0.0
      %3036 = vmatpush1.msra.mxu0 %v2750
      %3037 = vmatprep.subr.mxu0 0.0
      %3038 = vmatpush1.msra.mxu0 %v2755
      %3039 = vmatprep.subr.mxu0 0.0
      %3040 = vmatpush1.msra.mxu0 0.0
      %3041 = vmatprep.subr.mxu0 0.0
      %3042 = vmatpush1.msra.mxu0 0.0
      %3043 = vmatprep.subr.mxu0 0.0
      %3044 = vmatpush1.msra.mxu0 0.0
      %3045 = vmatprep.subr.mxu0 0.0
      %3046 = vmatpush1.msra.mxu0 0.0
      %3047 = vmatprep.subr.mxu0 0.0
      %3048 = vmatpush1.msra.mxu0 0.0
      %3049 = vmatprep.subr.mxu0 0.0
      %3050 = vmatpush1.msra.mxu0 0.0
      %3051 = vmatprep.subr.mxu0 0.0
      %3052 = vmatpush1.msra.mxu0 0.0
      %3053 = vmatprep.subr.mxu0 0.0
      %3054 = vmatpush1.msra.mxu0 0.0
      %3055 = vmatprep.subr.mxu0 0.0
      %3056 = vmatpush1.msra.mxu0 0.0
      %3057 = vmatprep.subr.mxu0 0.0
      %3058 = vmatpush1.msra.mxu0 0.0
      %3059 = vmatprep.subr.mxu0 0.0
      %3060 = vmatpush1.msra.mxu0 0.0
      %3061 = vmatprep.subr.mxu0 0.0
      %3062 = vmatpush1.msra.mxu0 0.0
      %3063 = vmatprep.subr.mxu0 0.0
      %3064 = vmatpush1.msra.mxu0 0.0
      %3065 = vmatprep.subr.mxu0 0.0
      %3066 = vmatpush1.msra.mxu0 0.0
      %3067 = vmatprep.subr.mxu0 0.0
      %3068 = vmatpush1.msra.mxu0 0.0
      %3069 = vmatprep.subr.mxu0 0.0
      %3070 = vmatpush1.msra.mxu0 0.0
      %3071 = vmatprep.subr.mxu0 0.0
      %3072 = vmatpush1.msra.mxu0 0.0
      %3073 = vmatprep.subr.mxu0 0.0
      %3074 = vmatpush1.msra.mxu0 0.0
      %3075 = vmatprep.subr.mxu0 0.0
      %3076 = vmatpush1.msra.mxu0 0.0
      %3077 = vmatprep.subr.mxu0 0.0
      %3078 = vmatpush1.msra.mxu0 0.0
      %3079 = vmatprep.subr.mxu0 0.0
      %3080 = vmatpush1.msra.mxu0 0.0
      %3081 = vmatprep.subr.mxu0 0.0
      %3082 = vmatpush1.msra.mxu0 0.0
      %3083 = vmatprep.subr.mxu0 0.0
      %3084 = vmatpush1.msra.mxu0 0.0
      %3085 = vmatprep.subr.mxu0 0.0
      %3086 = vmatpush1.msra.mxu0 0.0
      %3087 = vmatprep.mubr.f32.mxu0 0.0
      %3088 = vmatmul.mubr.f32.gmra.mrb[0].mxu0 %v3000
      %v3089 = vpop.f32.mrb[0].mxu0
      %v3090 = vadd.f32 0.0, %v3089
      %v3091 = vpop.f32.mrb[0].mxu0
      %3092 = vmatprep.mubr.f32.mxu0 0.0
      %3093 = vmatmul.mubr.f32.gmra.mrb[0].mxu0 %v3003
      %v3094 = vpop.f32.mrb[0].mxu0
      %v3095 = vadd.f32 0.0, %v3094
      %v3096 = vpop.f32.mrb[0].mxu0
      %3097 = vmatprep.mubr.f32.mxu0 0.0
      %3098 = vmatmul.mubr.f32.gmra.mrb[0].mxu0 %v3006
      %v3099 = vpop.f32.mrb[0].mxu0
      %v3100 = vadd.f32 0.0, %v3099
      %v3101 = vpop.f32.mrb[0].mxu0
      %3102 = vmatprep.mubr.f32.mxu0 0.0
      %3103 = vmatmul.mubr.f32.gmra.mrb[0].mxu0 %v3009
      %v3104 = vpop.f32.mrb[0].mxu0
      %v3105 = vadd.f32 0.0, %v3104
      %v3106 = vpop.f32.mrb[0].mxu0
      %3107 = vmatprep.mubr.f32.mxu0 0.0
      %3108 = vmatmul.mubr.f32.gmra.mrb[0].mxu0 %v3012
      %v3109 = vpop.f32.mrb[0].mxu0
      %v3110 = vadd.f32 0.0, %v3109
      %v3111 = vpop.f32.mrb[0].mxu0
      %3112 = vmatprep.mubr.f32.mxu0 0.0
      %3113 = vmatmul.mubr.f32.gmra.mrb[0].mxu0 %v3015
      %v3114 = vpop.f32.mrb[0].mxu0
      %v3115 = vadd.f32 0.0, %v3114
      %v3116 = vpop.f32.mrb[0].mxu0
      %3117 = vmatprep.mubr.f32.mxu0 0.0
      %3118 = vmatmul.mubr.f32.gmra.mrb[0].mxu0 %v3018
      %v3119 = vpop.f32.mrb[0].mxu0
      %v3120 = vadd.f32 0.0, %v3119
      %v3121 = vpop.f32.mrb[0].mxu0
      %3122 = vmatprep.mubr.f32.mxu0 0.0
      %3123 = vmatmul.mubr.f32.gmra.mrb[0].mxu0 %v3021
      %v3124 = vpop.f32.mrb[0].mxu0
      %v3125 = vadd.f32 0.0, %v3124
      %v3126 = vpop.f32.mrb[0].mxu0
      %3127 = vdwg.mxu0
      %s3128 = scalar_lea.vmem %s525, 16
      %v3129 = vld [vmem:[%s3128] sm:$0xff]
      %v3131 = vsel %vm1079, %v3090, 0
      %v3134 = vsel %vm1079, %v3095, 0
      %v3137 = vsel %vm1079, %v3100, 0
      %v3140 = vsel %vm1079, %v3105, 0
      %v3143 = vsel %vm1079, %v3110, 0
      %v3146 = vsel %vm1079, %v3115, 0
      %v3149 = vsel %vm1079, %v3120, 0
      %v3152 = vsel %vm1079, %v3125, 0
      %3154 = vmatprep.subr.mxu0 0.0
      %3155 = vmatpush1.msra.mxu0 %v3129
      %3156 = vmatprep.subr.mxu0 0.0
      %3157 = vmatpush1.msra.mxu0 0.0
      %3158 = vmatprep.subr.mxu0 0.0
      %3159 = vmatpush1.msra.mxu0 0.0
      %3160 = vmatprep.subr.mxu0 0.0
      %3161 = vmatpush1.msra.mxu0 0.0
      %3162 = vmatprep.subr.mxu0 0.0
      %3163 = vmatpush1.msra.mxu0 0.0
      %3164 = vmatprep.subr.mxu0 0.0
      %3165 = vmatpush1.msra.mxu0 0.0
      %3166 = vmatprep.subr.mxu0 0.0
      %3167 = vmatpush1.msra.mxu0 0.0
      %3168 = vmatprep.subr.mxu0 0.0
      %3169 = vmatpush1.msra.mxu0 0.0
      %3170 = vmatprep.subr.mxu0 0.0
      %3171 = vmatpush1.msra.mxu0 0.0
      %3172 = vmatprep.subr.mxu0 0.0
      %3173 = vmatpush1.msra.mxu0 0.0
      %3174 = vmatprep.subr.mxu0 0.0
      %3175 = vmatpush1.msra.mxu0 0.0
      %3176 = vmatprep.subr.mxu0 0.0
      %3177 = vmatpush1.msra.mxu0 0.0
      %3178 = vmatprep.subr.mxu0 0.0
      %3179 = vmatpush1.msra.mxu0 0.0
      %3180 = vmatprep.subr.mxu0 0.0
      %3181 = vmatpush1.msra.mxu0 0.0
      %3182 = vmatprep.subr.mxu0 0.0
      %3183 = vmatpush1.msra.mxu0 0.0
      %3184 = vmatprep.subr.mxu0 0.0
      %3185 = vmatpush1.msra.mxu0 0.0
      %3186 = vmatprep.subr.mxu0 0.0
      %3187 = vmatpush1.msra.mxu0 0.0
      %3188 = vmatprep.subr.mxu0 0.0
      %3189 = vmatpush1.msra.mxu0 0.0
      %3190 = vmatprep.subr.mxu0 0.0
      %3191 = vmatpush1.msra.mxu0 0.0
      %3192 = vmatprep.subr.mxu0 0.0
      %3193 = vmatpush1.msra.mxu0 0.0
      %3194 = vmatprep.subr.mxu0 0.0
      %3195 = vmatpush1.msra.mxu0 0.0
      %3196 = vmatprep.subr.mxu0 0.0
      %3197 = vmatpush1.msra.mxu0 0.0
      %3198 = vmatprep.subr.mxu0 0.0
      %3199 = vmatpush1.msra.mxu0 0.0
      %3200 = vmatprep.subr.mxu0 0.0
      %3201 = vmatpush1.msra.mxu0 0.0
      %3202 = vmatprep.subr.mxu0 0.0
      %3203 = vmatpush1.msra.mxu0 0.0
      %3204 = vmatprep.subr.mxu0 0.0
      %3205 = vmatpush1.msra.mxu0 0.0
      %3206 = vmatprep.subr.mxu0 0.0
      %3207 = vmatpush1.msra.mxu0 0.0
      %3208 = vmatprep.subr.mxu0 0.0
      %3209 = vmatpush1.msra.mxu0 0.0
      %3210 = vmatprep.subr.mxu0 0.0
      %3211 = vmatpush1.msra.mxu0 0.0
      %3212 = vmatprep.subr.mxu0 0.0
      %3213 = vmatpush1.msra.mxu0 0.0
      %3214 = vmatprep.subr.mxu0 0.0
      %3215 = vmatpush1.msra.mxu0 0.0
      %3216 = vmatprep.subr.mxu0 0.0
      %3217 = vmatpush1.msra.mxu0 0.0
      %3218 = vmatprep.mubr.f32.mxu0 0.0
      %3219 = vmatmul.mubr.f32.gmra.mrb[0].mxu0 %v3131
      %v3220 = vpop.f32.mrb[0].mxu0
      %v3221 = vadd.f32 0.0, %v3220
      %v3222 = vpop.f32.mrb[0].mxu0
      %3223 = vmatprep.mubr.f32.mxu0 0.0
      %3224 = vmatmul.mubr.f32.gmra.mrb[0].mxu0 %v3134
      %v3225 = vpop.f32.mrb[0].mxu0
      %v3226 = vadd.f32 0.0, %v3225
      %v3227 = vpop.f32.mrb[0].mxu0
      %3228 = vmatprep.mubr.f32.mxu0 0.0
      %3229 = vmatmul.mubr.f32.gmra.mrb[0].mxu0 %v3137
      %v3230 = vpop.f32.mrb[0].mxu0
      %v3231 = vadd.f32 0.0, %v3230
      %v3232 = vpop.f32.mrb[0].mxu0
      %3233 = vmatprep.mubr.f32.mxu0 0.0
      %3234 = vmatmul.mubr.f32.gmra.mrb[0].mxu0 %v3140
      %v3235 = vpop.f32.mrb[0].mxu0
      %v3236 = vadd.f32 0.0, %v3235
      %v3237 = vpop.f32.mrb[0].mxu0
      %3238 = vmatprep.mubr.f32.mxu0 0.0
      %3239 = vmatmul.mubr.f32.gmra.mrb[0].mxu0 %v3143
      %v3240 = vpop.f32.mrb[0].mxu0
      %v3241 = vadd.f32 0.0, %v3240
      %v3242 = vpop.f32.mrb[0].mxu0
      %3243 = vmatprep.mubr.f32.mxu0 0.0
      %3244 = vmatmul.mubr.f32.gmra.mrb[0].mxu0 %v3146
      %v3245 = vpop.f32.mrb[0].mxu0
      %v3246 = vadd.f32 0.0, %v3245
      %v3247 = vpop.f32.mrb[0].mxu0
      %3248 = vmatprep.mubr.f32.mxu0 0.0
      %3249 = vmatmul.mubr.f32.gmra.mrb[0].mxu0 %v3149
      %v3250 = vpop.f32.mrb[0].mxu0
      %v3251 = vadd.f32 0.0, %v3250
      %v3252 = vpop.f32.mrb[0].mxu0
      %3253 = vmatprep.mubr.f32.mxu0 0.0
      %3254 = vmatmul.mubr.f32.gmra.mrb[0].mxu0 %v3152
      %v3255 = vpop.f32.mrb[0].mxu0
      %v3256 = vadd.f32 0.0, %v3255
      %v3257 = vpop.f32.mrb[0].mxu0
      %3258 = vdwg.mxu0
      %v3259 = vadd.f32 %v2382, %v3221
      %v3260 = vadd.f32 %v2387, %v3226
      %v3261 = vadd.f32 %v2392, %v3231
      %v3262 = vadd.f32 %v2397, %v3236
      %v3263 = vadd.f32 %v2402, %v3241
      %v3264 = vadd.f32 %v2407, %v3246
      %v3265 = vadd.f32 %v2412, %v3251
      %v3266 = vadd.f32 %v2417, %v3256
      %s3267 = scalar_lea.vmem %s510, 96
      %v3268 = vld [vmem:[%s3267] sm:$0xff]
      %v3269 = vld [vmem:[%s3267 + $0x8] sm:$0xff]
      %v3270 = vld [vmem:[%s3267 + $0x10] sm:$0xff]
      %v3271 = vld [vmem:[%s3267 + $0x18] sm:$0xff]
      %3272 = vmatprep.subr.mxu0 0.0
      %3273 = vmatpush1.msra.mxu0 %v3268
      %3274 = vmatprep.subr.mxu0 0.0
      %3275 = vmatpush1.msra.mxu0 %v3269
      %3276 = vmatprep.subr.mxu0 0.0
      %3277 = vmatpush1.msra.mxu0 %v3270
      %3278 = vmatprep.subr.mxu0 0.0
      %3279 = vmatpush1.msra.mxu0 %v3271
      %3280 = vmatprep.subr.mxu0 0.0
      %3281 = vmatpush1.msra.mxu0 0.0
      %3282 = vmatprep.subr.mxu0 0.0
      %3283 = vmatpush1.msra.mxu0 0.0
      %3284 = vmatprep.subr.mxu0 0.0
      %3285 = vmatpush1.msra.mxu0 0.0
      %3286 = vmatprep.subr.mxu0 0.0
      %3287 = vmatpush1.msra.mxu0 0.0
      %3288 = vmatprep.subr.mxu0 0.0
      %3289 = vmatpush1.msra.mxu0 0.0
      %3290 = vmatprep.subr.mxu0 0.0
      %3291 = vmatpush1.msra.mxu0 0.0
      %3292 = vmatprep.subr.mxu0 0.0
      %3293 = vmatpush1.msra.mxu0 0.0
      %3294 = vmatprep.subr.mxu0 0.0
      %3295 = vmatpush1.msra.mxu0 0.0
      %3296 = vmatprep.subr.mxu0 0.0
      %3297 = vmatpush1.msra.mxu0 0.0
      %3298 = vmatprep.subr.mxu0 0.0
      %3299 = vmatpush1.msra.mxu0 0.0
      %3300 = vmatprep.subr.mxu0 0.0
      %3301 = vmatpush1.msra.mxu0 0.0
      %3302 = vmatprep.subr.mxu0 0.0
      %3303 = vmatpush1.msra.mxu0 0.0
      %3304 = vmatprep.subr.mxu0 0.0
      %3305 = vmatpush1.msra.mxu0 0.0
      %3306 = vmatprep.subr.mxu0 0.0
      %3307 = vmatpush1.msra.mxu0 0.0
      %3308 = vmatprep.subr.mxu0 0.0
      %3309 = vmatpush1.msra.mxu0 0.0
      %3310 = vmatprep.subr.mxu0 0.0
      %3311 = vmatpush1.msra.mxu0 0.0
      %3312 = vmatprep.subr.mxu0 0.0
      %3313 = vmatpush1.msra.mxu0 0.0
      %3314 = vmatprep.subr.mxu0 0.0
      %3315 = vmatpush1.msra.mxu0 0.0
      %3316 = vmatprep.subr.mxu0 0.0
      %3317 = vmatpush1.msra.mxu0 0.0
      %3318 = vmatprep.subr.mxu0 0.0
      %3319 = vmatpush1.msra.mxu0 0.0
      %3320 = vmatprep.subr.mxu0 0.0
      %3321 = vmatpush1.msra.mxu0 0.0
      %3322 = vmatprep.subr.mxu0 0.0
      %3323 = vmatpush1.msra.mxu0 0.0
      %3324 = vmatprep.subr.mxu0 0.0
      %3325 = vmatpush1.msra.mxu0 0.0
      %3326 = vmatprep.subr.mxu0 0.0
      %3327 = vmatpush1.msra.mxu0 0.0
      %3328 = vmatprep.subr.mxu0 0.0
      %3329 = vmatpush1.msra.mxu0 0.0
      %3330 = vmatprep.subr.mxu0 0.0
      %3331 = vmatpush1.msra.mxu0 0.0
      %3332 = vmatprep.subr.mxu0 0.0
      %3333 = vmatpush1.msra.mxu0 0.0
      %3334 = vmatprep.subr.mxu0 0.0
      %3335 = vmatpush1.msra.mxu0 0.0
      %3336 = vmatprep.mubr.f32.mxu0 0.0
      %3337 = vmatmul.mubr.f32.gmra.mrb[0].mxu0 %v725
      %v3338 = vpop.f32.mrb[0].mxu0
      %v3339 = vadd.f32 0.0, %v3338
      %v3340 = vpop.f32.mrb[0].mxu0
      %3341 = vmatprep.mubr.f32.mxu0 0.0
      %3342 = vmatmul.mubr.f32.gmra.mrb[0].mxu0 %v728
      %v3343 = vpop.f32.mrb[0].mxu0
      %v3344 = vadd.f32 0.0, %v3343
      %v3345 = vpop.f32.mrb[0].mxu0
      %3346 = vmatprep.mubr.f32.mxu0 0.0
      %3347 = vmatmul.mubr.f32.gmra.mrb[0].mxu0 %v731
      %v3348 = vpop.f32.mrb[0].mxu0
      %v3349 = vadd.f32 0.0, %v3348
      %v3350 = vpop.f32.mrb[0].mxu0
      %3351 = vmatprep.mubr.f32.mxu0 0.0
      %3352 = vmatmul.mubr.f32.gmra.mrb[0].mxu0 %v734
      %v3353 = vpop.f32.mrb[0].mxu0
      %v3354 = vadd.f32 0.0, %v3353
      %v3355 = vpop.f32.mrb[0].mxu0
      %3356 = vmatprep.mubr.f32.mxu0 0.0
      %3357 = vmatmul.mubr.f32.gmra.mrb[0].mxu0 %v737
      %v3358 = vpop.f32.mrb[0].mxu0
      %v3359 = vadd.f32 0.0, %v3358
      %v3360 = vpop.f32.mrb[0].mxu0
      %3361 = vmatprep.mubr.f32.mxu0 0.0
      %3362 = vmatmul.mubr.f32.gmra.mrb[0].mxu0 %v740
      %v3363 = vpop.f32.mrb[0].mxu0
      %v3364 = vadd.f32 0.0, %v3363
      %v3365 = vpop.f32.mrb[0].mxu0
      %3366 = vmatprep.mubr.f32.mxu0 0.0
      %3367 = vmatmul.mubr.f32.gmra.mrb[0].mxu0 %v743
      %v3368 = vpop.f32.mrb[0].mxu0
      %v3369 = vadd.f32 0.0, %v3368
      %v3370 = vpop.f32.mrb[0].mxu0
      %3371 = vmatprep.mubr.f32.mxu0 0.0
      %3372 = vmatmul.mubr.f32.gmra.mrb[0].mxu0 %v746
      %v3373 = vpop.f32.mrb[0].mxu0
      %v3374 = vadd.f32 0.0, %v3373
      %v3375 = vpop.f32.mrb[0].mxu0
      %3376 = vdwg.mxu0
      %v3377 = vmul.f32 %v3339, 0.35355338
      %v3378 = vmul.f32 %v3344, 0.35355338
      %v3379 = vmul.f32 %v3349, 0.35355338
      %v3380 = vmul.f32 %v3354, 0.35355338
      %v3381 = vmul.f32 %v3359, 0.35355338
      %v3382 = vmul.f32 %v3364, 0.35355338
      %v3383 = vmul.f32 %v3369, 0.35355338
      %v3384 = vmul.f32 %v3374, 0.35355338
      %s3385 = scalar_lea.vmem %s515, 96
      %v3386 = vld [vmem:[%s3385] sm:$0xff]
      %v3387 = vld [vmem:[%s3385 + $0x8] sm:$0xff]
      %v3388 = vld [vmem:[%s3385 + $0x10] sm:$0xff]
      %v3389 = vld [vmem:[%s3385 + $0x18] sm:$0xff]
      %3390 = vmatprep.subr.mxu0 0.0
      %3391 = vmatpush1.msra.mxu0 %v3386
      %3392 = vmatprep.subr.mxu0 0.0
      %3393 = vmatpush1.msra.mxu0 %v3387
      %3394 = vmatprep.subr.mxu0 0.0
      %3395 = vmatpush1.msra.mxu0 %v3388
      %3396 = vmatprep.subr.mxu0 0.0
      %3397 = vmatpush1.msra.mxu0 %v3389
      %3398 = vmatprep.subr.mxu0 0.0
      %3399 = vmatpush1.msra.mxu0 0.0
      %3400 = vmatprep.subr.mxu0 0.0
      %3401 = vmatpush1.msra.mxu0 0.0
      %3402 = vmatprep.subr.mxu0 0.0
      %3403 = vmatpush1.msra.mxu0 0.0
      %3404 = vmatprep.subr.mxu0 0.0
      %3405 = vmatpush1.msra.mxu0 0.0
      %3406 = vmatprep.subr.mxu0 0.0
      %3407 = vmatpush1.msra.mxu0 0.0
      %3408 = vmatprep.subr.mxu0 0.0
      %3409 = vmatpush1.msra.mxu0 0.0
      %3410 = vmatprep.subr.mxu0 0.0
      %3411 = vmatpush1.msra.mxu0 0.0
      %3412 = vmatprep.subr.mxu0 0.0
      %3413 = vmatpush1.msra.mxu0 0.0
      %3414 = vmatprep.subr.mxu0 0.0
      %3415 = vmatpush1.msra.mxu0 0.0
      %3416 = vmatprep.subr.mxu0 0.0
      %3417 = vmatpush1.msra.mxu0 0.0
      %3418 = vmatprep.subr.mxu0 0.0
      %3419 = vmatpush1.msra.mxu0 0.0
      %3420 = vmatprep.subr.mxu0 0.0
      %3421 = vmatpush1.msra.mxu0 0.0
      %3422 = vmatprep.subr.mxu0 0.0
      %3423 = vmatpush1.msra.mxu0 0.0
      %3424 = vmatprep.subr.mxu0 0.0
      %3425 = vmatpush1.msra.mxu0 0.0
      %3426 = vmatprep.subr.mxu0 0.0
      %3427 = vmatpush1.msra.mxu0 0.0
      %3428 = vmatprep.subr.mxu0 0.0
      %3429 = vmatpush1.msra.mxu0 0.0
      %3430 = vmatprep.subr.mxu0 0.0
      %3431 = vmatpush1.msra.mxu0 0.0
      %3432 = vmatprep.subr.mxu0 0.0
      %3433 = vmatpush1.msra.mxu0 0.0
      %3434 = vmatprep.subr.mxu0 0.0
      %3435 = vmatpush1.msra.mxu0 0.0
      %3436 = vmatprep.subr.mxu0 0.0
      %3437 = vmatpush1.msra.mxu0 0.0
      %3438 = vmatprep.subr.mxu0 0.0
      %3439 = vmatpush1.msra.mxu0 0.0
      %3440 = vmatprep.subr.mxu0 0.0
      %3441 = vmatpush1.msra.mxu0 0.0
      %3442 = vmatprep.subr.mxu0 0.0
      %3443 = vmatpush1.msra.mxu0 0.0
      %3444 = vmatprep.subr.mxu0 0.0
      %3445 = vmatpush1.msra.mxu0 0.0
      %3446 = vmatprep.subr.mxu0 0.0
      %3447 = vmatpush1.msra.mxu0 0.0
      %3448 = vmatprep.subr.mxu0 0.0
      %3449 = vmatpush1.msra.mxu0 0.0
      %3450 = vmatprep.subr.mxu0 0.0
      %3451 = vmatpush1.msra.mxu0 0.0
      %3452 = vmatprep.subr.mxu0 0.0
      %3453 = vmatpush1.msra.mxu0 0.0
      %3454 = vmatprep.mubr.f32.mxu0 0.0
      %3455 = vmatmul.mubr.f32.gmra.mrb[0].mxu0 %v725
      %v3456 = vpop.f32.mrb[0].mxu0
      %v3457 = vadd.f32 0.0, %v3456
      %v3458 = vpop.f32.mrb[0].mxu0
      %3459 = vmatprep.mubr.f32.mxu0 0.0
      %3460 = vmatmul.mubr.f32.gmra.mrb[0].mxu0 %v728
      %v3461 = vpop.f32.mrb[0].mxu0
      %v3462 = vadd.f32 0.0, %v3461
      %v3463 = vpop.f32.mrb[0].mxu0
      %3464 = vmatprep.mubr.f32.mxu0 0.0
      %3465 = vmatmul.mubr.f32.gmra.mrb[0].mxu0 %v731
      %v3466 = vpop.f32.mrb[0].mxu0
      %v3467 = vadd.f32 0.0, %v3466
      %v3468 = vpop.f32.mrb[0].mxu0
      %3469 = vmatprep.mubr.f32.mxu0 0.0
      %3470 = vmatmul.mubr.f32.gmra.mrb[0].mxu0 %v734
      %v3471 = vpop.f32.mrb[0].mxu0
      %v3472 = vadd.f32 0.0, %v3471
      %v3473 = vpop.f32.mrb[0].mxu0
      %3474 = vmatprep.mubr.f32.mxu0 0.0
      %3475 = vmatmul.mubr.f32.gmra.mrb[0].mxu0 %v737
      %v3476 = vpop.f32.mrb[0].mxu0
      %v3477 = vadd.f32 0.0, %v3476
      %v3478 = vpop.f32.mrb[0].mxu0
      %3479 = vmatprep.mubr.f32.mxu0 0.0
      %3480 = vmatmul.mubr.f32.gmra.mrb[0].mxu0 %v740
      %v3481 = vpop.f32.mrb[0].mxu0
      %v3482 = vadd.f32 0.0, %v3481
      %v3483 = vpop.f32.mrb[0].mxu0
      %3484 = vmatprep.mubr.f32.mxu0 0.0
      %3485 = vmatmul.mubr.f32.gmra.mrb[0].mxu0 %v743
      %v3486 = vpop.f32.mrb[0].mxu0
      %v3487 = vadd.f32 0.0, %v3486
      %v3488 = vpop.f32.mrb[0].mxu0
      %3489 = vmatprep.mubr.f32.mxu0 0.0
      %3490 = vmatmul.mubr.f32.gmra.mrb[0].mxu0 %v746
      %v3491 = vpop.f32.mrb[0].mxu0
      %v3492 = vadd.f32 0.0, %v3491
      %v3493 = vpop.f32.mrb[0].mxu0
      %3494 = vdwg.mxu0
      %s3495 = scalar_lea.vmem %s520, 96
      %v3496 = vld [vmem:[%s3495] sm:$0xff]
      %v3497 = vld [vmem:[%s3495 + $0x8] sm:$0xff]
      %v3498 = vld [vmem:[%s3495 + $0x10] sm:$0xff]
      %v3499 = vld [vmem:[%s3495 + $0x18] sm:$0xff]
      %3500 = vmatprep.subr.mxu0 0.0
      %3501 = vmatpush1.msra.mxu0 %v3496
      %3502 = vmatprep.subr.mxu0 0.0
      %3503 = vmatpush1.msra.mxu0 %v3497
      %3504 = vmatprep.subr.mxu0 0.0
      %3505 = vmatpush1.msra.mxu0 %v3498
      %3506 = vmatprep.subr.mxu0 0.0
      %3507 = vmatpush1.msra.mxu0 %v3499
      %3508 = vmatprep.subr.mxu0 0.0
      %3509 = vmatpush1.msra.mxu0 0.0
      %3510 = vmatprep.subr.mxu0 0.0
      %3511 = vmatpush1.msra.mxu0 0.0
      %3512 = vmatprep.subr.mxu0 0.0
      %3513 = vmatpush1.msra.mxu0 0.0
      %3514 = vmatprep.subr.mxu0 0.0
      %3515 = vmatpush1.msra.mxu0 0.0
      %3516 = vmatprep.subr.mxu0 0.0
      %3517 = vmatpush1.msra.mxu0 0.0
      %3518 = vmatprep.subr.mxu0 0.0
      %3519 = vmatpush1.msra.mxu0 0.0
      %3520 = vmatprep.subr.mxu0 0.0
      %3521 = vmatpush1.msra.mxu0 0.0
      %3522 = vmatprep.subr.mxu0 0.0
      %3523 = vmatpush1.msra.mxu0 0.0
      %3524 = vmatprep.subr.mxu0 0.0
      %3525 = vmatpush1.msra.mxu0 0.0
      %3526 = vmatprep.subr.mxu0 0.0
      %3527 = vmatpush1.msra.mxu0 0.0
      %3528 = vmatprep.subr.mxu0 0.0
      %3529 = vmatpush1.msra.mxu0 0.0
      %3530 = vmatprep.subr.mxu0 0.0
      %3531 = vmatpush1.msra.mxu0 0.0
      %3532 = vmatprep.subr.mxu0 0.0
      %3533 = vmatpush1.msra.mxu0 0.0
      %3534 = vmatprep.subr.mxu0 0.0
      %3535 = vmatpush1.msra.mxu0 0.0
      %3536 = vmatprep.subr.mxu0 0.0
      %3537 = vmatpush1.msra.mxu0 0.0
      %3538 = vmatprep.subr.mxu0 0.0
      %3539 = vmatpush1.msra.mxu0 0.0
      %3540 = vmatprep.subr.mxu0 0.0
      %3541 = vmatpush1.msra.mxu0 0.0
      %3542 = vmatprep.subr.mxu0 0.0
      %3543 = vmatpush1.msra.mxu0 0.0
      %3544 = vmatprep.subr.mxu0 0.0
      %3545 = vmatpush1.msra.mxu0 0.0
      %3546 = vmatprep.subr.mxu0 0.0
      %3547 = vmatpush1.msra.mxu0 0.0
      %3548 = vmatprep.subr.mxu0 0.0
      %3549 = vmatpush1.msra.mxu0 0.0
      %3550 = vmatprep.subr.mxu0 0.0
      %3551 = vmatpush1.msra.mxu0 0.0
      %3552 = vmatprep.subr.mxu0 0.0
      %3553 = vmatpush1.msra.mxu0 0.0
      %3554 = vmatprep.subr.mxu0 0.0
      %3555 = vmatpush1.msra.mxu0 0.0
      %3556 = vmatprep.subr.mxu0 0.0
      %3557 = vmatpush1.msra.mxu0 0.0
      %3558 = vmatprep.subr.mxu0 0.0
      %3559 = vmatpush1.msra.mxu0 0.0
      %3560 = vmatprep.subr.mxu0 0.0
      %3561 = vmatpush1.msra.mxu0 0.0
      %3562 = vmatprep.subr.mxu0 0.0
      %3563 = vmatpush1.msra.mxu0 0.0
      %3564 = vmatprep.mubr.f32.mxu0 0.0
      %3565 = vmatmul.mubr.f32.gmra.mrb[0].mxu0 %v725
      %v3566 = vpop.f32.mrb[0].mxu0
      %v3567 = vadd.f32 0.0, %v3566
      %v3568 = vpop.f32.mrb[0].mxu0
      %3569 = vmatprep.mubr.f32.mxu0 0.0
      %3570 = vmatmul.mubr.f32.gmra.mrb[0].mxu0 %v728
      %v3571 = vpop.f32.mrb[0].mxu0
      %v3572 = vadd.f32 0.0, %v3571
      %v3573 = vpop.f32.mrb[0].mxu0
      %3574 = vmatprep.mubr.f32.mxu0 0.0
      %3575 = vmatmul.mubr.f32.gmra.mrb[0].mxu0 %v731
      %v3576 = vpop.f32.mrb[0].mxu0
      %v3577 = vadd.f32 0.0, %v3576
      %v3578 = vpop.f32.mrb[0].mxu0
      %3579 = vmatprep.mubr.f32.mxu0 0.0
      %3580 = vmatmul.mubr.f32.gmra.mrb[0].mxu0 %v734
      %v3581 = vpop.f32.mrb[0].mxu0
      %v3582 = vadd.f32 0.0, %v3581
      %v3583 = vpop.f32.mrb[0].mxu0
      %3584 = vmatprep.mubr.f32.mxu0 0.0
      %3585 = vmatmul.mubr.f32.gmra.mrb[0].mxu0 %v737
      %v3586 = vpop.f32.mrb[0].mxu0
      %v3587 = vadd.f32 0.0, %v3586
      %v3588 = vpop.f32.mrb[0].mxu0
      %3589 = vmatprep.mubr.f32.mxu0 0.0
      %3590 = vmatmul.mubr.f32.gmra.mrb[0].mxu0 %v740
      %v3591 = vpop.f32.mrb[0].mxu0
      %v3592 = vadd.f32 0.0, %v3591
      %v3593 = vpop.f32.mrb[0].mxu0
      %3594 = vmatprep.mubr.f32.mxu0 0.0
      %3595 = vmatmul.mubr.f32.gmra.mrb[0].mxu0 %v743
      %v3596 = vpop.f32.mrb[0].mxu0
      %v3597 = vadd.f32 0.0, %v3596
      %v3598 = vpop.f32.mrb[0].mxu0
      %3599 = vmatprep.mubr.f32.mxu0 0.0
      %3600 = vmatmul.mubr.f32.gmra.mrb[0].mxu0 %v746
      %v3601 = vpop.f32.mrb[0].mxu0
      %v3602 = vadd.f32 0.0, %v3601
      %v3603 = vpop.f32.mrb[0].mxu0
      %3604 = vdwg.mxu0
      %v3606 = vsel %vm1079, %v3377, 0
      %v3609 = vsel %vm1079, %v3378, 0
      %v3612 = vsel %vm1079, %v3379, 0
      %v3615 = vsel %vm1079, %v3380, 0
      %v3618 = vsel %vm1079, %v3381, 0
      %v3621 = vsel %vm1079, %v3382, 0
      %v3624 = vsel %vm1079, %v3383, 0
      %v3627 = vsel %vm1079, %v3384, 0
      %v3630 = vsel %vm1079, %v3457, 0
      %v3633 = vsel %vm1079, %v3462, 0
      %v3636 = vsel %vm1079, %v3467, 0
      %v3639 = vsel %vm1079, %v3472, 0
      %v3642 = vsel %vm1079, %v3477, 0
      %v3645 = vsel %vm1079, %v3482, 0
      %v3648 = vsel %vm1079, %v3487, 0
      %v3651 = vsel %vm1079, %v3492, 0
      %3653 = vmatprep.subr.mxu0 0.0
      %3654 = vmatpush1.xpose.msra.mxu0 %v3630
      %3655 = vmatprep.subr.mxu0 0.0
      %3656 = vmatpush1.xpose.msra.mxu0 %v3633
      %3657 = vmatprep.subr.mxu0 0.0
      %3658 = vmatpush1.xpose.msra.mxu0 %v3636
      %3659 = vmatprep.subr.mxu0 0.0
      %3660 = vmatpush1.xpose.msra.mxu0 %v3639
      %3661 = vmatprep.subr.mxu0 0.0
      %3662 = vmatpush1.xpose.msra.mxu0 %v3642
      %3663 = vmatprep.subr.mxu0 0.0
      %3664 = vmatpush1.xpose.msra.mxu0 %v3645
      %3665 = vmatprep.subr.mxu0 0.0
      %3666 = vmatpush1.xpose.msra.mxu0 %v3648
      %3667 = vmatprep.subr.mxu0 0.0
      %3668 = vmatpush1.xpose.msra.mxu0 %v3651
      %3669 = vmatprep.subr.mxu0 0.0
      %3670 = vmatpush1.xpose.msra.mxu0 0.0
      %3671 = vmatprep.subr.mxu0 0.0
      %3672 = vmatpush1.xpose.msra.mxu0 0.0
      %3673 = vmatprep.subr.mxu0 0.0
      %3674 = vmatpush1.xpose.msra.mxu0 0.0
      %3675 = vmatprep.subr.mxu0 0.0
      %3676 = vmatpush1.xpose.msra.mxu0 0.0
      %3677 = vmatprep.subr.mxu0 0.0
      %3678 = vmatpush1.xpose.msra.mxu0 0.0
      %3679 = vmatprep.subr.mxu0 0.0
      %3680 = vmatpush1.xpose.msra.mxu0 0.0
      %3681 = vmatprep.subr.mxu0 0.0
      %3682 = vmatpush1.xpose.msra.mxu0 0.0
      %3683 = vmatprep.subr.mxu0 0.0
      %3684 = vmatpush1.xpose.msra.mxu0 0.0
      %3685 = vmatprep.subr.mxu0 0.0
      %3686 = vmatpush1.xpose.msra.mxu0 0.0
      %3687 = vmatprep.subr.mxu0 0.0
      %3688 = vmatpush1.xpose.msra.mxu0 0.0
      %3689 = vmatprep.subr.mxu0 0.0
      %3690 = vmatpush1.xpose.msra.mxu0 0.0
      %3691 = vmatprep.subr.mxu0 0.0
      %3692 = vmatpush1.xpose.msra.mxu0 0.0
      %3693 = vmatprep.subr.mxu0 0.0
      %3694 = vmatpush1.xpose.msra.mxu0 0.0
      %3695 = vmatprep.subr.mxu0 0.0
      %3696 = vmatpush1.xpose.msra.mxu0 0.0
      %3697 = vmatprep.subr.mxu0 0.0
      %3698 = vmatpush1.xpose.msra.mxu0 0.0
      %3699 = vmatprep.subr.mxu0 0.0
      %3700 = vmatpush1.xpose.msra.mxu0 0.0
      %3701 = vmatprep.subr.mxu0 0.0
      %3702 = vmatpush1.xpose.msra.mxu0 0.0
      %3703 = vmatprep.subr.mxu0 0.0
      %3704 = vmatpush1.xpose.msra.mxu0 0.0
      %3705 = vmatprep.subr.mxu0 0.0
      %3706 = vmatpush1.xpose.msra.mxu0 0.0
      %3707 = vmatprep.subr.mxu0 0.0
      %3708 = vmatpush1.xpose.msra.mxu0 0.0
      %3709 = vmatprep.subr.mxu0 0.0
      %3710 = vmatpush1.xpose.msra.mxu0 0.0
      %3711 = vmatprep.subr.mxu0 0.0
      %3712 = vmatpush1.xpose.msra.mxu0 0.0
      %3713 = vmatprep.subr.mxu0 0.0
      %3714 = vmatpush1.xpose.msra.mxu0 0.0
      %3715 = vmatprep.subr.mxu0 0.0
      %3716 = vmatpush1.xpose.msra.mxu0 0.0
      %3717 = vmatprep.mubr.f32.mxu0 0.0
      %3718 = vmatmul.mubr.f32.gmra.mrb[0].mxu0 %v3606
      %v3719 = vpop.f32.mrb[0].mxu0
      %v3720 = vadd.f32 0.0, %v3719
      %v3721 = vpop.f32.mrb[0].mxu0
      %3722 = vmatprep.mubr.f32.mxu0 0.0
      %3723 = vmatmul.mubr.f32.gmra.mrb[0].mxu0 %v3609
      %v3724 = vpop.f32.mrb[0].mxu0
      %v3725 = vadd.f32 0.0, %v3724
      %v3726 = vpop.f32.mrb[0].mxu0
      %3727 = vmatprep.mubr.f32.mxu0 0.0
      %3728 = vmatmul.mubr.f32.gmra.mrb[0].mxu0 %v3612
      %v3729 = vpop.f32.mrb[0].mxu0
      %v3730 = vadd.f32 0.0, %v3729
      %v3731 = vpop.f32.mrb[0].mxu0
      %3732 = vmatprep.mubr.f32.mxu0 0.0
      %3733 = vmatmul.mubr.f32.gmra.mrb[0].mxu0 %v3615
      %v3734 = vpop.f32.mrb[0].mxu0
      %v3735 = vadd.f32 0.0, %v3734
      %v3736 = vpop.f32.mrb[0].mxu0
      %3737 = vmatprep.mubr.f32.mxu0 0.0
      %3738 = vmatmul.mubr.f32.gmra.mrb[0].mxu0 %v3618
      %v3739 = vpop.f32.mrb[0].mxu0
      %v3740 = vadd.f32 0.0, %v3739
      %v3741 = vpop.f32.mrb[0].mxu0
      %3742 = vmatprep.mubr.f32.mxu0 0.0
      %3743 = vmatmul.mubr.f32.gmra.mrb[0].mxu0 %v3621
      %v3744 = vpop.f32.mrb[0].mxu0
      %v3745 = vadd.f32 0.0, %v3744
      %v3746 = vpop.f32.mrb[0].mxu0
      %3747 = vmatprep.mubr.f32.mxu0 0.0
      %3748 = vmatmul.mubr.f32.gmra.mrb[0].mxu0 %v3624
      %v3749 = vpop.f32.mrb[0].mxu0
      %v3750 = vadd.f32 0.0, %v3749
      %v3751 = vpop.f32.mrb[0].mxu0
      %3752 = vmatprep.mubr.f32.mxu0 0.0
      %3753 = vmatmul.mubr.f32.gmra.mrb[0].mxu0 %v3627
      %v3754 = vpop.f32.mrb[0].mxu0
      %v3755 = vadd.f32 0.0, %v3754
      %v3756 = vpop.f32.mrb[0].mxu0
      %3757 = vdwg.mxu0
      %v3758 = vsel %vm1233, %v3720, -inf
      %3759 = vmax.xlane.f32.xlu0 %v3758
      %v3760 = vpop.xlane.xlu0 %3759
      %v3761 = vsel %vm1233, %v3725, -inf
      %3762 = vmax.xlane.f32.xlu0 %v3761
      %v3763 = vpop.xlane.xlu0 %3762
      %v3764 = vsel %vm1233, %v3730, -inf
      %3765 = vmax.xlane.f32.xlu0 %v3764
      %v3766 = vpop.xlane.xlu0 %3765
      %v3767 = vsel %vm1233, %v3735, -inf
      %3768 = vmax.xlane.f32.xlu0 %v3767
      %v3769 = vpop.xlane.xlu0 %3768
      %v3770 = vsel %vm1233, %v3740, -inf
      %3771 = vmax.xlane.f32.xlu0 %v3770
      %v3772 = vpop.xlane.xlu0 %3771
      %v3773 = vsel %vm1233, %v3745, -inf
      %3774 = vmax.xlane.f32.xlu0 %v3773
      %v3775 = vpop.xlane.xlu0 %3774
      %v3776 = vsel %vm1233, %v3750, -inf
      %3777 = vmax.xlane.f32.xlu0 %v3776
      %v3778 = vpop.xlane.xlu0 %3777
      %v3779 = vsel %vm1233, %v3755, -inf
      %3780 = vmax.xlane.f32.xlu0 %v3779
      %v3781 = vpop.xlane.xlu0 %3780
      %v3782 = vsub.f32 %v3720, %v3760
      %v3783 = vsub.f32 %v3725, %v3763
      %v3784 = vsub.f32 %v3730, %v3766
      %v3785 = vsub.f32 %v3735, %v3769
      %v3786 = vsub.f32 %v3740, %v3772
      %v3787 = vsub.f32 %v3745, %v3775
      %v3788 = vsub.f32 %v3750, %v3778
      %v3789 = vsub.f32 %v3755, %v3781
      %v3790 = vmul.f32 %v3782, 1.442695
      %v3791 = vpow.pop %v3790
      %v3792 = vmul.f32 %v3783, 1.442695
      %v3793 = vpow.pop %v3792
      %v3794 = vmul.f32 %v3784, 1.442695
      %v3795 = vpow.pop %v3794
      %v3796 = vmul.f32 %v3785, 1.442695
      %v3797 = vpow.pop %v3796
      %v3798 = vmul.f32 %v3786, 1.442695
      %v3799 = vpow.pop %v3798
      %v3800 = vmul.f32 %v3787, 1.442695
      %v3801 = vpow.pop %v3800
      %v3802 = vmul.f32 %v3788, 1.442695
      %v3803 = vpow.pop %v3802
      %v3804 = vmul.f32 %v3789, 1.442695
      %v3805 = vpow.pop %v3804
      %v3806 = vsel %vm1233, %v3791, 0.0
      %3807 = vadd.xlane.f32.xlu0 %v3806
      %v3808 = vpop.xlane.xlu0 %3807
      %v3809 = vsel %vm1233, %v3793, 0.0
      %3810 = vadd.xlane.f32.xlu0 %v3809
      %v3811 = vpop.xlane.xlu0 %3810
      %v3812 = vsel %vm1233, %v3795, 0.0
      %3813 = vadd.xlane.f32.xlu0 %v3812
      %v3814 = vpop.xlane.xlu0 %3813
      %v3815 = vsel %vm1233, %v3797, 0.0
      %3816 = vadd.xlane.f32.xlu0 %v3815
      %v3817 = vpop.xlane.xlu0 %3816
      %v3818 = vsel %vm1233, %v3799, 0.0
      %3819 = vadd.xlane.f32.xlu0 %v3818
      %v3820 = vpop.xlane.xlu0 %3819
      %v3821 = vsel %vm1233, %v3801, 0.0
      %3822 = vadd.xlane.f32.xlu0 %v3821
      %v3823 = vpop.xlane.xlu0 %3822
      %v3824 = vsel %vm1233, %v3803, 0.0
      %3825 = vadd.xlane.f32.xlu0 %v3824
      %v3826 = vpop.xlane.xlu0 %3825
      %v3827 = vsel %vm1233, %v3805, 0.0
      %3828 = vadd.xlane.f32.xlu0 %v3827
      %v3829 = vpop.xlane.xlu0 %3828
      %v3830 = vrcp.pop %v3808
      %v3831 = vrcp.pop %v3811
      %v3832 = vrcp.pop %v3814
      %v3833 = vrcp.pop %v3817
      %v3834 = vrcp.pop %v3820
      %v3835 = vrcp.pop %v3823
      %v3836 = vrcp.pop %v3826
      %v3837 = vrcp.pop %v3829
      %v3838 = vmul.f32 %v3791, %v3830
      %v3839 = vmul.f32 %v3793, %v3831
      %v3840 = vmul.f32 %v3795, %v3832
      %v3841 = vmul.f32 %v3797, %v3833
      %v3842 = vmul.f32 %v3799, %v3834
      %v3843 = vmul.f32 %v3801, %v3835
      %v3844 = vmul.f32 %v3803, %v3836
      %v3845 = vmul.f32 %v3805, %v3837
      %v3847 = vsel %vm1233, %v3838, 0
      %v3850 = vsel %vm1233, %v3839, 0
      %v3853 = vsel %vm1233, %v3840, 0
      %v3856 = vsel %vm1233, %v3841, 0
      %v3859 = vsel %vm1233, %v3842, 0
      %v3862 = vsel %vm1233, %v3843, 0
      %v3865 = vsel %vm1233, %v3844, 0
      %v3868 = vsel %vm1233, %v3845, 0
      %3870 = vmatprep.subr.mxu0 0.0
      %3871 = vmatpush1.msra.mxu0 %v3567
      %3872 = vmatprep.subr.mxu0 0.0
      %3873 = vmatpush1.msra.mxu0 %v3572
      %3874 = vmatprep.subr.mxu0 0.0
      %3875 = vmatpush1.msra.mxu0 %v3577
      %3876 = vmatprep.subr.mxu0 0.0
      %3877 = vmatpush1.msra.mxu0 %v3582
      %3878 = vmatprep.subr.mxu0 0.0
      %3879 = vmatpush1.msra.mxu0 %v3587
      %3880 = vmatprep.subr.mxu0 0.0
      %3881 = vmatpush1.msra.mxu0 %v3592
      %3882 = vmatprep.subr.mxu0 0.0
      %3883 = vmatpush1.msra.mxu0 %v3597
      %3884 = vmatprep.subr.mxu0 0.0
      %3885 = vmatpush1.msra.mxu0 %v3602
      %3886 = vmatprep.subr.mxu0 0.0
      %3887 = vmatpush1.msra.mxu0 0.0
      %3888 = vmatprep.subr.mxu0 0.0
      %3889 = vmatpush1.msra.mxu0 0.0
      %3890 = vmatprep.subr.mxu0 0.0
      %3891 = vmatpush1.msra.mxu0 0.0
      %3892 = vmatprep.subr.mxu0 0.0
      %3893 = vmatpush1.msra.mxu0 0.0
      %3894 = vmatprep.subr.mxu0 0.0
      %3895 = vmatpush1.msra.mxu0 0.0
      %3896 = vmatprep.subr.mxu0 0.0
      %3897 = vmatpush1.msra.mxu0 0.0
      %3898 = vmatprep.subr.mxu0 0.0
      %3899 = vmatpush1.msra.mxu0 0.0
      %3900 = vmatprep.subr.mxu0 0.0
      %3901 = vmatpush1.msra.mxu0 0.0
      %3902 = vmatprep.subr.mxu0 0.0
      %3903 = vmatpush1.msra.mxu0 0.0
      %3904 = vmatprep.subr.mxu0 0.0
      %3905 = vmatpush1.msra.mxu0 0.0
      %3906 = vmatprep.subr.mxu0 0.0
      %3907 = vmatpush1.msra.mxu0 0.0
      %3908 = vmatprep.subr.mxu0 0.0
      %3909 = vmatpush1.msra.mxu0 0.0
      %3910 = vmatprep.subr.mxu0 0.0
      %3911 = vmatpush1.msra.mxu0 0.0
      %3912 = vmatprep.subr.mxu0 0.0
      %3913 = vmatpush1.msra.mxu0 0.0
      %3914 = vmatprep.subr.mxu0 0.0
      %3915 = vmatpush1.msra.mxu0 0.0
      %3916 = vmatprep.subr.mxu0 0.0
      %3917 = vmatpush1.msra.mxu0 0.0
      %3918 = vmatprep.subr.mxu0 0.0
      %3919 = vmatpush1.msra.mxu0 0.0
      %3920 = vmatprep.subr.mxu0 0.0
      %3921 = vmatpush1.msra.mxu0 0.0
      %3922 = vmatprep.subr.mxu0 0.0
      %3923 = vmatpush1.msra.mxu0 0.0
      %3924 = vmatprep.subr.mxu0 0.0
      %3925 = vmatpush1.msra.mxu0 0.0
      %3926 = vmatprep.subr.mxu0 0.0
      %3927 = vmatpush1.msra.mxu0 0.0
      %3928 = vmatprep.subr.mxu0 0.0
      %3929 = vmatpush1.msra.mxu0 0.0
      %3930 = vmatprep.subr.mxu0 0.0
      %3931 = vmatpush1.msra.mxu0 0.0
      %3932 = vmatprep.subr.mxu0 0.0
      %3933 = vmatpush1.msra.mxu0 0.0
      %3934 = vmatprep.mubr.f32.mxu0 0.0
      %3935 = vmatmul.mubr.f32.gmra.mrb[0].mxu0 %v3847
      %v3936 = vpop.f32.mrb[0].mxu0
      %v3937 = vadd.f32 0.0, %v3936
      %v3938 = vpop.f32.mrb[0].mxu0
      %3939 = vmatprep.mubr.f32.mxu0 0.0
      %3940 = vmatmul.mubr.f32.gmra.mrb[0].mxu0 %v3850
      %v3941 = vpop.f32.mrb[0].mxu0
      %v3942 = vadd.f32 0.0, %v3941
      %v3943 = vpop.f32.mrb[0].mxu0
      %3944 = vmatprep.mubr.f32.mxu0 0.0
      %3945 = vmatmul.mubr.f32.gmra.mrb[0].mxu0 %v3853
      %v3946 = vpop.f32.mrb[0].mxu0
      %v3947 = vadd.f32 0.0, %v3946
      %v3948 = vpop.f32.mrb[0].mxu0
      %3949 = vmatprep.mubr.f32.mxu0 0.0
      %3950 = vmatmul.mubr.f32.gmra.mrb[0].mxu0 %v3856
      %v3951 = vpop.f32.mrb[0].mxu0
      %v3952 = vadd.f32 0.0, %v3951
      %v3953 = vpop.f32.mrb[0].mxu0
      %3954 = vmatprep.mubr.f32.mxu0 0.0
      %3955 = vmatmul.mubr.f32.gmra.mrb[0].mxu0 %v3859
      %v3956 = vpop.f32.mrb[0].mxu0
      %v3957 = vadd.f32 0.0, %v3956
      %v3958 = vpop.f32.mrb[0].mxu0
      %3959 = vmatprep.mubr.f32.mxu0 0.0
      %3960 = vmatmul.mubr.f32.gmra.mrb[0].mxu0 %v3862
      %v3961 = vpop.f32.mrb[0].mxu0
      %v3962 = vadd.f32 0.0, %v3961
      %v3963 = vpop.f32.mrb[0].mxu0
      %3964 = vmatprep.mubr.f32.mxu0 0.0
      %3965 = vmatmul.mubr.f32.gmra.mrb[0].mxu0 %v3865
      %v3966 = vpop.f32.mrb[0].mxu0
      %v3967 = vadd.f32 0.0, %v3966
      %v3968 = vpop.f32.mrb[0].mxu0
      %3969 = vmatprep.mubr.f32.mxu0 0.0
      %3970 = vmatmul.mubr.f32.gmra.mrb[0].mxu0 %v3868
      %v3971 = vpop.f32.mrb[0].mxu0
      %v3972 = vadd.f32 0.0, %v3971
      %v3973 = vpop.f32.mrb[0].mxu0
      %3974 = vdwg.mxu0
      %s3975 = scalar_lea.vmem %s525, 24
      %v3976 = vld [vmem:[%s3975] sm:$0xff]
      %v3978 = vsel %vm1079, %v3937, 0
      %v3981 = vsel %vm1079, %v3942, 0
      %v3984 = vsel %vm1079, %v3947, 0
      %v3987 = vsel %vm1079, %v3952, 0
      %v3990 = vsel %vm1079, %v3957, 0
      %v3993 = vsel %vm1079, %v3962, 0
      %v3996 = vsel %vm1079, %v3967, 0
      %v3999 = vsel %vm1079, %v3972, 0
      %4001 = vmatprep.subr.mxu0 0.0
      %4002 = vmatpush1.msra.mxu0 %v3976
      %4003 = vmatprep.subr.mxu0 0.0
      %4004 = vmatpush1.msra.mxu0 0.0
      %4005 = vmatprep.subr.mxu0 0.0
      %4006 = vmatpush1.msra.mxu0 0.0
      %4007 = vmatprep.subr.mxu0 0.0
      %4008 = vmatpush1.msra.mxu0 0.0
      %4009 = vmatprep.subr.mxu0 0.0
      %4010 = vmatpush1.msra.mxu0 0.0
      %4011 = vmatprep.subr.mxu0 0.0
      %4012 = vmatpush1.msra.mxu0 0.0
      %4013 = vmatprep.subr.mxu0 0.0
      %4014 = vmatpush1.msra.mxu0 0.0
      %4015 = vmatprep.subr.mxu0 0.0
      %4016 = vmatpush1.msra.mxu0 0.0
      %4017 = vmatprep.subr.mxu0 0.0
      %4018 = vmatpush1.msra.mxu0 0.0
      %4019 = vmatprep.subr.mxu0 0.0
      %4020 = vmatpush1.msra.mxu0 0.0
      %4021 = vmatprep.subr.mxu0 0.0
      %4022 = vmatpush1.msra.mxu0 0.0
      %4023 = vmatprep.subr.mxu0 0.0
      %4024 = vmatpush1.msra.mxu0 0.0
      %4025 = vmatprep.subr.mxu0 0.0
      %4026 = vmatpush1.msra.mxu0 0.0
      %4027 = vmatprep.subr.mxu0 0.0
      %4028 = vmatpush1.msra.mxu0 0.0
      %4029 = vmatprep.subr.mxu0 0.0
      %4030 = vmatpush1.msra.mxu0 0.0
      %4031 = vmatprep.subr.mxu0 0.0
      %4032 = vmatpush1.msra.mxu0 0.0
      %4033 = vmatprep.subr.mxu0 0.0
      %4034 = vmatpush1.msra.mxu0 0.0
      %4035 = vmatprep.subr.mxu0 0.0
      %4036 = vmatpush1.msra.mxu0 0.0
      %4037 = vmatprep.subr.mxu0 0.0
      %4038 = vmatpush1.msra.mxu0 0.0
      %4039 = vmatprep.subr.mxu0 0.0
      %4040 = vmatpush1.msra.mxu0 0.0
      %4041 = vmatprep.subr.mxu0 0.0
      %4042 = vmatpush1.msra.mxu0 0.0
      %4043 = vmatprep.subr.mxu0 0.0
      %4044 = vmatpush1.msra.mxu0 0.0
      %4045 = vmatprep.subr.mxu0 0.0
      %4046 = vmatpush1.msra.mxu0 0.0
      %4047 = vmatprep.subr.mxu0 0.0
      %4048 = vmatpush1.msra.mxu0 0.0
      %4049 = vmatprep.subr.mxu0 0.0
      %4050 = vmatpush1.msra.mxu0 0.0
      %4051 = vmatprep.subr.mxu0 0.0
      %4052 = vmatpush1.msra.mxu0 0.0
      %4053 = vmatprep.subr.mxu0 0.0
      %4054 = vmatpush1.msra.mxu0 0.0
      %4055 = vmatprep.subr.mxu0 0.0
      %4056 = vmatpush1.msra.mxu0 0.0
      %4057 = vmatprep.subr.mxu0 0.0
      %4058 = vmatpush1.msra.mxu0 0.0
      %4059 = vmatprep.subr.mxu0 0.0
      %4060 = vmatpush1.msra.mxu0 0.0
      %4061 = vmatprep.subr.mxu0 0.0
      %4062 = vmatpush1.msra.mxu0 0.0
      %4063 = vmatprep.subr.mxu0 0.0
      %4064 = vmatpush1.msra.mxu0 0.0
      %4065 = vmatprep.mubr.f32.mxu0 0.0
      %4066 = vmatmul.mubr.f32.gmra.mrb[0].mxu0 %v3978
      %v4067 = vpop.f32.mrb[0].mxu0
      %v4068 = vadd.f32 0.0, %v4067
      %v4069 = vpop.f32.mrb[0].mxu0
      %4070 = vmatprep.mubr.f32.mxu0 0.0
      %4071 = vmatmul.mubr.f32.gmra.mrb[0].mxu0 %v3981
      %v4072 = vpop.f32.mrb[0].mxu0
      %v4073 = vadd.f32 0.0, %v4072
      %v4074 = vpop.f32.mrb[0].mxu0
      %4075 = vmatprep.mubr.f32.mxu0 0.0
      %4076 = vmatmul.mubr.f32.gmra.mrb[0].mxu0 %v3984
      %v4077 = vpop.f32.mrb[0].mxu0
      %v4078 = vadd.f32 0.0, %v4077
      %v4079 = vpop.f32.mrb[0].mxu0
      %4080 = vmatprep.mubr.f32.mxu0 0.0
      %4081 = vmatmul.mubr.f32.gmra.mrb[0].mxu0 %v3987
      %v4082 = vpop.f32.mrb[0].mxu0
      %v4083 = vadd.f32 0.0, %v4082
      %v4084 = vpop.f32.mrb[0].mxu0
      %4085 = vmatprep.mubr.f32.mxu0 0.0
      %4086 = vmatmul.mubr.f32.gmra.mrb[0].mxu0 %v3990
      %v4087 = vpop.f32.mrb[0].mxu0
      %v4088 = vadd.f32 0.0, %v4087
      %v4089 = vpop.f32.mrb[0].mxu0
      %4090 = vmatprep.mubr.f32.mxu0 0.0
      %4091 = vmatmul.mubr.f32.gmra.mrb[0].mxu0 %v3993
      %v4092 = vpop.f32.mrb[0].mxu0
      %v4093 = vadd.f32 0.0, %v4092
      %v4094 = vpop.f32.mrb[0].mxu0
      %4095 = vmatprep.mubr.f32.mxu0 0.0
      %4096 = vmatmul.mubr.f32.gmra.mrb[0].mxu0 %v3996
      %v4097 = vpop.f32.mrb[0].mxu0
      %v4098 = vadd.f32 0.0, %v4097
      %v4099 = vpop.f32.mrb[0].mxu0
      %4100 = vmatprep.mubr.f32.mxu0 0.0
      %4101 = vmatmul.mubr.f32.gmra.mrb[0].mxu0 %v3999
      %v4102 = vpop.f32.mrb[0].mxu0
      %v4103 = vadd.f32 0.0, %v4102
      %v4104 = vpop.f32.mrb[0].mxu0
      %4105 = vdwg.mxu0
      %v4106 = vadd.f32 %v3259, %v4068
      %v4107 = vadd.f32 %v3260, %v4073
      %v4108 = vadd.f32 %v3261, %v4078
      %v4109 = vadd.f32 %v3262, %v4083
      %v4110 = vadd.f32 %v3263, %v4088
      %v4111 = vadd.f32 %v3264, %v4093
      %v4112 = vadd.f32 %v3265, %v4098
      %v4113 = vadd.f32 %v3266, %v4103
      %v4114 = vadd.f32 %v711, %v4106
      %v4115 = vadd.f32 %v712, %v4107
      %v4116 = vadd.f32 %v713, %v4108
      %v4117 = vadd.f32 %v714, %v4109
      %v4118 = vadd.f32 %v715, %v4110
      %v4119 = vadd.f32 %v716, %v4111
      %v4120 = vadd.f32 %v717, %v4112
      %v4121 = vadd.f32 %v718, %v4113
      %v4122 = vld [vmem:[%s538] sm:$0x1]
      %v4123 = vsel %vm723, %v4114, 0.0
      %4124 = vadd.xlane.f32.xlu0 %v4123
      %v4125 = vpop.xlane.xlu0 %4124
      %v4126 = vsel %vm723, %v4115, 0.0
      %4127 = vadd.xlane.f32.xlu0 %v4126
      %v4128 = vpop.xlane.xlu0 %4127
      %v4129 = vsel %vm723, %v4116, 0.0
      %4130 = vadd.xlane.f32.xlu0 %v4129
      %v4131 = vpop.xlane.xlu0 %4130
      %v4132 = vsel %vm723, %v4117, 0.0
      %4133 = vadd.xlane.f32.xlu0 %v4132
      %v4134 = vpop.xlane.xlu0 %4133
      %v4135 = vsel %vm723, %v4118, 0.0
      %4136 = vadd.xlane.f32.xlu0 %v4135
      %v4137 = vpop.xlane.xlu0 %4136
      %v4138 = vsel %vm723, %v4119, 0.0
      %4139 = vadd.xlane.f32.xlu0 %v4138
      %v4140 = vpop.xlane.xlu0 %4139
      %v4141 = vsel %vm723, %v4120, 0.0
      %4142 = vadd.xlane.f32.xlu0 %v4141
      %v4143 = vpop.xlane.xlu0 %4142
      %v4144 = vsel %vm723, %v4121, 0.0
      %4145 = vadd.xlane.f32.xlu0 %v4144
      %v4146 = vpop.xlane.xlu0 %4145
      %v4147 = vrcp.pop 32.0
      %v4148 = vmul.f32 %v4125, %v4147
      %v4149 = vmul.f32 %v4128, %v4147
      %v4150 = vmul.f32 %v4131, %v4147
      %v4151 = vmul.f32 %v4134, %v4147
      %v4152 = vmul.f32 %v4137, %v4147
      %v4153 = vmul.f32 %v4140, %v4147
      %v4154 = vmul.f32 %v4143, %v4147
      %v4155 = vmul.f32 %v4146, %v4147
      %v4156 = vsub.f32 %v4114, %v4148
      %v4157 = vsub.f32 %v4115, %v4149
      %v4158 = vsub.f32 %v4116, %v4150
      %v4159 = vsub.f32 %v4117, %v4151
      %v4160 = vsub.f32 %v4118, %v4152
      %v4161 = vsub.f32 %v4119, %v4153
      %v4162 = vsub.f32 %v4120, %v4154
      %v4163 = vsub.f32 %v4121, %v4155
      %v4164 = vmul.f32 %v4156, %v4156
      %v4165 = vmul.f32 %v4157, %v4157
      %v4166 = vmul.f32 %v4158, %v4158
      %v4167 = vmul.f32 %v4159, %v4159
      %v4168 = vmul.f32 %v4160, %v4160
      %v4169 = vmul.f32 %v4161, %v4161
      %v4170 = vmul.f32 %v4162, %v4162
      %v4171 = vmul.f32 %v4163, %v4163
      %v4172 = vsel %vm723, %v4164, 0.0
      %4173 = vadd.xlane.f32.xlu0 %v4172
      %v4174 = vpop.xlane.xlu0 %4173
      %v4175 = vsel %vm723, %v4165, 0.0
      %4176 = vadd.xlane.f32.xlu0 %v4175
      %v4177 = vpop.xlane.xlu0 %4176
      %v4178 = vsel %vm723, %v4166, 0.0
      %4179 = vadd.xlane.f32.xlu0 %v4178
      %v4180 = vpop.xlane.xlu0 %4179
      %v4181 = vsel %vm723, %v4167, 0.0
      %4182 = vadd.xlane.f32.xlu0 %v4181
      %v4183 = vpop.xlane.xlu0 %4182
      %v4184 = vsel %vm723, %v4168, 0.0
      %4185 = vadd.xlane.f32.xlu0 %v4184
      %v4186 = vpop.xlane.xlu0 %4185
      %v4187 = vsel %vm723, %v4169, 0.0
      %4188 = vadd.xlane.f32.xlu0 %v4187
      %v4189 = vpop.xlane.xlu0 %4188
      %v4190 = vsel %vm723, %v4170, 0.0
      %4191 = vadd.xlane.f32.xlu0 %v4190
      %v4192 = vpop.xlane.xlu0 %4191
      %v4193 = vsel %vm723, %v4171, 0.0
      %4194 = vadd.xlane.f32.xlu0 %v4193
      %v4195 = vpop.xlane.xlu0 %4194
      %v4196 = vmul.f32 %v4174, %v4147
      %v4197 = vmul.f32 %v4177, %v4147
      %v4198 = vmul.f32 %v4180, %v4147
      %v4199 = vmul.f32 %v4183, %v4147
      %v4200 = vmul.f32 %v4186, %v4147
      %v4201 = vmul.f32 %v4189, %v4147
      %v4202 = vmul.f32 %v4192, %v4147
      %v4203 = vmul.f32 %v4195, %v4147
      %v4204 = vadd.f32 %v4196, 1e-05
      %v4205 = vadd.f32 %v4197, 1e-05
      %v4206 = vadd.f32 %v4198, 1e-05
      %v4207 = vadd.f32 %v4199, 1e-05
      %v4208 = vadd.f32 %v4200, 1e-05
      %v4209 = vadd.f32 %v4201, 1e-05
      %v4210 = vadd.f32 %v4202, 1e-05
      %v4211 = vadd.f32 %v4203, 1e-05
      %v4212 = vrsqrt.pop %v4204
      %v4213 = vrsqrt.pop %v4205
      %v4214 = vrsqrt.pop %v4206
      %v4215 = vrsqrt.pop %v4207
      %v4216 = vrsqrt.pop %v4208
      %v4217 = vrsqrt.pop %v4209
      %v4218 = vrsqrt.pop %v4210
      %v4219 = vrsqrt.pop %v4211
      %v4220 = vmul.f32 %v4156, %v4212
      %v4221 = vmul.f32 %v4157, %v4213
      %v4222 = vmul.f32 %v4158, %v4214
      %v4223 = vmul.f32 %v4159, %v4215
      %v4224 = vmul.f32 %v4160, %v4216
      %v4225 = vmul.f32 %v4161, %v4217
      %v4226 = vmul.f32 %v4162, %v4218
      %v4227 = vmul.f32 %v4163, %v4219
      %v4229 = vlaneseq
      %v4230 = vshrl.u32 %v4229, 7
      %v4231 = vsub.s32 0, %v4230
      %v4232 = vrot.slane %v4122, %v4231
      %v4234 = vmul.f32 %v4220, %v4232
      %v4235 = vmul.f32 %v4221, %v4232
      %v4236 = vmul.f32 %v4222, %v4232
      %v4237 = vmul.f32 %v4223, %v4232
      %v4238 = vmul.f32 %v4224, %v4232
      %v4239 = vmul.f32 %v4225, %v4232
      %v4240 = vmul.f32 %v4226, %v4232
      %v4241 = vmul.f32 %v4227, %v4232
      %v4242 = vld [vmem:[%s530] sm:$0xff]
      %v4243 = vld [vmem:[%s530 + $0x8] sm:$0xff]
      %v4244 = vld [vmem:[%s530 + $0x10] sm:$0xff]
      %v4245 = vld [vmem:[%s530 + $0x18] sm:$0xff]
      %v4247 = vsel %vm723, %v4234, 0
      %v4250 = vsel %vm723, %v4235, 0
      %v4253 = vsel %vm723, %v4236, 0
      %v4256 = vsel %vm723, %v4237, 0
      %v4259 = vsel %vm723, %v4238, 0
      %v4262 = vsel %vm723, %v4239, 0
      %v4265 = vsel %vm723, %v4240, 0
      %v4268 = vsel %vm723, %v4241, 0
      %4270 = vmatprep.subr.mxu0 0.0
      %4271 = vmatpush1.msra.mxu0 %v4242
      %4272 = vmatprep.subr.mxu0 0.0
      %4273 = vmatpush1.msra.mxu0 %v4243
      %4274 = vmatprep.subr.mxu0 0.0
      %4275 = vmatpush1.msra.mxu0 %v4244
      %4276 = vmatprep.subr.mxu0 0.0
      %4277 = vmatpush1.msra.mxu0 %v4245
      %4278 = vmatprep.subr.mxu0 0.0
      %4279 = vmatpush1.msra.mxu0 0.0
      %4280 = vmatprep.subr.mxu0 0.0
      %4281 = vmatpush1.msra.mxu0 0.0
      %4282 = vmatprep.subr.mxu0 0.0
      %4283 = vmatpush1.msra.mxu0 0.0
      %4284 = vmatprep.subr.mxu0 0.0
      %4285 = vmatpush1.msra.mxu0 0.0
      %4286 = vmatprep.subr.mxu0 0.0
      %4287 = vmatpush1.msra.mxu0 0.0
      %4288 = vmatprep.subr.mxu0 0.0
      %4289 = vmatpush1.msra.mxu0 0.0
      %4290 = vmatprep.subr.mxu0 0.0
      %4291 = vmatpush1.msra.mxu0 0.0
      %4292 = vmatprep.subr.mxu0 0.0
      %4293 = vmatpush1.msra.mxu0 0.0
      %4294 = vmatprep.subr.mxu0 0.0
      %4295 = vmatpush1.msra.mxu0 0.0
      %4296 = vmatprep.subr.mxu0 0.0
      %4297 = vmatpush1.msra.mxu0 0.0
      %4298 = vmatprep.subr.mxu0 0.0
      %4299 = vmatpush1.msra.mxu0 0.0
      %4300 = vmatprep.subr.mxu0 0.0
      %4301 = vmatpush1.msra.mxu0 0.0
      %4302 = vmatprep.subr.mxu0 0.0
      %4303 = vmatpush1.msra.mxu0 0.0
      %4304 = vmatprep.subr.mxu0 0.0
      %4305 = vmatpush1.msra.mxu0 0.0
      %4306 = vmatprep.subr.mxu0 0.0
      %4307 = vmatpush1.msra.mxu0 0.0
      %4308 = vmatprep.subr.mxu0 0.0
      %4309 = vmatpush1.msra.mxu0 0.0
      %4310 = vmatprep.subr.mxu0 0.0
      %4311 = vmatpush1.msra.mxu0 0.0
      %4312 = vmatprep.subr.mxu0 0.0
      %4313 = vmatpush1.msra.mxu0 0.0
      %4314 = vmatprep.subr.mxu0 0.0
      %4315 = vmatpush1.msra.mxu0 0.0
      %4316 = vmatprep.subr.mxu0 0.0
      %4317 = vmatpush1.msra.mxu0 0.0
      %4318 = vmatprep.subr.mxu0 0.0
      %4319 = vmatpush1.msra.mxu0 0.0
      %4320 = vmatprep.subr.mxu0 0.0
      %4321 = vmatpush1.msra.mxu0 0.0
      %4322 = vmatprep.subr.mxu0 0.0
      %4323 = vmatpush1.msra.mxu0 0.0
      %4324 = vmatprep.subr.mxu0 0.0
      %4325 = vmatpush1.msra.mxu0 0.0
      %4326 = vmatprep.subr.mxu0 0.0
      %4327 = vmatpush1.msra.mxu0 0.0
      %4328 = vmatprep.subr.mxu0 0.0
      %4329 = vmatpush1.msra.mxu0 0.0
      %4330 = vmatprep.subr.mxu0 0.0
      %4331 = vmatpush1.msra.mxu0 0.0
      %4332 = vmatprep.subr.mxu0 0.0
      %4333 = vmatpush1.msra.mxu0 0.0
      %4334 = vmatprep.mubr.f32.mxu0 0.0
      %4335 = vmatmul.mubr.f32.gmra.mrb[0].mxu0 %v4247
      %v4336 = vpop.f32.mrb[0].mxu0
      %v4337 = vadd.f32 0.0, %v4336
      %v4338 = vpop.f32.mrb[0].mxu0
      %4339 = vmatprep.mubr.f32.mxu0 0.0
      %4340 = vmatmul.mubr.f32.gmra.mrb[0].mxu0 %v4250
      %v4341 = vpop.f32.mrb[0].mxu0
      %v4342 = vadd.f32 0.0, %v4341
      %v4343 = vpop.f32.mrb[0].mxu0
      %4344 = vmatprep.mubr.f32.mxu0 0.0
      %4345 = vmatmul.mubr.f32.gmra.mrb[0].mxu0 %v4253
      %v4346 = vpop.f32.mrb[0].mxu0
      %v4347 = vadd.f32 0.0, %v4346
      %v4348 = vpop.f32.mrb[0].mxu0
      %4349 = vmatprep.mubr.f32.mxu0 0.0
      %4350 = vmatmul.mubr.f32.gmra.mrb[0].mxu0 %v4256
      %v4351 = vpop.f32.mrb[0].mxu0
      %v4352 = vadd.f32 0.0, %v4351
      %v4353 = vpop.f32.mrb[0].mxu0
      %4354 = vmatprep.mubr.f32.mxu0 0.0
      %4355 = vmatmul.mubr.f32.gmra.mrb[0].mxu0 %v4259
      %v4356 = vpop.f32.mrb[0].mxu0
      %v4357 = vadd.f32 0.0, %v4356
      %v4358 = vpop.f32.mrb[0].mxu0
      %4359 = vmatprep.mubr.f32.mxu0 0.0
      %4360 = vmatmul.mubr.f32.gmra.mrb[0].mxu0 %v4262
      %v4361 = vpop.f32.mrb[0].mxu0
      %v4362 = vadd.f32 0.0, %v4361
      %v4363 = vpop.f32.mrb[0].mxu0
      %4364 = vmatprep.mubr.f32.mxu0 0.0
      %4365 = vmatmul.mubr.f32.gmra.mrb[0].mxu0 %v4265
      %v4366 = vpop.f32.mrb[0].mxu0
      %v4367 = vadd.f32 0.0, %v4366
      %v4368 = vpop.f32.mrb[0].mxu0
      %4369 = vmatprep.mubr.f32.mxu0 0.0
      %4370 = vmatmul.mubr.f32.gmra.mrb[0].mxu0 %v4268
      %v4371 = vpop.f32.mrb[0].mxu0
      %v4372 = vadd.f32 0.0, %v4371
      %v4373 = vpop.f32.mrb[0].mxu0
      %4374 = vdwg.mxu0
      %v4375 = vmax.f32 %v4337, 0.0
      %v4376 = vmax.f32 %v4342, 0.0
      %v4377 = vmax.f32 %v4347, 0.0
      %v4378 = vmax.f32 %v4352, 0.0
      %v4379 = vmax.f32 %v4357, 0.0
      %v4380 = vmax.f32 %v4362, 0.0
      %v4381 = vmax.f32 %v4367, 0.0
      %v4382 = vmax.f32 %v4372, 0.0
      %v4383 = vld [vmem:[%s535] sm:$0xff]
      %v4384 = vld [vmem:[%s535 + $0x8] sm:$0xff]
      %v4385 = vld [vmem:[%s535 + $0x10] sm:$0xff]
      %v4386 = vld [vmem:[%s535 + $0x18] sm:$0xff]
      %v4387 = vld [vmem:[%s535 + $0x20] sm:$0xff]
      %v4388 = vld [vmem:[%s535 + $0x28] sm:$0xff]
      %v4389 = vld [vmem:[%s535 + $0x30] sm:$0xff]
      %v4390 = vld [vmem:[%s535 + $0x38] sm:$0xff]
      %v4392 = vsel %vm1233, %v4375, 0
      %v4395 = vsel %vm1233, %v4376, 0
      %v4398 = vsel %vm1233, %v4377, 0
      %v4401 = vsel %vm1233, %v4378, 0
      %v4404 = vsel %vm1233, %v4379, 0
      %v4407 = vsel %vm1233, %v4380, 0
      %v4410 = vsel %vm1233, %v4381, 0
      %v4413 = vsel %vm1233, %v4382, 0
      %4415 = vmatprep.subr.mxu0 0.0
      %4416 = vmatpush1.msra.mxu0 %v4383
      %4417 = vmatprep.subr.mxu0 0.0
      %4418 = vmatpush1.msra.mxu0 %v4384
      %4419 = vmatprep.subr.mxu0 0.0
      %4420 = vmatpush1.msra.mxu0 %v4385
      %4421 = vmatprep.subr.mxu0 0.0
      %4422 = vmatpush1.msra.mxu0 %v4386
      %4423 = vmatprep.subr.mxu0 0.0
      %4424 = vmatpush1.msra.mxu0 %v4387
      %4425 = vmatprep.subr.mxu0 0.0
      %4426 = vmatpush1.msra.mxu0 %v4388
      %4427 = vmatprep.subr.mxu0 0.0
      %4428 = vmatpush1.msra.mxu0 %v4389
      %4429 = vmatprep.subr.mxu0 0.0
      %4430 = vmatpush1.msra.mxu0 %v4390
      %4431 = vmatprep.subr.mxu0 0.0
      %4432 = vmatpush1.msra.mxu0 0.0
      %4433 = vmatprep.subr.mxu0 0.0
      %4434 = vmatpush1.msra.mxu0 0.0
      %4435 = vmatprep.subr.mxu0 0.0
      %4436 = vmatpush1.msra.mxu0 0.0
      %4437 = vmatprep.subr.mxu0 0.0
      %4438 = vmatpush1.msra.mxu0 0.0
      %4439 = vmatprep.subr.mxu0 0.0
      %4440 = vmatpush1.msra.mxu0 0.0
      %4441 = vmatprep.subr.mxu0 0.0
      %4442 = vmatpush1.msra.mxu0 0.0
      %4443 = vmatprep.subr.mxu0 0.0
      %4444 = vmatpush1.msra.mxu0 0.0
      %4445 = vmatprep.subr.mxu0 0.0
      %4446 = vmatpush1.msra.mxu0 0.0
      %4447 = vmatprep.subr.mxu0 0.0
      %4448 = vmatpush1.msra.mxu0 0.0
      %4449 = vmatprep.subr.mxu0 0.0
      %4450 = vmatpush1.msra.mxu0 0.0
      %4451 = vmatprep.subr.mxu0 0.0
      %4452 = vmatpush1.msra.mxu0 0.0
      %4453 = vmatprep.subr.mxu0 0.0
      %4454 = vmatpush1.msra.mxu0 0.0
      %4455 = vmatprep.subr.mxu0 0.0
      %4456 = vmatpush1.msra.mxu0 0.0
      %4457 = vmatprep.subr.mxu0 0.0
      %4458 = vmatpush1.msra.mxu0 0.0
      %4459 = vmatprep.subr.mxu0 0.0
      %4460 = vmatpush1.msra.mxu0 0.0
      %4461 = vmatprep.subr.mxu0 0.0
      %4462 = vmatpush1.msra.mxu0 0.0
      %4463 = vmatprep.subr.mxu0 0.0
      %4464 = vmatpush1.msra.mxu0 0.0
      %4465 = vmatprep.subr.mxu0 0.0
      %4466 = vmatpush1.msra.mxu0 0.0
      %4467 = vmatprep.subr.mxu0 0.0
      %4468 = vmatpush1.msra.mxu0 0.0
      %4469 = vmatprep.subr.mxu0 0.0
      %4470 = vmatpush1.msra.mxu0 0.0
      %4471 = vmatprep.subr.mxu0 0.0
      %4472 = vmatpush1.msra.mxu0 0.0
      %4473 = vmatprep.subr.mxu0 0.0
      %4474 = vmatpush1.msra.mxu0 0.0
      %4475 = vmatprep.subr.mxu0 0.0
      %4476 = vmatpush1.msra.mxu0 0.0
      %4477 = vmatprep.subr.mxu0 0.0
      %4478 = vmatpush1.msra.mxu0 0.0
      %4479 = vmatprep.mubr.f32.mxu0 0.0
      %4480 = vmatmul.mubr.f32.gmra.mrb[0].mxu0 %v4392
      %v4481 = vpop.f32.mrb[0].mxu0
      %v4482 = vadd.f32 0.0, %v4481
      %v4483 = vpop.f32.mrb[0].mxu0
      %4484 = vmatprep.mubr.f32.mxu0 0.0
      %4485 = vmatmul.mubr.f32.gmra.mrb[0].mxu0 %v4395
      %v4486 = vpop.f32.mrb[0].mxu0
      %v4487 = vadd.f32 0.0, %v4486
      %v4488 = vpop.f32.mrb[0].mxu0
      %4489 = vmatprep.mubr.f32.mxu0 0.0
      %4490 = vmatmul.mubr.f32.gmra.mrb[0].mxu0 %v4398
      %v4491 = vpop.f32.mrb[0].mxu0
      %v4492 = vadd.f32 0.0, %v4491
      %v4493 = vpop.f32.mrb[0].mxu0
      %4494 = vmatprep.mubr.f32.mxu0 0.0
      %4495 = vmatmul.mubr.f32.gmra.mrb[0].mxu0 %v4401
      %v4496 = vpop.f32.mrb[0].mxu0
      %v4497 = vadd.f32 0.0, %v4496
      %v4498 = vpop.f32.mrb[0].mxu0
      %4499 = vmatprep.mubr.f32.mxu0 0.0
      %4500 = vmatmul.mubr.f32.gmra.mrb[0].mxu0 %v4404
      %v4501 = vpop.f32.mrb[0].mxu0
      %v4502 = vadd.f32 0.0, %v4501
      %v4503 = vpop.f32.mrb[0].mxu0
      %4504 = vmatprep.mubr.f32.mxu0 0.0
      %4505 = vmatmul.mubr.f32.gmra.mrb[0].mxu0 %v4407
      %v4506 = vpop.f32.mrb[0].mxu0
      %v4507 = vadd.f32 0.0, %v4506
      %v4508 = vpop.f32.mrb[0].mxu0
      %4509 = vmatprep.mubr.f32.mxu0 0.0
      %4510 = vmatmul.mubr.f32.gmra.mrb[0].mxu0 %v4410
      %v4511 = vpop.f32.mrb[0].mxu0
      %v4512 = vadd.f32 0.0, %v4511
      %v4513 = vpop.f32.mrb[0].mxu0
      %4514 = vmatprep.mubr.f32.mxu0 0.0
      %4515 = vmatmul.mubr.f32.gmra.mrb[0].mxu0 %v4413
      %v4516 = vpop.f32.mrb[0].mxu0
      %v4517 = vadd.f32 0.0, %v4516
      %v4518 = vpop.f32.mrb[0].mxu0
      %4519 = vdwg.mxu0
      %v4520 = vadd.f32 %v4234, %v4482
      %v4521 = vadd.f32 %v4235, %v4487
      %v4522 = vadd.f32 %v4236, %v4492
      %v4523 = vadd.f32 %v4237, %v4497
      %v4524 = vadd.f32 %v4238, %v4502
      %v4525 = vadd.f32 %v4239, %v4507
      %v4526 = vadd.f32 %v4240, %v4512
      %v4527 = vadd.f32 %v4241, %v4517
      %v4528 = vld [vmem:[%s541] sm:$0x1]
      %v4529 = vsel %vm723, %v4520, 0.0
      %4530 = vadd.xlane.f32.xlu0 %v4529
      %v4531 = vpop.xlane.xlu0 %4530
      %v4532 = vsel %vm723, %v4521, 0.0
      %4533 = vadd.xlane.f32.xlu0 %v4532
      %v4534 = vpop.xlane.xlu0 %4533
      %v4535 = vsel %vm723, %v4522, 0.0
      %4536 = vadd.xlane.f32.xlu0 %v4535
      %v4537 = vpop.xlane.xlu0 %4536
      %v4538 = vsel %vm723, %v4523, 0.0
      %4539 = vadd.xlane.f32.xlu0 %v4538
      %v4540 = vpop.xlane.xlu0 %4539
      %v4541 = vsel %vm723, %v4524, 0.0
      %4542 = vadd.xlane.f32.xlu0 %v4541
      %v4543 = vpop.xlane.xlu0 %4542
      %v4544 = vsel %vm723, %v4525, 0.0
      %4545 = vadd.xlane.f32.xlu0 %v4544
      %v4546 = vpop.xlane.xlu0 %4545
      %v4547 = vsel %vm723, %v4526, 0.0
      %4548 = vadd.xlane.f32.xlu0 %v4547
      %v4549 = vpop.xlane.xlu0 %4548
      %v4550 = vsel %vm723, %v4527, 0.0
      %4551 = vadd.xlane.f32.xlu0 %v4550
      %v4552 = vpop.xlane.xlu0 %4551
      %v4553 = vmul.f32 %v4531, %v4147
      %v4554 = vmul.f32 %v4534, %v4147
      %v4555 = vmul.f32 %v4537, %v4147
      %v4556 = vmul.f32 %v4540, %v4147
      %v4557 = vmul.f32 %v4543, %v4147
      %v4558 = vmul.f32 %v4546, %v4147
      %v4559 = vmul.f32 %v4549, %v4147
      %v4560 = vmul.f32 %v4552, %v4147
      %v4561 = vsub.f32 %v4520, %v4553
      %v4562 = vsub.f32 %v4521, %v4554
      %v4563 = vsub.f32 %v4522, %v4555
      %v4564 = vsub.f32 %v4523, %v4556
      %v4565 = vsub.f32 %v4524, %v4557
      %v4566 = vsub.f32 %v4525, %v4558
      %v4567 = vsub.f32 %v4526, %v4559
      %v4568 = vsub.f32 %v4527, %v4560
      %v4569 = vmul.f32 %v4561, %v4561
      %v4570 = vmul.f32 %v4562, %v4562
      %v4571 = vmul.f32 %v4563, %v4563
      %v4572 = vmul.f32 %v4564, %v4564
      %v4573 = vmul.f32 %v4565, %v4565
      %v4574 = vmul.f32 %v4566, %v4566
      %v4575 = vmul.f32 %v4567, %v4567
      %v4576 = vmul.f32 %v4568, %v4568
      %v4577 = vsel %vm723, %v4569, 0.0
      %4578 = vadd.xlane.f32.xlu0 %v4577
      %v4579 = vpop.xlane.xlu0 %4578
      %v4580 = vsel %vm723, %v4570, 0.0
      %4581 = vadd.xlane.f32.xlu0 %v4580
      %v4582 = vpop.xlane.xlu0 %4581
      %v4583 = vsel %vm723, %v4571, 0.0
      %4584 = vadd.xlane.f32.xlu0 %v4583
      %v4585 = vpop.xlane.xlu0 %4584
      %v4586 = vsel %vm723, %v4572, 0.0
      %4587 = vadd.xlane.f32.xlu0 %v4586
      %v4588 = vpop.xlane.xlu0 %4587
      %v4589 = vsel %vm723, %v4573, 0.0
      %4590 = vadd.xlane.f32.xlu0 %v4589
      %v4591 = vpop.xlane.xlu0 %4590
      %v4592 = vsel %vm723, %v4574, 0.0
      %4593 = vadd.xlane.f32.xlu0 %v4592
      %v4594 = vpop.xlane.xlu0 %4593
      %v4595 = vsel %vm723, %v4575, 0.0
      %4596 = vadd.xlane.f32.xlu0 %v4595
      %v4597 = vpop.xlane.xlu0 %4596
      %v4598 = vsel %vm723, %v4576, 0.0
      %4599 = vadd.xlane.f32.xlu0 %v4598
      %v4600 = vpop.xlane.xlu0 %4599
      %v4601 = vmul.f32 %v4579, %v4147
      %v4602 = vmul.f32 %v4582, %v4147
      %v4603 = vmul.f32 %v4585, %v4147
      %v4604 = vmul.f32 %v4588, %v4147
      %v4605 = vmul.f32 %v4591, %v4147
      %v4606 = vmul.f32 %v4594, %v4147
      %v4607 = vmul.f32 %v4597, %v4147
      %v4608 = vmul.f32 %v4600, %v4147
      %v4609 = vadd.f32 %v4601, 1e-05
      %v4610 = vadd.f32 %v4602, 1e-05
      %v4611 = vadd.f32 %v4603, 1e-05
      %v4612 = vadd.f32 %v4604, 1e-05
      %v4613 = vadd.f32 %v4605, 1e-05
      %v4614 = vadd.f32 %v4606, 1e-05
      %v4615 = vadd.f32 %v4607, 1e-05
      %v4616 = vadd.f32 %v4608, 1e-05
      %v4617 = vrsqrt.pop %v4609
      %v4618 = vrsqrt.pop %v4610
      %v4619 = vrsqrt.pop %v4611
      %v4620 = vrsqrt.pop %v4612
      %v4621 = vrsqrt.pop %v4613
      %v4622 = vrsqrt.pop %v4614
      %v4623 = vrsqrt.pop %v4615
      %v4624 = vrsqrt.pop %v4616
      %v4625 = vmul.f32 %v4561, %v4617
      %v4626 = vmul.f32 %v4562, %v4618
      %v4627 = vmul.f32 %v4563, %v4619
      %v4628 = vmul.f32 %v4564, %v4620
      %v4629 = vmul.f32 %v4565, %v4621
      %v4630 = vmul.f32 %v4566, %v4622
      %v4631 = vmul.f32 %v4567, %v4623
      %v4632 = vmul.f32 %v4568, %v4624
      %v4634 = vlaneseq
      %v4635 = vshrl.u32 %v4634, 7
      %v4636 = vsub.s32 0, %v4635
      %v4637 = vrot.slane %v4528, %v4636
      %v4639 = vmul.f32 %v4625, %v4637
      %v4640 = vmul.f32 %v4626, %v4637
      %v4641 = vmul.f32 %v4627, %v4637
      %v4642 = vmul.f32 %v4628, %v4637
      %v4643 = vmul.f32 %v4629, %v4637
      %v4644 = vmul.f32 %v4630, %v4637
      %v4645 = vmul.f32 %v4631, %v4637
      %v4646 = vmul.f32 %v4632, %v4637
      %4647 = vst.msk [vmem:[#allocation2] sm:$0xff] %vm723, %v4639
      %4648 = vst.msk [vmem:[#allocation2 + $0x8] sm:$0xff] %vm723, %v4640
      %4649 = vst.msk [vmem:[#allocation2 + $0x10] sm:$0xff] %vm723, %v4641
      %4650 = vst.msk [vmem:[#allocation2 + $0x18] sm:$0xff] %vm723, %v4642
      %4651 = vst.msk [vmem:[#allocation2 + $0x20] sm:$0xff] %vm723, %v4643
      %4652 = vst.msk [vmem:[#allocation2 + $0x28] sm:$0xff] %vm723, %v4644
      %4653 = vst.msk [vmem:[#allocation2 + $0x30] sm:$0xff] %vm723, %v4645
      %4654 = vst.msk [vmem:[#allocation2 + $0x38] sm:$0xff] %vm723, %v4646
      %p4655 = scmp.eq.s32.totalorder %s27, 1
      // Predicated region
      $region69: #{tpu_custom_call.1} parent=63 // pred_check
        %p4656 = pneg %p4655
      $region70: #{tpu_custom_call.1} parent=63 // pred_check_branch
        %4658 = sbr.rel (%p4656) target = $region72
      $region71: #{tpu_custom_call.1} parent=63 // pred_region
        %4659 = vst.msk [vmem:[%s546] sm:$0xff] %vm723, %v4639
        %4660 = vst.msk [vmem:[%s546 + $0x8] sm:$0xff] %vm723, %v4640
        %4661 = vst.msk [vmem:[%s546 + $0x10] sm:$0xff] %vm723, %v4641
        %4662 = vst.msk [vmem:[%s546 + $0x18] sm:$0xff] %vm723, %v4642
        %4663 = vst.msk [vmem:[%s546 + $0x20] sm:$0xff] %vm723, %v4643
        %4664 = vst.msk [vmem:[%s546 + $0x28] sm:$0xff] %vm723, %v4644
        %4665 = vst.msk [vmem:[%s546 + $0x30] sm:$0xff] %vm723, %v4645
        %4666 = vst.msk [vmem:[%s546 + $0x38] sm:$0xff] %vm723, %v4646
      $region72: #{tpu_custom_call.1} parent=63 // pred_fallthru
        _
      %p4667 = scmp.lt.s32.totalorder %s26, 1
      %s4668 = scalar_select %p4667, %s26, 1
      %s4669 = smul.addr %s4668, 8
      %s4670 = smul.addr %s4669, 8
      %s4671 = scalar_lea.vmem %s11, %s4670
      // Predicated region
      $region73: #{tpu_custom_call.1} parent=63 // pred_check
        %p4672 = pneg %p328
      $region74: #{tpu_custom_call.1} parent=63 // pred_check_branch
        %4674 = sbr.rel (%p4672) target = $region76
      $region75: #{tpu_custom_call.1} parent=63 // pred_region
        _
      $region76: #{tpu_custom_call.1} parent=63 // pred_fallthru
        _
    $region64: #{tpu_custom_call.1} parent=5 // pred_fallthru
      _
    %p4675 = scmp.le.s32.totalorder 2, %s17
    // Predicated region
    $region77: #{tpu_custom_call.1} parent=5 // pred_check
      %p4676 = pneg %p4675
    $region78: #{tpu_custom_call.1} parent=5 // pred_check_branch
      %4678 = sbr.rel (%p4676) target = $region80
    $region79: #{tpu_custom_call.1} parent=5 // pred_region
      %s4679 = ssub.s32 %s17, 2
      // Predicated region
      $region81: #{tpu_custom_call.1} parent=79 // pred_check
        %p4680 = pneg %p334
      $region82: #{tpu_custom_call.1} parent=79 // pred_check_branch
        %4682 = sbr.rel (%p4680) target = $region84
      $region83: #{tpu_custom_call.1} parent=79 // pred_region
        %p4683 = scmp.lt.s32.totalorder %s28, 1
        %s4684 = scalar_select %p4683, %s28, 1
        %s4685 = smul.addr %s4684, 8
        %s4686 = smul.addr %s4685, 8
        %s4687 = scalar_lea.vmem %s11, %s4686
      $region84: #{tpu_custom_call.1} parent=79 // pred_fallthru
        _
    $region80: #{tpu_custom_call.1} parent=5 // pred_fallthru
      _
  $region6: #{tpu_custom_call.1} parent=0 // loop_footer
    %s21 = sadd.s32 1, %s17
  $region7: #{tpu_custom_call.1} parent=0 // loop_footer_branch
    %16 = sbr.rel target = $region3
  $region8: #{tpu_custom_call.1} parent=0 // loop_exit
    _

</llo_original>
